<compile_context>
chip_gen: v6e
topology: v6e:2x2x1
jax: 0.10.0
libtpu: 0.0.40
codegen_flags: <defaults>
</compile_context>

<pallas_src>
import math
import numpy as np
import jax
import jax.numpy as jnp
from jax.experimental import pallas as pl
from jax.experimental.pallas import tpu as pltpu

# ----------------------------- KAN constants ---------------------------------
GRID_SIZE = 5
SPLINE_ORDER = 3
NUM_BASES = GRID_SIZE + SPLINE_ORDER                       # 8 cubic B-spline bases / feature
NUM_FEATS = NUM_BASES + 1                                  # + SiLU base branch
_GH = 2.0 / GRID_SIZE                                      # uniform knot spacing (range [-1, 1])
GRID = [-1.0 + (p - SPLINE_ORDER) * _GH
        for p in range(GRID_SIZE + 2 * SPLINE_ORDER + 1)]  # 12 uniform knots
GRID0 = GRID[0]
INV_H = 1.0 / _GH
NUM_KNOTS = len(GRID)
LN_EPS = 1e-5


# ----------------- reference-only B-spline (Cox-de Boor, numpy) ---------------
def _b_spline_bases_ref(x):
    bases = [((x >= GRID[p]) & (x < GRID[p + 1])).astype(x.dtype)
             for p in range(len(GRID) - 1)]
    for k in range(1, SPLINE_ORDER + 1):
        nxt = []
        for p in range(len(GRID) - 1 - k):
            left = (x - GRID[p]) / (GRID[p + k] - GRID[p]) * bases[p]
            right = (GRID[p + k + 1] - x) / (GRID[p + k + 1] - GRID[p + 1]) * bases[p + 1]
            nxt.append(left + right)
        bases = nxt
    return bases


# ------------------------------ kernel helpers --------------------------------
def _layer_norm(x, gamma, beta):
    """LayerNorm over the channel (sublane) axis of a (C, L) slab.

    Two-pass variance (review correctness note); rsqrt goes to the EUP slot; the
    channel reduction is a cross-sublane reduce (XLU), which is otherwise idle here.
    gamma/beta are (C, 1) and broadcast across the token lanes.
    """
    mu = jnp.mean(x, axis=0, keepdims=True)
    xc = x - mu
    var = jnp.mean(xc * xc, axis=0, keepdims=True)
    return xc * jax.lax.rsqrt(var + LN_EPS) * gamma + beta


def _write_kan_features(x, feat_ref):
    """Write [silu(x) ; N_0(x) ; ... ; N_7(x)] into feat_ref along the SUBLANE axis.

    x is (fin, L) with tokens on lanes, so every store below is a full-lane-width
    (unmasked) store at a sublane offset that is a multiple of fin (itself a multiple
    of 8).  Uniform-knot cubic B-splines in closed form:
        N_p(x) = M(w - p),  w = (x - GRID[0]) / h,
        M(w)   = ( w_+^3 - 4(w-1)_+^3 + 6(w-2)_+^3 - 4(w-3)_+^3 + (w-4)_+^3 ) / 6,
    identical to the Cox-de Boor recursion used by efficient-kan / the numpy reference.
    Only a sliding window of 5 truncated-power terms is kept live (review item: avoids
    vreg spills when fin grows to production sizes).  Elementwise math stays in f32;
    only the stored MXU operand is bf16.
    """
    fin = x.shape[0]
    feat_ref[0:fin, :] = (x * jax.nn.sigmoid(x)).astype(feat_ref.dtype)     # SiLU branch
    w = jnp.clip((x - GRID0) * INV_H, 0.0, float(NUM_KNOTS - 1))
    window = [jnp.maximum(w - float(q), 0.0) ** 3 for q in range(5)]        # r_p .. r_{p+4}
    for p in range(NUM_BASES):
        n_p = (window[0] - 4.0 * window[1] + 6.0 * window[2]
               - 4.0 * window[3] + window[4]) * (1.0 / 6.0)
        feat_ref[(p + 1) * fin:(p + 2) * fin, :] = n_p.astype(feat_ref.dtype)
        if p + 1 < NUM_BASES:
            window = window[1:] + [jnp.maximum(w - float(p + 5), 0.0) ** 3]


# --------------------------------- kernel -------------------------------------
def kan_block_kernel(x_ref, g1_ref, b1_ref, g2_ref, b2_ref,
                     fop_ref, iopa_ref, iopb_ref, wcr_ref, wci_ref,
                     w1t_ref, w2t_ref,
                     o_ref, feat1_ref, feat2_ref):
    bf16 = jnp.bfloat16
    x = x_ref[0]                                                    # (C, L) f32, tokens on lanes

    # ---- norm1 (over channels = sublanes) ----
    xn = _layer_norm(x, g1_ref[...], b1_ref[...])

    # ---- GlobalFilter: rfft2(ortho) -> complex weight -> irfft2(ortho) ----
    # forward: single matmul from the right, [re | im] stacked along lanes
    xf = jnp.dot(xn.astype(bf16), fop_ref[...],
                 preferred_element_type=jnp.float32)                # (C, Lf)
    # complex multiply + inverse DFT without any concat / lane-slice:
    #   filt = (xf*[wr|wr]) @ [Ire^T ; -Iim^T]  +  (xf*[wi|wi]) @ [-Iim^T ; -Ire^T]
    #        = Re( I @ (W * rfft2(xn)) )
    zc = (xf * wcr_ref[...]).astype(bf16)
    zs = (xf * wci_ref[...]).astype(bf16)
    filt = (jnp.dot(zc, iopa_ref[...], preferred_element_type=jnp.float32)
            + jnp.dot(zs, iopb_ref[...], preferred_element_type=jnp.float32))   # (C, L)

    # ---- norm2 ----
    y = _layer_norm(filt, g2_ref[...], b2_ref[...])

    # ---- KAN([C, H, C]): each KANLinear = ONE fused matmul, W^T @ [silu ; bases] ----
    _write_kan_features(y, feat1_ref)                               # (9C, L) bf16
    h = jnp.dot(w1t_ref[...], feat1_ref[...],
                preferred_element_type=jnp.float32)                 # (H, L)
    _write_kan_features(h, feat2_ref)                               # (9H, L) bf16
    k = jnp.dot(w2t_ref[...], feat2_ref[...],
                preferred_element_type=jnp.float32)                 # (C, L)

    # ---- residual (drop_path = 0.0 -> Identity); full-lane-width stores ----
    o_ref[0] = x + k


# ------------------------------- host helpers ---------------------------------
def build_dft_operators(a, b):
    """Dense orthonormal operators for rfft2 / irfft2 over the flattened (a*b) index."""
    wf = b // 2 + 1
    mi = np.outer(np.arange(a), np.arange(a)) / a                   # [m, i]
    kj = np.outer(np.arange(wf), np.arange(b)) / b                  # [k, j]
    ang_f = -2.0 * np.pi * (mi[:, None, :, None] + kj[None, :, None, :])      # [m,k,i,j]
    F = (np.exp(1j * ang_f) / np.sqrt(a * b)).reshape(a * wf, a * b)
    kk = np.arange(wf)
    cond = (kk == 0)
    if b % 2 == 0:
        cond = cond | (kk == b // 2)
    ck = np.where(cond, 1.0, 2.0)
    im = np.outer(np.arange(a), np.arange(a)) / a                   # [i, m]
    jk = np.outer(np.arange(b), np.arange(wf)) / b                  # [j, k]
    ang_i = 2.0 * np.pi * (im[:, None, :, None] + jk[None, :, None, :])       # [i,j,m,k]
    I = (np.exp(1j * ang_i) * ck[None, None, None, :] / np.sqrt(a * b)).reshape(a * b, a * wf)
    return (F.real.astype(np.float32), F.imag.astype(np.float32),
            I.real.astype(np.float32), I.imag.astype(np.float32))


def _choose_batch_block(B, N, max_lanes=256):
    """Largest divisor Bt of B with Bt*N <= max_lanes lanes per grid step.

    Filling the token lane axis (and amortising per-step overhead) is the biggest
    measured lever, so at tiny B we prefer it over keeping the grid length even for
    the v7x 2-TC split; at production N (>= 256) this returns Bt=1 and grid=B.
    """
    best = 1
    for d in range(1, B + 1):
        if B % d == 0 and d * N <= max_lanes:
            best = d
    return best


def kan_block_forward(x, a, b_sp, cw, g1, b1, g2, b2, bw1, sw1, bw2, sw2):
    B, N, C = x.shape
    assert N == a * b_sp
    H = bw1.shape[1]
    wf = b_sp // 2 + 1
    Nf = a * wf

    Bt = _choose_batch_block(B, N)
    G = B // Bt
    L = Bt * N                     # token lane width per grid step (128 at test shapes)
    Lf = Bt * 2 * Nf               # stacked [re | im] frequency lanes per grid step

    # ---- DFT operators, block-diagonal over the folded batch (kron) ----
    f_re, f_im, i_re, i_im = build_dft_operators(a, b_sp)
    f_blk = np.concatenate([f_re.T, f_im.T], axis=1)               # (N, 2Nf)  -> [re | im]
    a_blk = np.concatenate([i_re.T, -i_im.T], axis=0)              # (2Nf, N)
    b_blk = np.concatenate([-i_im.T, -i_re.T], axis=0)             # (2Nf, N)
    eye = np.eye(Bt, dtype=np.float32)
    fop = jnp.asarray(np.kron(eye, f_blk), jnp.bfloat16)           # (L, Lf)
    iopa = jnp.asarray(np.kron(eye, a_blk), jnp.bfloat16)          # (Lf, L)
    iopb = jnp.asarray(np.kron(eye, b_blk), jnp.bfloat16)          # (Lf, L)

    # GlobalFilter complex weight, channel-major, [re|re] / [im|im] lane halves,
    # pre-tiled over the folded batch -> one elementwise multiply per half in-kernel.
    w_re_t = np.asarray(cw[..., 0], np.float32).reshape(Nf, C).T   # (C, Nf)
    w_im_t = np.asarray(cw[..., 1], np.float32).reshape(Nf, C).T
    wcr = jnp.asarray(np.tile(np.concatenate([w_re_t, w_re_t], axis=1), (1, Bt)), jnp.float32)
    wci = jnp.asarray(np.tile(np.concatenate([w_im_t, w_im_t], axis=1), (1, Bt)), jnp.float32)

    # Fused KANLinear weights, transposed so the (9*fin, tokens) feature slab is the RHS.
    w1t = jnp.asarray(np.concatenate([np.asarray(bw1).T] +
                                     [np.asarray(sw1)[p].T for p in range(NUM_BASES)],
                                     axis=1), jnp.bfloat16)         # (H, 9*C)
    w2t = jnp.asarray(np.concatenate([np.asarray(bw2).T] +
                                     [np.asarray(sw2)[p].T for p in range(NUM_BASES)],
                                     axis=1), jnp.bfloat16)         # (C, 9*H)

    g1c = jnp.asarray(g1, jnp.float32).reshape(C, 1)
    b1c = jnp.asarray(b1, jnp.float32).reshape(C, 1)
    g2c = jnp.asarray(g2, jnp.float32).reshape(C, 1)
    b2c = jnp.asarray(b2, jnp.float32).reshape(C, 1)

    # channel-major, batch-folded-into-lanes activations: (G, C, Bt*N)
    x_t = jnp.transpose(jnp.reshape(x, (G, Bt, N, C)), (0, 3, 1, 2)).reshape(G, C, L)

    params = (g1c, b1c, g2c, b2c, fop, iopa, iopb, wcr, wci, w1t, w2t)

    # ---- cost estimate (params counted ONCE; 4 MXU matmuls per step dominate) ----
    flops = 2 * G * (C * L * Lf                     # forward DFT
                     + 2 * C * Lf * L               # inverse DFT (2 accumulating matmuls)
                     + H * (NUM_FEATS * C) * L      # KANLinear 1
                     + C * (NUM_FEATS * H) * L)     # KANLinear 2
    transcendentals = G * L * (C + H + 2)           # sigmoids + rsqrts
    param_bytes = sum(int(p.size) * p.dtype.itemsize for p in params)
    cost = pl.CostEstimate(flops=int(flops), transcendentals=int(transcendentals),
                           bytes_accessed=int(2 * x.size * 4 + param_bytes))

    # ---- VMEM budget from the actual footprint, capped at 48 MiB (v7x: 64 MiB/TC) ----
    block_bytes = 2 * C * L * 4                                     # x block + out block
    scratch_bytes = NUM_FEATS * (C + H) * L * 2                     # bf16 feature slabs
    vmem_limit = int(min(48 * 2 ** 20,
                         max(16 * 2 ** 20,
                             4 * (param_bytes + 2 * block_bytes + scratch_bytes))))

    out_shape = jax.ShapeDtypeStruct((G, C, L), jnp.float32)
    scratch_shapes = [pltpu.VMEM((NUM_FEATS * C, L), jnp.bfloat16),
                      pltpu.VMEM((NUM_FEATS * H, L), jnp.bfloat16)]

    def build(single_buffer_params):
        # Grid-invariant params map to block (0,...) every step; single-buffer them so
        # default double-buffering does not double their VMEM footprint.
        pm = {"pipeline_mode": pl.Buffered(1)} if single_buffer_params else {}

        def inv_spec(arr):
            nd = arr.ndim
            return pl.BlockSpec(arr.shape, lambda g, _nd=nd: (0,) * _nd, **pm)

        in_specs = ([pl.BlockSpec((1, C, L), lambda g: (g, 0, 0))]
                    + [inv_spec(p) for p in params])
        return pl.pallas_call(
            kan_block_kernel,
            out_shape=out_shape,
            grid=(G,),
            in_specs=in_specs,
            out_specs=pl.BlockSpec((1, C, L), lambda g: (g, 0, 0)),
            scratch_shapes=scratch_shapes,
            compiler_params=pltpu.CompilerParams(
                dimension_semantics=("parallel",),
                vmem_limit_bytes=vmem_limit),
            cost_estimate=cost,
        )

    try:
        out_t = build(True)(x_t, *params)
    except Exception:
        # Fallback for jax versions without pl.Buffered single-buffering support; the
        # invariant params are small here, so default double-buffering is acceptable.
        out_t = build(False)(x_t, *params)

    # back to (B, N, C)
    return jnp.transpose(out_t.reshape(G, C, Bt, N), (0, 2, 3, 1)).reshape(B, N, C)


# ----------------------------- numpy reference --------------------------------
def ref_forward_np(x, a, b_sp, cw, g1, b1, g2, b2, bw1, sw1, bw2, sw2):
    x = np.asarray(x, np.float64)
    B, N, C = x.shape

    def ln(v, g, be):
        mu = v.mean(-1, keepdims=True)
        var = ((v - mu) ** 2).mean(-1, keepdims=True)
        return (v - mu) / np.sqrt(var + LN_EPS) * np.asarray(g, np.float64) + np.asarray(be, np.float64)

    xn = ln(x, g1, b1)
    xs = xn.reshape(B, a, b_sp, C)
    xf = np.fft.rfft2(xs, axes=(1, 2), norm="ortho")
    w = np.asarray(cw[..., 0], np.float64) + 1j * np.asarray(cw[..., 1], np.float64)
    xf = xf * w[None]
    xs = np.fft.irfft2(xf, s=(a, b_sp), axes=(1, 2), norm="ortho")
    y = ln(xs.reshape(B, N, C), g2, b2)

    def kan_lin(v, bw, sw):
        out = (v * (1.0 / (1.0 + np.exp(-v)))) @ np.asarray(bw, np.float64)
        swd = np.asarray(sw, np.float64)
        for p, bp in enumerate(_b_spline_bases_ref(v)):
            out = out + bp @ swd[p]
        return out

    t = y.reshape(B * N, C)
    h = kan_lin(t, bw1, sw1)
    k = kan_lin(h, bw2, sw2)
    return x + k.reshape(B, N, C)


# ----------------------------------- main --------------------------------------
if __name__ == "__main__":
    B, C, H_KAN = 2, 16, 32          # batch, dim, hdim_kan (small synthetic sizes)
    a = b_sp = 8                     # spatial grid -> N = 64, GlobalFilter h=8, w=5
    N = a * b_sp
    wf = b_sp // 2 + 1
    Nf = a * wf

    key = jax.random.PRNGKey(0)
    ks = jax.random.split(key, 8)
    x = jax.random.normal(ks[0], (B, N, C), jnp.float32)

    # GlobalFilter complex weight, matches torch init: randn(h, w, dim, 2) * 0.02
    cw = jax.random.normal(ks[1], (a, wf, C, 2), jnp.float32) * 0.02

    # LayerNorm params (torch default init: weight=1, bias=0)
    g1 = jnp.ones((C,), jnp.float32); b1 = jnp.zeros((C,), jnp.float32)
    g2 = jnp.ones((C,), jnp.float32); b2 = jnp.zeros((C,), jnp.float32)

    # KAN([C, H_KAN, C]) params (efficient-kan shapes, deterministic synthetic init)
    bw1 = jax.random.normal(ks[2], (C, H_KAN), jnp.float32) / math.sqrt(C)              # base_weight.T
    spl1 = jax.random.normal(ks[3], (H_KAN, C, NUM_BASES), jnp.float32) * (0.1 / math.sqrt(C))
    scl1 = 1.0 + 0.1 * jax.random.normal(ks[4], (H_KAN, C), jnp.float32)                # spline_scaler
    sw1 = jnp.transpose(spl1 * scl1[..., None], (2, 1, 0))                              # (NB, C, H)

    bw2 = jax.random.normal(ks[5], (H_KAN, C), jnp.float32) / math.sqrt(H_KAN)
    spl2 = jax.random.normal(ks[6], (C, H_KAN, NUM_BASES), jnp.float32) * (0.1 / math.sqrt(H_KAN))
    scl2 = 1.0 + 0.1 * jax.random.normal(ks[7], (C, H_KAN), jnp.float32)
    sw2 = jnp.transpose(spl2 * scl2[..., None], (2, 1, 0))                              # (NB, H, C)

    out = kan_block_forward(x, a, b_sp, cw, g1, b1, g2, b2, bw1, sw1, bw2, sw2)
    out = jax.block_until_ready(out)

    # Correctness check vs float64 numpy reference (tolerance accounts for bf16
    # single-pass MXU matmuls + LayerNorm renormalization of the small filter output).
    ref = ref_forward_np(np.asarray(x), a, b_sp, np.asarray(cw),
                         np.asarray(g1), np.asarray(b1), np.asarray(g2), np.asarray(b2),
                         np.asarray(bw1), np.asarray(sw1), np.asarray(bw2), np.asarray(sw2))
    err = float(np.max(np.abs(np.asarray(out, np.float64) - ref)))
    if not np.isfinite(err) or err > 1e-1:
        raise AssertionError(f"Pallas kanBlock mismatch vs reference: max abs err = {err}")
    print("KERNEL_OK")
</pallas_src>

<mosaic_0001>
module attributes {stable_mosaic.version = 11 : i64} {
  func.func @kan_block_kernel(%arg0: i32, %arg1: memref<1x16x128xf32, #tpu.memory_space<vmem>>, %arg2: memref<16x1xf32, #tpu.memory_space<vmem>>, %arg3: memref<16x1xf32, #tpu.memory_space<vmem>>, %arg4: memref<16x1xf32, #tpu.memory_space<vmem>>, %arg5: memref<16x1xf32, #tpu.memory_space<vmem>>, %arg6: memref<128x160xbf16, #tpu.memory_space<vmem>>, %arg7: memref<160x128xbf16, #tpu.memory_space<vmem>>, %arg8: memref<160x128xbf16, #tpu.memory_space<vmem>>, %arg9: memref<16x160xf32, #tpu.memory_space<vmem>>, %arg10: memref<16x160xf32, #tpu.memory_space<vmem>>, %arg11: memref<32x144xbf16, #tpu.memory_space<vmem>>, %arg12: memref<16x288xbf16, #tpu.memory_space<vmem>>, %arg13: memref<1x16x128xf32, #tpu.memory_space<vmem>>, %arg14: memref<144x128xbf16, #tpu.memory_space<vmem>>, %arg15: memref<288x128xbf16, #tpu.memory_space<vmem>>) attributes {dimension_semantics = [#tpu.dimension_semantics<parallel>], iteration_bounds = array<i64: 1>, scalar_prefetch = 0 : i64, scratch_operands = 2 : i64, tpu.core_type = #tpu.core_type<tc>, window_params = [{transform_indices = @transform_0, window_bounds = array<i64: 1, 16, 128>}, {pipeline_mode = #tpu.pipeline_mode<synchronous>, transform_indices = @transform_1, window_bounds = array<i64: 16, 1>}, {pipeline_mode = #tpu.pipeline_mode<synchronous>, transform_indices = @transform_2, window_bounds = array<i64: 16, 1>}, {pipeline_mode = #tpu.pipeline_mode<synchronous>, transform_indices = @transform_3, window_bounds = array<i64: 16, 1>}, {pipeline_mode = #tpu.pipeline_mode<synchronous>, transform_indices = @transform_4, window_bounds = array<i64: 16, 1>}, {pipeline_mode = #tpu.pipeline_mode<synchronous>, transform_indices = @transform_5, window_bounds = array<i64: 128, 160>}, {pipeline_mode = #tpu.pipeline_mode<synchronous>, transform_indices = @transform_6, window_bounds = array<i64: 160, 128>}, {pipeline_mode = #tpu.pipeline_mode<synchronous>, transform_indices = @transform_7, window_bounds = array<i64: 160, 128>}, {pipeline_mode = #tpu.pipeline_mode<synchronous>, transform_indices = @transform_8, window_bounds = array<i64: 16, 160>}, {pipeline_mode = #tpu.pipeline_mode<synchronous>, transform_indices = @transform_9, window_bounds = array<i64: 16, 160>}, {pipeline_mode = #tpu.pipeline_mode<synchronous>, transform_indices = @transform_10, window_bounds = array<i64: 32, 144>}, {pipeline_mode = #tpu.pipeline_mode<synchronous>, transform_indices = @transform_11, window_bounds = array<i64: 16, 288>}, {transform_indices = @transform_12, window_bounds = array<i64: 1, 16, 128>}]} {
    %c0 = arith.constant 0 : index
    %c0_0 = arith.constant 0 : index
    %c0_1 = arith.constant 0 : index
    %0 = vector.load %arg1[%c0, %c0_0, %c0_1] : memref<1x16x128xf32, #tpu.memory_space<vmem>>, vector<1x16x128xf32>
    %1 = vector.shape_cast %0 : vector<1x16x128xf32> to vector<16x128xf32>
    %c0_2 = arith.constant 0 : index
    %c0_3 = arith.constant 0 : index
    %2 = vector.load %arg2[%c0_2, %c0_3] : memref<16x1xf32, #tpu.memory_space<vmem>>, vector<16x1xf32>
    %c0_4 = arith.constant 0 : index
    %c0_5 = arith.constant 0 : index
    %3 = vector.load %arg3[%c0_4, %c0_5] : memref<16x1xf32, #tpu.memory_space<vmem>>, vector<16x1xf32>
    %cst = arith.constant dense<0.000000e+00> : vector<128xf32>
    %4 = vector.multi_reduction <add>, %1, %cst [0] : vector<16x128xf32> to vector<128xf32>
    %5 = vector.shape_cast %4 : vector<128xf32> to vector<1x128xf32>
    %cst_6 = arith.constant 1.600000e+01 : f32
    %6 = vector.broadcast %cst_6 : f32 to vector<1x128xf32>
    %7 = arith.divf %5, %6 : vector<1x128xf32>
    %8 = vector.broadcast %7 : vector<1x128xf32> to vector<16x128xf32>
    %9 = arith.subf %1, %8 : vector<16x128xf32>
    %10 = arith.mulf %9, %9 : vector<16x128xf32>
    %cst_7 = arith.constant dense<0.000000e+00> : vector<128xf32>
    %11 = vector.multi_reduction <add>, %10, %cst_7 [0] : vector<16x128xf32> to vector<128xf32>
    %12 = vector.shape_cast %11 : vector<128xf32> to vector<1x128xf32>
    %cst_8 = arith.constant 1.600000e+01 : f32
    %13 = vector.broadcast %cst_8 : f32 to vector<1x128xf32>
    %14 = arith.divf %12, %13 : vector<1x128xf32>
    %cst_9 = arith.constant 9.99999974E-6 : f32
    %15 = vector.broadcast %cst_9 : f32 to vector<1x128xf32>
    %16 = arith.addf %14, %15 : vector<1x128xf32>
    %17 = math.rsqrt %16 : vector<1x128xf32>
    %18 = vector.broadcast %17 : vector<1x128xf32> to vector<16x128xf32>
    %19 = arith.mulf %9, %18 : vector<16x128xf32>
    %20 = vector.broadcast %2 : vector<16x1xf32> to vector<16x128xf32>
    %21 = arith.mulf %19, %20 : vector<16x128xf32>
    %22 = vector.broadcast %3 : vector<16x1xf32> to vector<16x128xf32>
    %23 = arith.addf %21, %22 : vector<16x128xf32>
    %24 = arith.truncf %23 : vector<16x128xf32> to vector<16x128xbf16>
    %c0_10 = arith.constant 0 : index
    %c0_11 = arith.constant 0 : index
    %25 = vector.load %arg6[%c0_10, %c0_11] : memref<128x160xbf16, #tpu.memory_space<vmem>>, vector<128x160xbf16>
    %cst_12 = arith.constant dense<0.000000e+00> : vector<16x160xf32>
    %26 = tpu.matmul %24, %25, %cst_12 {dimension_numbers = #tpu.dot_dimension_numbers<[1], [0], [0], [1], [0, 0, 1, 1], [], []>} : vector<16x128xbf16>, vector<128x160xbf16>, vector<16x160xf32> -> vector<16x160xf32>
    %c0_13 = arith.constant 0 : index
    %c0_14 = arith.constant 0 : index
    %27 = vector.load %arg9[%c0_13, %c0_14] : memref<16x160xf32, #tpu.memory_space<vmem>>, vector<16x160xf32>
    %28 = arith.mulf %26, %27 : vector<16x160xf32>
    %29 = arith.truncf %28 : vector<16x160xf32> to vector<16x160xbf16>
    %c0_15 = arith.constant 0 : index
    %c0_16 = arith.constant 0 : index
    %30 = vector.load %arg10[%c0_15, %c0_16] : memref<16x160xf32, #tpu.memory_space<vmem>>, vector<16x160xf32>
    %31 = arith.mulf %26, %30 : vector<16x160xf32>
    %32 = arith.truncf %31 : vector<16x160xf32> to vector<16x160xbf16>
    %c0_17 = arith.constant 0 : index
    %c0_18 = arith.constant 0 : index
    %33 = vector.load %arg7[%c0_17, %c0_18] : memref<160x128xbf16, #tpu.memory_space<vmem>>, vector<160x128xbf16>
    %cst_19 = arith.constant dense<0.000000e+00> : vector<16x128xf32>
    %34 = tpu.matmul %29, %33, %cst_19 {dimension_numbers = #tpu.dot_dimension_numbers<[1], [0], [0], [1], [0, 0, 1, 1], [], []>} : vector<16x160xbf16>, vector<160x128xbf16>, vector<16x128xf32> -> vector<16x128xf32>
    %c0_20 = arith.constant 0 : index
    %c0_21 = arith.constant 0 : index
    %35 = vector.load %arg8[%c0_20, %c0_21] : memref<160x128xbf16, #tpu.memory_space<vmem>>, vector<160x128xbf16>
    %cst_22 = arith.constant dense<0.000000e+00> : vector<16x128xf32>
    %36 = tpu.matmul %32, %35, %cst_22 {dimension_numbers = #tpu.dot_dimension_numbers<[1], [0], [0], [1], [0, 0, 1, 1], [], []>} : vector<16x160xbf16>, vector<160x128xbf16>, vector<16x128xf32> -> vector<16x128xf32>
    %37 = arith.addf %34, %36 : vector<16x128xf32>
    %c0_23 = arith.constant 0 : index
    %c0_24 = arith.constant 0 : index
    %38 = vector.load %arg4[%c0_23, %c0_24] : memref<16x1xf32, #tpu.memory_space<vmem>>, vector<16x1xf32>
    %c0_25 = arith.constant 0 : index
    %c0_26 = arith.constant 0 : index
    %39 = vector.load %arg5[%c0_25, %c0_26] : memref<16x1xf32, #tpu.memory_space<vmem>>, vector<16x1xf32>
    %cst_27 = arith.constant dense<0.000000e+00> : vector<128xf32>
    %40 = vector.multi_reduction <add>, %37, %cst_27 [0] : vector<16x128xf32> to vector<128xf32>
    %41 = vector.shape_cast %40 : vector<128xf32> to vector<1x128xf32>
    %cst_28 = arith.constant 1.600000e+01 : f32
    %42 = vector.broadcast %cst_28 : f32 to vector<1x128xf32>
    %43 = arith.divf %41, %42 : vector<1x128xf32>
    %44 = vector.broadcast %43 : vector<1x128xf32> to vector<16x128xf32>
    %45 = arith.subf %37, %44 : vector<16x128xf32>
    %46 = arith.mulf %45, %45 : vector<16x128xf32>
    %cst_29 = arith.constant dense<0.000000e+00> : vector<128xf32>
    %47 = vector.multi_reduction <add>, %46, %cst_29 [0] : vector<16x128xf32> to vector<128xf32>
    %48 = vector.shape_cast %47 : vector<128xf32> to vector<1x128xf32>
    %cst_30 = arith.constant 1.600000e+01 : f32
    %49 = vector.broadcast %cst_30 : f32 to vector<1x128xf32>
    %50 = arith.divf %48, %49 : vector<1x128xf32>
    %cst_31 = arith.constant 9.99999974E-6 : f32
    %51 = vector.broadcast %cst_31 : f32 to vector<1x128xf32>
    %52 = arith.addf %50, %51 : vector<1x128xf32>
    %53 = math.rsqrt %52 : vector<1x128xf32>
    %54 = vector.broadcast %53 : vector<1x128xf32> to vector<16x128xf32>
    %55 = arith.mulf %45, %54 : vector<16x128xf32>
    %56 = vector.broadcast %38 : vector<16x1xf32> to vector<16x128xf32>
    %57 = arith.mulf %55, %56 : vector<16x128xf32>
    %58 = vector.broadcast %39 : vector<16x1xf32> to vector<16x128xf32>
    %59 = arith.addf %57, %58 : vector<16x128xf32>
    %60 = arith.negf %59 : vector<16x128xf32>
    %61 = math.exp %60 : vector<16x128xf32>
    %cst_32 = arith.constant 1.000000e+00 : f32
    %62 = vector.broadcast %cst_32 : f32 to vector<16x128xf32>
    %63 = arith.addf %62, %61 : vector<16x128xf32>
    %64 = arith.divf %62, %63 : vector<16x128xf32>
    %65 = arith.mulf %59, %64 : vector<16x128xf32>
    %66 = arith.truncf %65 : vector<16x128xf32> to vector<16x128xbf16>
    %c0_33 = arith.constant 0 : index
    %c0_34 = arith.constant 0 : index
    %67 = vector.load %arg14[%c0_33, %c0_34] : memref<144x128xbf16, #tpu.memory_space<vmem>>, vector<16x128xbf16>
    tpu.vector_store %arg14[%c0_33, %c0_34], %66 {strides = array<i32>} : memref<144x128xbf16, #tpu.memory_space<vmem>>, vector<16x128xbf16>,
    %cst_35 = arith.constant -2.200000e+00 : f32
    %68 = vector.broadcast %cst_35 : f32 to vector<16x128xf32>
    %69 = arith.subf %59, %68 : vector<16x128xf32>
    %cst_36 = arith.constant 2.500000e+00 : f32
    %70 = vector.broadcast %cst_36 : f32 to vector<16x128xf32>
    %71 = arith.mulf %69, %70 : vector<16x128xf32>
    %cst_37 = arith.constant 0.000000e+00 : f32
    %cst_38 = arith.constant 1.100000e+01 : f32
    %72 = vector.broadcast %cst_37 : f32 to vector<16x128xf32>
    %73 = arith.maximumf %72, %71 : vector<16x128xf32>
    %74 = vector.broadcast %cst_38 : f32 to vector<16x128xf32>
    %75 = arith.minimumf %74, %73 : vector<16x128xf32>
    %cst_39 = arith.constant 0.000000e+00 : f32
    %76 = vector.broadcast %cst_39 : f32 to vector<16x128xf32>
    %77 = arith.subf %75, %76 : vector<16x128xf32>
    %cst_40 = arith.constant 0.000000e+00 : f32
    %78 = vector.broadcast %cst_40 : f32 to vector<16x128xf32>
    %79 = arith.maximumf %77, %78 : vector<16x128xf32>
    %80 = arith.mulf %79, %79 : vector<16x128xf32>
    %81 = arith.mulf %79, %80 : vector<16x128xf32>
    %cst_41 = arith.constant 1.000000e+00 : f32
    %82 = vector.broadcast %cst_41 : f32 to vector<16x128xf32>
    %83 = arith.subf %75, %82 : vector<16x128xf32>
    %cst_42 = arith.constant 0.000000e+00 : f32
    %84 = vector.broadcast %cst_42 : f32 to vector<16x128xf32>
    %85 = arith.maximumf %83, %84 : vector<16x128xf32>
    %86 = arith.mulf %85, %85 : vector<16x128xf32>
    %87 = arith.mulf %85, %86 : vector<16x128xf32>
    %cst_43 = arith.constant 2.000000e+00 : f32
    %88 = vector.broadcast %cst_43 : f32 to vector<16x128xf32>
    %89 = arith.subf %75, %88 : vector<16x128xf32>
    %cst_44 = arith.constant 0.000000e+00 : f32
    %90 = vector.broadcast %cst_44 : f32 to vector<16x128xf32>
    %91 = arith.maximumf %89, %90 : vector<16x128xf32>
    %92 = arith.mulf %91, %91 : vector<16x128xf32>
    %93 = arith.mulf %91, %92 : vector<16x128xf32>
    %cst_45 = arith.constant 3.000000e+00 : f32
    %94 = vector.broadcast %cst_45 : f32 to vector<16x128xf32>
    %95 = arith.subf %75, %94 : vector<16x128xf32>
    %cst_46 = arith.constant 0.000000e+00 : f32
    %96 = vector.broadcast %cst_46 : f32 to vector<16x128xf32>
    %97 = arith.maximumf %95, %96 : vector<16x128xf32>
    %98 = arith.mulf %97, %97 : vector<16x128xf32>
    %99 = arith.mulf %97, %98 : vector<16x128xf32>
    %cst_47 = arith.constant 4.000000e+00 : f32
    %100 = vector.broadcast %cst_47 : f32 to vector<16x128xf32>
    %101 = arith.subf %75, %100 : vector<16x128xf32>
    %cst_48 = arith.constant 0.000000e+00 : f32
    %102 = vector.broadcast %cst_48 : f32 to vector<16x128xf32>
    %103 = arith.maximumf %101, %102 : vector<16x128xf32>
    %104 = arith.mulf %103, %103 : vector<16x128xf32>
    %105 = arith.mulf %103, %104 : vector<16x128xf32>
    %cst_49 = arith.constant 4.000000e+00 : f32
    %106 = vector.broadcast %cst_49 : f32 to vector<16x128xf32>
    %107 = arith.mulf %106, %87 : vector<16x128xf32>
    %108 = arith.subf %81, %107 : vector<16x128xf32>
    %cst_50 = arith.constant 6.000000e+00 : f32
    %109 = vector.broadcast %cst_50 : f32 to vector<16x128xf32>
    %110 = arith.mulf %109, %93 : vector<16x128xf32>
    %111 = arith.addf %108, %110 : vector<16x128xf32>
    %cst_51 = arith.constant 4.000000e+00 : f32
    %112 = vector.broadcast %cst_51 : f32 to vector<16x128xf32>
    %113 = arith.mulf %112, %99 : vector<16x128xf32>
    %114 = arith.subf %111, %113 : vector<16x128xf32>
    %115 = arith.addf %114, %105 : vector<16x128xf32>
    %cst_52 = arith.constant 0.166666672 : f32
    %116 = vector.broadcast %cst_52 : f32 to vector<16x128xf32>
    %117 = arith.mulf %115, %116 : vector<16x128xf32>
    %118 = arith.truncf %117 : vector<16x128xf32> to vector<16x128xbf16>
    %c16 = arith.constant 16 : index
    %c0_53 = arith.constant 0 : index
    %119 = vector.load %arg14[%c16, %c0_53] : memref<144x128xbf16, #tpu.memory_space<vmem>>, vector<16x128xbf16>
    tpu.vector_store %arg14[%c16, %c0_53], %118 {strides = array<i32>} : memref<144x128xbf16, #tpu.memory_space<vmem>>, vector<16x128xbf16>,
    %cst_54 = arith.constant 5.000000e+00 : f32
    %120 = vector.broadcast %cst_54 : f32 to vector<16x128xf32>
    %121 = arith.subf %75, %120 : vector<16x128xf32>
    %cst_55 = arith.constant 0.000000e+00 : f32
    %122 = vector.broadcast %cst_55 : f32 to vector<16x128xf32>
    %123 = arith.maximumf %121, %122 : vector<16x128xf32>
    %124 = arith.mulf %123, %123 : vector<16x128xf32>
    %125 = arith.mulf %123, %124 : vector<16x128xf32>
    %cst_56 = arith.constant 4.000000e+00 : f32
    %126 = vector.broadcast %cst_56 : f32 to vector<16x128xf32>
    %127 = arith.mulf %126, %93 : vector<16x128xf32>
    %128 = arith.subf %87, %127 : vector<16x128xf32>
    %cst_57 = arith.constant 6.000000e+00 : f32
    %129 = vector.broadcast %cst_57 : f32 to vector<16x128xf32>
    %130 = arith.mulf %129, %99 : vector<16x128xf32>
    %131 = arith.addf %128, %130 : vector<16x128xf32>
    %cst_58 = arith.constant 4.000000e+00 : f32
    %132 = vector.broadcast %cst_58 : f32 to vector<16x128xf32>
    %133 = arith.mulf %132, %105 : vector<16x128xf32>
    %134 = arith.subf %131, %133 : vector<16x128xf32>
    %135 = arith.addf %134, %125 : vector<16x128xf32>
    %cst_59 = arith.constant 0.166666672 : f32
    %136 = vector.broadcast %cst_59 : f32 to vector<16x128xf32>
    %137 = arith.mulf %135, %136 : vector<16x128xf32>
    %138 = arith.truncf %137 : vector<16x128xf32> to vector<16x128xbf16>
    %c32 = arith.constant 32 : index
    %c0_60 = arith.constant 0 : index
    %139 = vector.load %arg14[%c32, %c0_60] : memref<144x128xbf16, #tpu.memory_space<vmem>>, vector<16x128xbf16>
    tpu.vector_store %arg14[%c32, %c0_60], %138 {strides = array<i32>} : memref<144x128xbf16, #tpu.memory_space<vmem>>, vector<16x128xbf16>,
    %cst_61 = arith.constant 6.000000e+00 : f32
    %140 = vector.broadcast %cst_61 : f32 to vector<16x128xf32>
    %141 = arith.subf %75, %140 : vector<16x128xf32>
    %cst_62 = arith.constant 0.000000e+00 : f32
    %142 = vector.broadcast %cst_62 : f32 to vector<16x128xf32>
    %143 = arith.maximumf %141, %142 : vector<16x128xf32>
    %144 = arith.mulf %143, %143 : vector<16x128xf32>
    %145 = arith.mulf %143, %144 : vector<16x128xf32>
    %cst_63 = arith.constant 4.000000e+00 : f32
    %146 = vector.broadcast %cst_63 : f32 to vector<16x128xf32>
    %147 = arith.mulf %146, %99 : vector<16x128xf32>
    %148 = arith.subf %93, %147 : vector<16x128xf32>
    %cst_64 = arith.constant 6.000000e+00 : f32
    %149 = vector.broadcast %cst_64 : f32 to vector<16x128xf32>
    %150 = arith.mulf %149, %105 : vector<16x128xf32>
    %151 = arith.addf %148, %150 : vector<16x128xf32>
    %cst_65 = arith.constant 4.000000e+00 : f32
    %152 = vector.broadcast %cst_65 : f32 to vector<16x128xf32>
    %153 = arith.mulf %152, %125 : vector<16x128xf32>
    %154 = arith.subf %151, %153 : vector<16x128xf32>
    %155 = arith.addf %154, %145 : vector<16x128xf32>
    %cst_66 = arith.constant 0.166666672 : f32
    %156 = vector.broadcast %cst_66 : f32 to vector<16x128xf32>
    %157 = arith.mulf %155, %156 : vector<16x128xf32>
    %158 = arith.truncf %157 : vector<16x128xf32> to vector<16x128xbf16>
    %c48 = arith.constant 48 : index
    %c0_67 = arith.constant 0 : index
    %159 = vector.load %arg14[%c48, %c0_67] : memref<144x128xbf16, #tpu.memory_space<vmem>>, vector<16x128xbf16>
    tpu.vector_store %arg14[%c48, %c0_67], %158 {strides = array<i32>} : memref<144x128xbf16, #tpu.memory_space<vmem>>, vector<16x128xbf16>,
    %cst_68 = arith.constant 7.000000e+00 : f32
    %160 = vector.broadcast %cst_68 : f32 to vector<16x128xf32>
    %161 = arith.subf %75, %160 : vector<16x128xf32>
    %cst_69 = arith.constant 0.000000e+00 : f32
    %162 = vector.broadcast %cst_69 : f32 to vector<16x128xf32>
    %163 = arith.maximumf %161, %162 : vector<16x128xf32>
    %164 = arith.mulf %163, %163 : vector<16x128xf32>
    %165 = arith.mulf %163, %164 : vector<16x128xf32>
    %cst_70 = arith.constant 4.000000e+00 : f32
    %166 = vector.broadcast %cst_70 : f32 to vector<16x128xf32>
    %167 = arith.mulf %166, %105 : vector<16x128xf32>
    %168 = arith.subf %99, %167 : vector<16x128xf32>
    %cst_71 = arith.constant 6.000000e+00 : f32
    %169 = vector.broadcast %cst_71 : f32 to vector<16x128xf32>
    %170 = arith.mulf %169, %125 : vector<16x128xf32>
    %171 = arith.addf %168, %170 : vector<16x128xf32>
    %cst_72 = arith.constant 4.000000e+00 : f32
    %172 = vector.broadcast %cst_72 : f32 to vector<16x128xf32>
    %173 = arith.mulf %172, %145 : vector<16x128xf32>
    %174 = arith.subf %171, %173 : vector<16x128xf32>
    %175 = arith.addf %174, %165 : vector<16x128xf32>
    %cst_73 = arith.constant 0.166666672 : f32
    %176 = vector.broadcast %cst_73 : f32 to vector<16x128xf32>
    %177 = arith.mulf %175, %176 : vector<16x128xf32>
    %178 = arith.truncf %177 : vector<16x128xf32> to vector<16x128xbf16>
    %c64 = arith.constant 64 : index
    %c0_74 = arith.constant 0 : index
    %179 = vector.load %arg14[%c64, %c0_74] : memref<144x128xbf16, #tpu.memory_space<vmem>>, vector<16x128xbf16>
    tpu.vector_store %arg14[%c64, %c0_74], %178 {strides = array<i32>} : memref<144x128xbf16, #tpu.memory_space<vmem>>, vector<16x128xbf16>,
    %cst_75 = arith.constant 8.000000e+00 : f32
    %180 = vector.broadcast %cst_75 : f32 to vector<16x128xf32>
    %181 = arith.subf %75, %180 : vector<16x128xf32>
    %cst_76 = arith.constant 0.000000e+00 : f32
    %182 = vector.broadcast %cst_76 : f32 to vector<16x128xf32>
    %183 = arith.maximumf %181, %182 : vector<16x128xf32>
    %184 = arith.mulf %183, %183 : vector<16x128xf32>
    %185 = arith.mulf %183, %184 : vector<16x128xf32>
    %cst_77 = arith.constant 4.000000e+00 : f32
    %186 = vector.broadcast %cst_77 : f32 to vector<16x128xf32>
    %187 = arith.mulf %186, %125 : vector<16x128xf32>
    %188 = arith.subf %105, %187 : vector<16x128xf32>
    %cst_78 = arith.constant 6.000000e+00 : f32
    %189 = vector.broadcast %cst_78 : f32 to vector<16x128xf32>
    %190 = arith.mulf %189, %145 : vector<16x128xf32>
    %191 = arith.addf %188, %190 : vector<16x128xf32>
    %cst_79 = arith.constant 4.000000e+00 : f32
    %192 = vector.broadcast %cst_79 : f32 to vector<16x128xf32>
    %193 = arith.mulf %192, %165 : vector<16x128xf32>
    %194 = arith.subf %191, %193 : vector<16x128xf32>
    %195 = arith.addf %194, %185 : vector<16x128xf32>
    %cst_80 = arith.constant 0.166666672 : f32
    %196 = vector.broadcast %cst_80 : f32 to vector<16x128xf32>
    %197 = arith.mulf %195, %196 : vector<16x128xf32>
    %198 = arith.truncf %197 : vector<16x128xf32> to vector<16x128xbf16>
    %c80 = arith.constant 80 : index
    %c0_81 = arith.constant 0 : index
    %199 = vector.load %arg14[%c80, %c0_81] : memref<144x128xbf16, #tpu.memory_space<vmem>>, vector<16x128xbf16>
    tpu.vector_store %arg14[%c80, %c0_81], %198 {strides = array<i32>} : memref<144x128xbf16, #tpu.memory_space<vmem>>, vector<16x128xbf16>,
    %cst_82 = arith.constant 9.000000e+00 : f32
    %200 = vector.broadcast %cst_82 : f32 to vector<16x128xf32>
    %201 = arith.subf %75, %200 : vector<16x128xf32>
    %cst_83 = arith.constant 0.000000e+00 : f32
    %202 = vector.broadcast %cst_83 : f32 to vector<16x128xf32>
    %203 = arith.maximumf %201, %202 : vector<16x128xf32>
    %204 = arith.mulf %203, %203 : vector<16x128xf32>
    %205 = arith.mulf %203, %204 : vector<16x128xf32>
    %cst_84 = arith.constant 4.000000e+00 : f32
    %206 = vector.broadcast %cst_84 : f32 to vector<16x128xf32>
    %207 = arith.mulf %206, %145 : vector<16x128xf32>
    %208 = arith.subf %125, %207 : vector<16x128xf32>
    %cst_85 = arith.constant 6.000000e+00 : f32
    %209 = vector.broadcast %cst_85 : f32 to vector<16x128xf32>
    %210 = arith.mulf %209, %165 : vector<16x128xf32>
    %211 = arith.addf %208, %210 : vector<16x128xf32>
    %cst_86 = arith.constant 4.000000e+00 : f32
    %212 = vector.broadcast %cst_86 : f32 to vector<16x128xf32>
    %213 = arith.mulf %212, %185 : vector<16x128xf32>
    %214 = arith.subf %211, %213 : vector<16x128xf32>
    %215 = arith.addf %214, %205 : vector<16x128xf32>
    %cst_87 = arith.constant 0.166666672 : f32
    %216 = vector.broadcast %cst_87 : f32 to vector<16x128xf32>
    %217 = arith.mulf %215, %216 : vector<16x128xf32>
    %218 = arith.truncf %217 : vector<16x128xf32> to vector<16x128xbf16>
    %c96 = arith.constant 96 : index
    %c0_88 = arith.constant 0 : index
    %219 = vector.load %arg14[%c96, %c0_88] : memref<144x128xbf16, #tpu.memory_space<vmem>>, vector<16x128xbf16>
    tpu.vector_store %arg14[%c96, %c0_88], %218 {strides = array<i32>} : memref<144x128xbf16, #tpu.memory_space<vmem>>, vector<16x128xbf16>,
    %cst_89 = arith.constant 1.000000e+01 : f32
    %220 = vector.broadcast %cst_89 : f32 to vector<16x128xf32>
    %221 = arith.subf %75, %220 : vector<16x128xf32>
    %cst_90 = arith.constant 0.000000e+00 : f32
    %222 = vector.broadcast %cst_90 : f32 to vector<16x128xf32>
    %223 = arith.maximumf %221, %222 : vector<16x128xf32>
    %224 = arith.mulf %223, %223 : vector<16x128xf32>
    %225 = arith.mulf %223, %224 : vector<16x128xf32>
    %cst_91 = arith.constant 4.000000e+00 : f32
    %226 = vector.broadcast %cst_91 : f32 to vector<16x128xf32>
    %227 = arith.mulf %226, %165 : vector<16x128xf32>
    %228 = arith.subf %145, %227 : vector<16x128xf32>
    %cst_92 = arith.constant 6.000000e+00 : f32
    %229 = vector.broadcast %cst_92 : f32 to vector<16x128xf32>
    %230 = arith.mulf %229, %185 : vector<16x128xf32>
    %231 = arith.addf %228, %230 : vector<16x128xf32>
    %cst_93 = arith.constant 4.000000e+00 : f32
    %232 = vector.broadcast %cst_93 : f32 to vector<16x128xf32>
    %233 = arith.mulf %232, %205 : vector<16x128xf32>
    %234 = arith.subf %231, %233 : vector<16x128xf32>
    %235 = arith.addf %234, %225 : vector<16x128xf32>
    %cst_94 = arith.constant 0.166666672 : f32
    %236 = vector.broadcast %cst_94 : f32 to vector<16x128xf32>
    %237 = arith.mulf %235, %236 : vector<16x128xf32>
    %238 = arith.truncf %237 : vector<16x128xf32> to vector<16x128xbf16>
    %c112 = arith.constant 112 : index
    %c0_95 = arith.constant 0 : index
    %239 = vector.load %arg14[%c112, %c0_95] : memref<144x128xbf16, #tpu.memory_space<vmem>>, vector<16x128xbf16>
    tpu.vector_store %arg14[%c112, %c0_95], %238 {strides = array<i32>} : memref<144x128xbf16, #tpu.memory_space<vmem>>, vector<16x128xbf16>,
    %cst_96 = arith.constant 1.100000e+01 : f32
    %240 = vector.broadcast %cst_96 : f32 to vector<16x128xf32>
    %241 = arith.subf %75, %240 : vector<16x128xf32>
    %cst_97 = arith.constant 0.000000e+00 : f32
    %242 = vector.broadcast %cst_97 : f32 to vector<16x128xf32>
    %243 = arith.maximumf %241, %242 : vector<16x128xf32>
    %244 = arith.mulf %243, %243 : vector<16x128xf32>
    %245 = arith.mulf %243, %244 : vector<16x128xf32>
    %cst_98 = arith.constant 4.000000e+00 : f32
    %246 = vector.broadcast %cst_98 : f32 to vector<16x128xf32>
    %247 = arith.mulf %246, %185 : vector<16x128xf32>
    %248 = arith.subf %165, %247 : vector<16x128xf32>
    %cst_99 = arith.constant 6.000000e+00 : f32
    %249 = vector.broadcast %cst_99 : f32 to vector<16x128xf32>
    %250 = arith.mulf %249, %205 : vector<16x128xf32>
    %251 = arith.addf %248, %250 : vector<16x128xf32>
    %cst_100 = arith.constant 4.000000e+00 : f32
    %252 = vector.broadcast %cst_100 : f32 to vector<16x128xf32>
    %253 = arith.mulf %252, %225 : vector<16x128xf32>
    %254 = arith.subf %251, %253 : vector<16x128xf32>
    %255 = arith.addf %254, %245 : vector<16x128xf32>
    %cst_101 = arith.constant 0.166666672 : f32
    %256 = vector.broadcast %cst_101 : f32 to vector<16x128xf32>
    %257 = arith.mulf %255, %256 : vector<16x128xf32>
    %258 = arith.truncf %257 : vector<16x128xf32> to vector<16x128xbf16>
    %c128 = arith.constant 128 : index
    %c0_102 = arith.constant 0 : index
    %259 = vector.load %arg14[%c128, %c0_102] : memref<144x128xbf16, #tpu.memory_space<vmem>>, vector<16x128xbf16>
    tpu.vector_store %arg14[%c128, %c0_102], %258 {strides = array<i32>} : memref<144x128xbf16, #tpu.memory_space<vmem>>, vector<16x128xbf16>,
    %c0_103 = arith.constant 0 : index
    %c0_104 = arith.constant 0 : index
    %260 = vector.load %arg11[%c0_103, %c0_104] : memref<32x144xbf16, #tpu.memory_space<vmem>>, vector<32x144xbf16>
    %c0_105 = arith.constant 0 : index
    %c0_106 = arith.constant 0 : index
    %261 = vector.load %arg14[%c0_105, %c0_106] : memref<144x128xbf16, #tpu.memory_space<vmem>>, vector<144x128xbf16>
    %cst_107 = arith.constant dense<0.000000e+00> : vector<32x128xf32>
    %262 = tpu.matmul %260, %261, %cst_107 {dimension_numbers = #tpu.dot_dimension_numbers<[1], [0], [0], [1], [0, 0, 1, 1], [], []>} : vector<32x144xbf16>, vector<144x128xbf16>, vector<32x128xf32> -> vector<32x128xf32>
    %263 = arith.negf %262 : vector<32x128xf32>
    %264 = math.exp %263 : vector<32x128xf32>
    %cst_108 = arith.constant 1.000000e+00 : f32
    %265 = vector.broadcast %cst_108 : f32 to vector<32x128xf32>
    %266 = arith.addf %265, %264 : vector<32x128xf32>
    %267 = arith.divf %265, %266 : vector<32x128xf32>
    %268 = arith.mulf %262, %267 : vector<32x128xf32>
    %269 = arith.truncf %268 : vector<32x128xf32> to vector<32x128xbf16>
    %c0_109 = arith.constant 0 : index
    %c0_110 = arith.constant 0 : index
    %270 = vector.load %arg15[%c0_109, %c0_110] : memref<288x128xbf16, #tpu.memory_space<vmem>>, vector<32x128xbf16>
    tpu.vector_store %arg15[%c0_109, %c0_110], %269 {strides = array<i32>} : memref<288x128xbf16, #tpu.memory_space<vmem>>, vector<32x128xbf16>,
    %cst_111 = arith.constant -2.200000e+00 : f32
    %271 = vector.broadcast %cst_111 : f32 to vector<32x128xf32>
    %272 = arith.subf %262, %271 : vector<32x128xf32>
    %cst_112 = arith.constant 2.500000e+00 : f32
    %273 = vector.broadcast %cst_112 : f32 to vector<32x128xf32>
    %274 = arith.mulf %272, %273 : vector<32x128xf32>
    %cst_113 = arith.constant 0.000000e+00 : f32
    %cst_114 = arith.constant 1.100000e+01 : f32
    %275 = vector.broadcast %cst_113 : f32 to vector<32x128xf32>
    %276 = arith.maximumf %275, %274 : vector<32x128xf32>
    %277 = vector.broadcast %cst_114 : f32 to vector<32x128xf32>
    %278 = arith.minimumf %277, %276 : vector<32x128xf32>
    %cst_115 = arith.constant 0.000000e+00 : f32
    %279 = vector.broadcast %cst_115 : f32 to vector<32x128xf32>
    %280 = arith.subf %278, %279 : vector<32x128xf32>
    %cst_116 = arith.constant 0.000000e+00 : f32
    %281 = vector.broadcast %cst_116 : f32 to vector<32x128xf32>
    %282 = arith.maximumf %280, %281 : vector<32x128xf32>
    %283 = arith.mulf %282, %282 : vector<32x128xf32>
    %284 = arith.mulf %282, %283 : vector<32x128xf32>
    %cst_117 = arith.constant 1.000000e+00 : f32
    %285 = vector.broadcast %cst_117 : f32 to vector<32x128xf32>
    %286 = arith.subf %278, %285 : vector<32x128xf32>
    %cst_118 = arith.constant 0.000000e+00 : f32
    %287 = vector.broadcast %cst_118 : f32 to vector<32x128xf32>
    %288 = arith.maximumf %286, %287 : vector<32x128xf32>
    %289 = arith.mulf %288, %288 : vector<32x128xf32>
    %290 = arith.mulf %288, %289 : vector<32x128xf32>
    %cst_119 = arith.constant 2.000000e+00 : f32
    %291 = vector.broadcast %cst_119 : f32 to vector<32x128xf32>
    %292 = arith.subf %278, %291 : vector<32x128xf32>
    %cst_120 = arith.constant 0.000000e+00 : f32
    %293 = vector.broadcast %cst_120 : f32 to vector<32x128xf32>
    %294 = arith.maximumf %292, %293 : vector<32x128xf32>
    %295 = arith.mulf %294, %294 : vector<32x128xf32>
    %296 = arith.mulf %294, %295 : vector<32x128xf32>
    %cst_121 = arith.constant 3.000000e+00 : f32
    %297 = vector.broadcast %cst_121 : f32 to vector<32x128xf32>
    %298 = arith.subf %278, %297 : vector<32x128xf32>
    %cst_122 = arith.constant 0.000000e+00 : f32
    %299 = vector.broadcast %cst_122 : f32 to vector<32x128xf32>
    %300 = arith.maximumf %298, %299 : vector<32x128xf32>
    %301 = arith.mulf %300, %300 : vector<32x128xf32>
    %302 = arith.mulf %300, %301 : vector<32x128xf32>
    %cst_123 = arith.constant 4.000000e+00 : f32
    %303 = vector.broadcast %cst_123 : f32 to vector<32x128xf32>
    %304 = arith.subf %278, %303 : vector<32x128xf32>
    %cst_124 = arith.constant 0.000000e+00 : f32
    %305 = vector.broadcast %cst_124 : f32 to vector<32x128xf32>
    %306 = arith.maximumf %304, %305 : vector<32x128xf32>
    %307 = arith.mulf %306, %306 : vector<32x128xf32>
    %308 = arith.mulf %306, %307 : vector<32x128xf32>
    %cst_125 = arith.constant 4.000000e+00 : f32
    %309 = vector.broadcast %cst_125 : f32 to vector<32x128xf32>
    %310 = arith.mulf %309, %290 : vector<32x128xf32>
    %311 = arith.subf %284, %310 : vector<32x128xf32>
    %cst_126 = arith.constant 6.000000e+00 : f32
    %312 = vector.broadcast %cst_126 : f32 to vector<32x128xf32>
    %313 = arith.mulf %312, %296 : vector<32x128xf32>
    %314 = arith.addf %311, %313 : vector<32x128xf32>
    %cst_127 = arith.constant 4.000000e+00 : f32
    %315 = vector.broadcast %cst_127 : f32 to vector<32x128xf32>
    %316 = arith.mulf %315, %302 : vector<32x128xf32>
    %317 = arith.subf %314, %316 : vector<32x128xf32>
    %318 = arith.addf %317, %308 : vector<32x128xf32>
    %cst_128 = arith.constant 0.166666672 : f32
    %319 = vector.broadcast %cst_128 : f32 to vector<32x128xf32>
    %320 = arith.mulf %318, %319 : vector<32x128xf32>
    %321 = arith.truncf %320 : vector<32x128xf32> to vector<32x128xbf16>
    %c32_129 = arith.constant 32 : index
    %c0_130 = arith.constant 0 : index
    %322 = vector.load %arg15[%c32_129, %c0_130] : memref<288x128xbf16, #tpu.memory_space<vmem>>, vector<32x128xbf16>
    tpu.vector_store %arg15[%c32_129, %c0_130], %321 {strides = array<i32>} : memref<288x128xbf16, #tpu.memory_space<vmem>>, vector<32x128xbf16>,
    %cst_131 = arith.constant 5.000000e+00 : f32
    %323 = vector.broadcast %cst_131 : f32 to vector<32x128xf32>
    %324 = arith.subf %278, %323 : vector<32x128xf32>
    %cst_132 = arith.constant 0.000000e+00 : f32
    %325 = vector.broadcast %cst_132 : f32 to vector<32x128xf32>
    %326 = arith.maximumf %324, %325 : vector<32x128xf32>
    %327 = arith.mulf %326, %326 : vector<32x128xf32>
    %328 = arith.mulf %326, %327 : vector<32x128xf32>
    %cst_133 = arith.constant 4.000000e+00 : f32
    %329 = vector.broadcast %cst_133 : f32 to vector<32x128xf32>
    %330 = arith.mulf %329, %296 : vector<32x128xf32>
    %331 = arith.subf %290, %330 : vector<32x128xf32>
    %cst_134 = arith.constant 6.000000e+00 : f32
    %332 = vector.broadcast %cst_134 : f32 to vector<32x128xf32>
    %333 = arith.mulf %332, %302 : vector<32x128xf32>
    %334 = arith.addf %331, %333 : vector<32x128xf32>
    %cst_135 = arith.constant 4.000000e+00 : f32
    %335 = vector.broadcast %cst_135 : f32 to vector<32x128xf32>
    %336 = arith.mulf %335, %308 : vector<32x128xf32>
    %337 = arith.subf %334, %336 : vector<32x128xf32>
    %338 = arith.addf %337, %328 : vector<32x128xf32>
    %cst_136 = arith.constant 0.166666672 : f32
    %339 = vector.broadcast %cst_136 : f32 to vector<32x128xf32>
    %340 = arith.mulf %338, %339 : vector<32x128xf32>
    %341 = arith.truncf %340 : vector<32x128xf32> to vector<32x128xbf16>
    %c64_137 = arith.constant 64 : index
    %c0_138 = arith.constant 0 : index
    %342 = vector.load %arg15[%c64_137, %c0_138] : memref<288x128xbf16, #tpu.memory_space<vmem>>, vector<32x128xbf16>
    tpu.vector_store %arg15[%c64_137, %c0_138], %341 {strides = array<i32>} : memref<288x128xbf16, #tpu.memory_space<vmem>>, vector<32x128xbf16>,
    %cst_139 = arith.constant 6.000000e+00 : f32
    %343 = vector.broadcast %cst_139 : f32 to vector<32x128xf32>
    %344 = arith.subf %278, %343 : vector<32x128xf32>
    %cst_140 = arith.constant 0.000000e+00 : f32
    %345 = vector.broadcast %cst_140 : f32 to vector<32x128xf32>
    %346 = arith.maximumf %344, %345 : vector<32x128xf32>
    %347 = arith.mulf %346, %346 : vector<32x128xf32>
    %348 = arith.mulf %346, %347 : vector<32x128xf32>
    %cst_141 = arith.constant 4.000000e+00 : f32
    %349 = vector.broadcast %cst_141 : f32 to vector<32x128xf32>
    %350 = arith.mulf %349, %302 : vector<32x128xf32>
    %351 = arith.subf %296, %350 : vector<32x128xf32>
    %cst_142 = arith.constant 6.000000e+00 : f32
    %352 = vector.broadcast %cst_142 : f32 to vector<32x128xf32>
    %353 = arith.mulf %352, %308 : vector<32x128xf32>
    %354 = arith.addf %351, %353 : vector<32x128xf32>
    %cst_143 = arith.constant 4.000000e+00 : f32
    %355 = vector.broadcast %cst_143 : f32 to vector<32x128xf32>
    %356 = arith.mulf %355, %328 : vector<32x128xf32>
    %357 = arith.subf %354, %356 : vector<32x128xf32>
    %358 = arith.addf %357, %348 : vector<32x128xf32>
    %cst_144 = arith.constant 0.166666672 : f32
    %359 = vector.broadcast %cst_144 : f32 to vector<32x128xf32>
    %360 = arith.mulf %358, %359 : vector<32x128xf32>
    %361 = arith.truncf %360 : vector<32x128xf32> to vector<32x128xbf16>
    %c96_145 = arith.constant 96 : index
    %c0_146 = arith.constant 0 : index
    %362 = vector.load %arg15[%c96_145, %c0_146] : memref<288x128xbf16, #tpu.memory_space<vmem>>, vector<32x128xbf16>
    tpu.vector_store %arg15[%c96_145, %c0_146], %361 {strides = array<i32>} : memref<288x128xbf16, #tpu.memory_space<vmem>>, vector<32x128xbf16>,
    %cst_147 = arith.constant 7.000000e+00 : f32
    %363 = vector.broadcast %cst_147 : f32 to vector<32x128xf32>
    %364 = arith.subf %278, %363 : vector<32x128xf32>
    %cst_148 = arith.constant 0.000000e+00 : f32
    %365 = vector.broadcast %cst_148 : f32 to vector<32x128xf32>
    %366 = arith.maximumf %364, %365 : vector<32x128xf32>
    %367 = arith.mulf %366, %366 : vector<32x128xf32>
    %368 = arith.mulf %366, %367 : vector<32x128xf32>
    %cst_149 = arith.constant 4.000000e+00 : f32
    %369 = vector.broadcast %cst_149 : f32 to vector<32x128xf32>
    %370 = arith.mulf %369, %308 : vector<32x128xf32>
    %371 = arith.subf %302, %370 : vector<32x128xf32>
    %cst_150 = arith.constant 6.000000e+00 : f32
    %372 = vector.broadcast %cst_150 : f32 to vector<32x128xf32>
    %373 = arith.mulf %372, %328 : vector<32x128xf32>
    %374 = arith.addf %371, %373 : vector<32x128xf32>
    %cst_151 = arith.constant 4.000000e+00 : f32
    %375 = vector.broadcast %cst_151 : f32 to vector<32x128xf32>
    %376 = arith.mulf %375, %348 : vector<32x128xf32>
    %377 = arith.subf %374, %376 : vector<32x128xf32>
    %378 = arith.addf %377, %368 : vector<32x128xf32>
    %cst_152 = arith.constant 0.166666672 : f32
    %379 = vector.broadcast %cst_152 : f32 to vector<32x128xf32>
    %380 = arith.mulf %378, %379 : vector<32x128xf32>
    %381 = arith.truncf %380 : vector<32x128xf32> to vector<32x128xbf16>
    %c128_153 = arith.constant 128 : index
    %c0_154 = arith.constant 0 : index
    %382 = vector.load %arg15[%c128_153, %c0_154] : memref<288x128xbf16, #tpu.memory_space<vmem>>, vector<32x128xbf16>
    tpu.vector_store %arg15[%c128_153, %c0_154], %381 {strides = array<i32>} : memref<288x128xbf16, #tpu.memory_space<vmem>>, vector<32x128xbf16>,
    %cst_155 = arith.constant 8.000000e+00 : f32
    %383 = vector.broadcast %cst_155 : f32 to vector<32x128xf32>
    %384 = arith.subf %278, %383 : vector<32x128xf32>
    %cst_156 = arith.constant 0.000000e+00 : f32
    %385 = vector.broadcast %cst_156 : f32 to vector<32x128xf32>
    %386 = arith.maximumf %384, %385 : vector<32x128xf32>
    %387 = arith.mulf %386, %386 : vector<32x128xf32>
    %388 = arith.mulf %386, %387 : vector<32x128xf32>
    %cst_157 = arith.constant 4.000000e+00 : f32
    %389 = vector.broadcast %cst_157 : f32 to vector<32x128xf32>
    %390 = arith.mulf %389, %328 : vector<32x128xf32>
    %391 = arith.subf %308, %390 : vector<32x128xf32>
    %cst_158 = arith.constant 6.000000e+00 : f32
    %392 = vector.broadcast %cst_158 : f32 to vector<32x128xf32>
    %393 = arith.mulf %392, %348 : vector<32x128xf32>
    %394 = arith.addf %391, %393 : vector<32x128xf32>
    %cst_159 = arith.constant 4.000000e+00 : f32
    %395 = vector.broadcast %cst_159 : f32 to vector<32x128xf32>
    %396 = arith.mulf %395, %368 : vector<32x128xf32>
    %397 = arith.subf %394, %396 : vector<32x128xf32>
    %398 = arith.addf %397, %388 : vector<32x128xf32>
    %cst_160 = arith.constant 0.166666672 : f32
    %399 = vector.broadcast %cst_160 : f32 to vector<32x128xf32>
    %400 = arith.mulf %398, %399 : vector<32x128xf32>
    %401 = arith.truncf %400 : vector<32x128xf32> to vector<32x128xbf16>
    %c160 = arith.constant 160 : index
    %c0_161 = arith.constant 0 : index
    %402 = vector.load %arg15[%c160, %c0_161] : memref<288x128xbf16, #tpu.memory_space<vmem>>, vector<32x128xbf16>
    tpu.vector_store %arg15[%c160, %c0_161], %401 {strides = array<i32>} : memref<288x128xbf16, #tpu.memory_space<vmem>>, vector<32x128xbf16>,
    %cst_162 = arith.constant 9.000000e+00 : f32
    %403 = vector.broadcast %cst_162 : f32 to vector<32x128xf32>
    %404 = arith.subf %278, %403 : vector<32x128xf32>
    %cst_163 = arith.constant 0.000000e+00 : f32
    %405 = vector.broadcast %cst_163 : f32 to vector<32x128xf32>
    %406 = arith.maximumf %404, %405 : vector<32x128xf32>
    %407 = arith.mulf %406, %406 : vector<32x128xf32>
    %408 = arith.mulf %406, %407 : vector<32x128xf32>
    %cst_164 = arith.constant 4.000000e+00 : f32
    %409 = vector.broadcast %cst_164 : f32 to vector<32x128xf32>
    %410 = arith.mulf %409, %348 : vector<32x128xf32>
    %411 = arith.subf %328, %410 : vector<32x128xf32>
    %cst_165 = arith.constant 6.000000e+00 : f32
    %412 = vector.broadcast %cst_165 : f32 to vector<32x128xf32>
    %413 = arith.mulf %412, %368 : vector<32x128xf32>
    %414 = arith.addf %411, %413 : vector<32x128xf32>
    %cst_166 = arith.constant 4.000000e+00 : f32
    %415 = vector.broadcast %cst_166 : f32 to vector<32x128xf32>
    %416 = arith.mulf %415, %388 : vector<32x128xf32>
    %417 = arith.subf %414, %416 : vector<32x128xf32>
    %418 = arith.addf %417, %408 : vector<32x128xf32>
    %cst_167 = arith.constant 0.166666672 : f32
    %419 = vector.broadcast %cst_167 : f32 to vector<32x128xf32>
    %420 = arith.mulf %418, %419 : vector<32x128xf32>
    %421 = arith.truncf %420 : vector<32x128xf32> to vector<32x128xbf16>
    %c192 = arith.constant 192 : index
    %c0_168 = arith.constant 0 : index
    %422 = vector.load %arg15[%c192, %c0_168] : memref<288x128xbf16, #tpu.memory_space<vmem>>, vector<32x128xbf16>
    tpu.vector_store %arg15[%c192, %c0_168], %421 {strides = array<i32>} : memref<288x128xbf16, #tpu.memory_space<vmem>>, vector<32x128xbf16>,
    %cst_169 = arith.constant 1.000000e+01 : f32
    %423 = vector.broadcast %cst_169 : f32 to vector<32x128xf32>
    %424 = arith.subf %278, %423 : vector<32x128xf32>
    %cst_170 = arith.constant 0.000000e+00 : f32
    %425 = vector.broadcast %cst_170 : f32 to vector<32x128xf32>
    %426 = arith.maximumf %424, %425 : vector<32x128xf32>
    %427 = arith.mulf %426, %426 : vector<32x128xf32>
    %428 = arith.mulf %426, %427 : vector<32x128xf32>
    %cst_171 = arith.constant 4.000000e+00 : f32
    %429 = vector.broadcast %cst_171 : f32 to vector<32x128xf32>
    %430 = arith.mulf %429, %368 : vector<32x128xf32>
    %431 = arith.subf %348, %430 : vector<32x128xf32>
    %cst_172 = arith.constant 6.000000e+00 : f32
    %432 = vector.broadcast %cst_172 : f32 to vector<32x128xf32>
    %433 = arith.mulf %432, %388 : vector<32x128xf32>
    %434 = arith.addf %431, %433 : vector<32x128xf32>
    %cst_173 = arith.constant 4.000000e+00 : f32
    %435 = vector.broadcast %cst_173 : f32 to vector<32x128xf32>
    %436 = arith.mulf %435, %408 : vector<32x128xf32>
    %437 = arith.subf %434, %436 : vector<32x128xf32>
    %438 = arith.addf %437, %428 : vector<32x128xf32>
    %cst_174 = arith.constant 0.166666672 : f32
    %439 = vector.broadcast %cst_174 : f32 to vector<32x128xf32>
    %440 = arith.mulf %438, %439 : vector<32x128xf32>
    %441 = arith.truncf %440 : vector<32x128xf32> to vector<32x128xbf16>
    %c224 = arith.constant 224 : index
    %c0_175 = arith.constant 0 : index
    %442 = vector.load %arg15[%c224, %c0_175] : memref<288x128xbf16, #tpu.memory_space<vmem>>, vector<32x128xbf16>
    tpu.vector_store %arg15[%c224, %c0_175], %441 {strides = array<i32>} : memref<288x128xbf16, #tpu.memory_space<vmem>>, vector<32x128xbf16>,
    %cst_176 = arith.constant 1.100000e+01 : f32
    %443 = vector.broadcast %cst_176 : f32 to vector<32x128xf32>
    %444 = arith.subf %278, %443 : vector<32x128xf32>
    %cst_177 = arith.constant 0.000000e+00 : f32
    %445 = vector.broadcast %cst_177 : f32 to vector<32x128xf32>
    %446 = arith.maximumf %444, %445 : vector<32x128xf32>
    %447 = arith.mulf %446, %446 : vector<32x128xf32>
    %448 = arith.mulf %446, %447 : vector<32x128xf32>
    %cst_178 = arith.constant 4.000000e+00 : f32
    %449 = vector.broadcast %cst_178 : f32 to vector<32x128xf32>
    %450 = arith.mulf %449, %388 : vector<32x128xf32>
    %451 = arith.subf %368, %450 : vector<32x128xf32>
    %cst_179 = arith.constant 6.000000e+00 : f32
    %452 = vector.broadcast %cst_179 : f32 to vector<32x128xf32>
    %453 = arith.mulf %452, %408 : vector<32x128xf32>
    %454 = arith.addf %451, %453 : vector<32x128xf32>
    %cst_180 = arith.constant 4.000000e+00 : f32
    %455 = vector.broadcast %cst_180 : f32 to vector<32x128xf32>
    %456 = arith.mulf %455, %428 : vector<32x128xf32>
    %457 = arith.subf %454, %456 : vector<32x128xf32>
    %458 = arith.addf %457, %448 : vector<32x128xf32>
    %cst_181 = arith.constant 0.166666672 : f32
    %459 = vector.broadcast %cst_181 : f32 to vector<32x128xf32>
    %460 = arith.mulf %458, %459 : vector<32x128xf32>
    %461 = arith.truncf %460 : vector<32x128xf32> to vector<32x128xbf16>
    %c256 = arith.constant 256 : index
    %c0_182 = arith.constant 0 : index
    %462 = vector.load %arg15[%c256, %c0_182] : memref<288x128xbf16, #tpu.memory_space<vmem>>, vector<32x128xbf16>
    tpu.vector_store %arg15[%c256, %c0_182], %461 {strides = array<i32>} : memref<288x128xbf16, #tpu.memory_space<vmem>>, vector<32x128xbf16>,
    %c0_183 = arith.constant 0 : index
    %c0_184 = arith.constant 0 : index
    %463 = vector.load %arg12[%c0_183, %c0_184] : memref<16x288xbf16, #tpu.memory_space<vmem>>, vector<16x288xbf16>
    %c0_185 = arith.constant 0 : index
    %c0_186 = arith.constant 0 : index
    %464 = vector.load %arg15[%c0_185, %c0_186] : memref<288x128xbf16, #tpu.memory_space<vmem>>, vector<288x128xbf16>
    %cst_187 = arith.constant dense<0.000000e+00> : vector<16x128xf32>
    %465 = tpu.matmul %463, %464, %cst_187 {dimension_numbers = #tpu.dot_dimension_numbers<[1], [0], [0], [1], [0, 0, 1, 1], [], []>} : vector<16x288xbf16>, vector<288x128xbf16>, vector<16x128xf32> -> vector<16x128xf32>
    %466 = arith.addf %1, %465 : vector<16x128xf32>
    %c0_188 = arith.constant 0 : index
    %c0_189 = arith.constant 0 : index
    %c0_190 = arith.constant 0 : index
    %467 = vector.load %arg13[%c0_188, %c0_189, %c0_190] : memref<1x16x128xf32, #tpu.memory_space<vmem>>, vector<1x16x128xf32>
    %468 = vector.shape_cast %467 : vector<1x16x128xf32> to vector<16x128xf32>
    %469 = vector.shape_cast %466 : vector<16x128xf32> to vector<1x16x128xf32>
    tpu.vector_store %arg13[%c0_188, %c0_189, %c0_190], %469 {strides = array<i32>} : memref<1x16x128xf32, #tpu.memory_space<vmem>>, vector<1x16x128xf32>,
    return
  }
  func.func @transform_0(%arg0: i32) -> (i32, i32, i32) {
    %c0_i32 = arith.constant 0 : i32
    %c0_i32_0 = arith.constant 0 : i32
    %c0_i32_1 = arith.constant 0 : i32
    return %arg0, %c0_i32, %c0_i32_0 : i32, i32, i32
  }
  func.func @transform_1(%arg0: i32) -> (i32, i32) {
    %c0_i32 = arith.constant 0 : i32
    %c0_i32_0 = arith.constant 0 : i32
    %c0_i32_1 = arith.constant 0 : i32
    return %c0_i32, %c0_i32_0 : i32, i32
  }
  func.func @transform_2(%arg0: i32) -> (i32, i32) {
    %c0_i32 = arith.constant 0 : i32
    %c0_i32_0 = arith.constant 0 : i32
    %c0_i32_1 = arith.constant 0 : i32
    return %c0_i32, %c0_i32_0 : i32, i32
  }
  func.func @transform_3(%arg0: i32) -> (i32, i32) {
    %c0_i32 = arith.constant 0 : i32
    %c0_i32_0 = arith.constant 0 : i32
    %c0_i32_1 = arith.constant 0 : i32
    return %c0_i32, %c0_i32_0 : i32, i32
  }
  func.func @transform_4(%arg0: i32) -> (i32, i32) {
    %c0_i32 = arith.constant 0 : i32
    %c0_i32_0 = arith.constant 0 : i32
    %c0_i32_1 = arith.constant 0 : i32
    return %c0_i32, %c0_i32_0 : i32, i32
  }
  func.func @transform_5(%arg0: i32) -> (i32, i32) {
    %c0_i32 = arith.constant 0 : i32
    %c0_i32_0 = arith.constant 0 : i32
    %c0_i32_1 = arith.constant 0 : i32
    return %c0_i32, %c0_i32_0 : i32, i32
  }
  func.func @transform_6(%arg0: i32) -> (i32, i32) {
    %c0_i32 = arith.constant 0 : i32
    %c0_i32_0 = arith.constant 0 : i32
    %c0_i32_1 = arith.constant 0 : i32
    return %c0_i32, %c0_i32_0 : i32, i32
  }
  func.func @transform_7(%arg0: i32) -> (i32, i32) {
    %c0_i32 = arith.constant 0 : i32
    %c0_i32_0 = arith.constant 0 : i32
    %c0_i32_1 = arith.constant 0 : i32
    return %c0_i32, %c0_i32_0 : i32, i32
  }
  func.func @transform_8(%arg0: i32) -> (i32, i32) {
    %c0_i32 = arith.constant 0 : i32
    %c0_i32_0 = arith.constant 0 : i32
    %c0_i32_1 = arith.constant 0 : i32
    return %c0_i32, %c0_i32_0 : i32, i32
  }
  func.func @transform_9(%arg0: i32) -> (i32, i32) {
    %c0_i32 = arith.constant 0 : i32
    %c0_i32_0 = arith.constant 0 : i32
    %c0_i32_1 = arith.constant 0 : i32
    return %c0_i32, %c0_i32_0 : i32, i32
  }
  func.func @transform_10(%arg0: i32) -> (i32, i32) {
    %c0_i32 = arith.constant 0 : i32
    %c0_i32_0 = arith.constant 0 : i32
    %c0_i32_1 = arith.constant 0 : i32
    return %c0_i32, %c0_i32_0 : i32, i32
  }
  func.func @transform_11(%arg0: i32) -> (i32, i32) {
    %c0_i32 = arith.constant 0 : i32
    %c0_i32_0 = arith.constant 0 : i32
    %c0_i32_1 = arith.constant 0 : i32
    return %c0_i32, %c0_i32_0 : i32, i32
  }
  func.func @transform_12(%arg0: i32) -> (i32, i32, i32) {
    %c0_i32 = arith.constant 0 : i32
    %c0_i32_0 = arith.constant 0 : i32
    %c0_i32_1 = arith.constant 0 : i32
    return %arg0, %c0_i32, %c0_i32_0 : i32, i32, i32
  }
}

module attributes {stable_mosaic.version = 11 : i64} {
  func.func @kan_block_kernel(%arg0: i32, %arg1: memref<1x16x128xf32, #tpu.memory_space<vmem>>, %arg2: memref<16x1xf32, #tpu.memory_space<vmem>>, %arg3: memref<16x1xf32, #tpu.memory_space<vmem>>, %arg4: memref<16x1xf32, #tpu.memory_space<vmem>>, %arg5: memref<16x1xf32, #tpu.memory_space<vmem>>, %arg6: memref<128x160xbf16, #tpu.memory_space<vmem>>, %arg7: memref<160x128xbf16, #tpu.memory_space<vmem>>, %arg8: memref<160x128xbf16, #tpu.memory_space<vmem>>, %arg9: memref<16x160xf32, #tpu.memory_space<vmem>>, %arg10: memref<16x160xf32, #tpu.memory_space<vmem>>, %arg11: memref<32x144xbf16, #tpu.memory_space<vmem>>, %arg12: memref<16x288xbf16, #tpu.memory_space<vmem>>, %arg13: memref<1x16x128xf32, #tpu.memory_space<vmem>>, %arg14: memref<144x128xbf16, #tpu.memory_space<vmem>>, %arg15: memref<288x128xbf16, #tpu.memory_space<vmem>>) attributes {dimension_semantics = [#tpu.dimension_semantics<parallel>], iteration_bounds = array<i64: 1>, scalar_prefetch = 0 : i64, scratch_operands = 2 : i64, tpu.core_type = #tpu.core_type<tc>, window_params = [{transform_indices = @transform_0, window_bounds = array<i64: 1, 16, 128>}, {pipeline_mode = #tpu.pipeline_mode<synchronous>, transform_indices = @transform_1, window_bounds = array<i64: 16, 1>}, {pipeline_mode = #tpu.pipeline_mode<synchronous>, transform_indices = @transform_2, window_bounds = array<i64: 16, 1>}, {pipeline_mode = #tpu.pipeline_mode<synchronous>, transform_indices = @transform_3, window_bounds = array<i64: 16, 1>}, {pipeline_mode = #tpu.pipeline_mode<synchronous>, transform_indices = @transform_4, window_bounds = array<i64: 16, 1>}, {pipeline_mode = #tpu.pipeline_mode<synchronous>, transform_indices = @transform_5, window_bounds = array<i64: 128, 160>}, {pipeline_mode = #tpu.pipeline_mode<synchronous>, transform_indices = @transform_6, window_bounds = array<i64: 160, 128>}, {pipeline_mode = #tpu.pipeline_mode<synchronous>, transform_indices = @transform_7, window_bounds = array<i64: 160, 128>}, {pipeline_mode = #tpu.pipeline_mode<synchronous>, transform_indices = @transform_8, window_bounds = array<i64: 16, 160>}, {pipeline_mode = #tpu.pipeline_mode<synchronous>, transform_indices = @transform_9, window_bounds = array<i64: 16, 160>}, {pipeline_mode = #tpu.pipeline_mode<synchronous>, transform_indices = @transform_10, window_bounds = array<i64: 32, 144>}, {pipeline_mode = #tpu.pipeline_mode<synchronous>, transform_indices = @transform_11, window_bounds = array<i64: 16, 288>}, {transform_indices = @transform_12, window_bounds = array<i64: 1, 16, 128>}]} {
    %c0 = arith.constant 0 : index
    %c0_0 = arith.constant 0 : index
    %c0_1 = arith.constant 0 : index
    %0 = vector.load %arg1[%c0, %c0_0, %c0_1] : memref<1x16x128xf32, #tpu.memory_space<vmem>>, vector<1x16x128xf32>
    %1 = vector.shape_cast %0 : vector<1x16x128xf32> to vector<16x128xf32>
    %c0_2 = arith.constant 0 : index
    %c0_3 = arith.constant 0 : index
    %2 = vector.load %arg2[%c0_2, %c0_3] : memref<16x1xf32, #tpu.memory_space<vmem>>, vector<16x1xf32>
    %c0_4 = arith.constant 0 : index
    %c0_5 = arith.constant 0 : index
    %3 = vector.load %arg3[%c0_4, %c0_5] : memref<16x1xf32, #tpu.memory_space<vmem>>, vector<16x1xf32>
    %cst = arith.constant dense<0.000000e+00> : vector<128xf32>
    %4 = vector.multi_reduction <add>, %1, %cst [0] : vector<16x128xf32> to vector<128xf32>
    %5 = vector.shape_cast %4 : vector<128xf32> to vector<1x128xf32>
    %cst_6 = arith.constant 1.600000e+01 : f32
    %6 = vector.broadcast %cst_6 : f32 to vector<1x128xf32>
    %7 = arith.divf %5, %6 : vector<1x128xf32>
    %8 = vector.broadcast %7 : vector<1x128xf32> to vector<16x128xf32>
    %9 = arith.subf %1, %8 : vector<16x128xf32>
    %10 = arith.mulf %9, %9 : vector<16x128xf32>
    %cst_7 = arith.constant dense<0.000000e+00> : vector<128xf32>
    %11 = vector.multi_reduction <add>, %10, %cst_7 [0] : vector<16x128xf32> to vector<128xf32>
    %12 = vector.shape_cast %11 : vector<128xf32> to vector<1x128xf32>
    %cst_8 = arith.constant 1.600000e+01 : f32
    %13 = vector.broadcast %cst_8 : f32 to vector<1x128xf32>
    %14 = arith.divf %12, %13 : vector<1x128xf32>
    %cst_9 = arith.constant 9.99999974E-6 : f32
    %15 = vector.broadcast %cst_9 : f32 to vector<1x128xf32>
    %16 = arith.addf %14, %15 : vector<1x128xf32>
    %17 = math.rsqrt %16 : vector<1x128xf32>
    %18 = vector.broadcast %17 : vector<1x128xf32> to vector<16x128xf32>
    %19 = arith.mulf %9, %18 : vector<16x128xf32>
    %20 = vector.broadcast %2 : vector<16x1xf32> to vector<16x128xf32>
    %21 = arith.mulf %19, %20 : vector<16x128xf32>
    %22 = vector.broadcast %3 : vector<16x1xf32> to vector<16x128xf32>
    %23 = arith.addf %21, %22 : vector<16x128xf32>
    %24 = arith.truncf %23 : vector<16x128xf32> to vector<16x128xbf16>
    %c0_10 = arith.constant 0 : index
    %c0_11 = arith.constant 0 : index
    %25 = vector.load %arg6[%c0_10, %c0_11] : memref<128x160xbf16, #tpu.memory_space<vmem>>, vector<128x160xbf16>
    %cst_12 = arith.constant dense<0.000000e+00> : vector<16x160xf32>
    %26 = tpu.matmul %24, %25, %cst_12 {dimension_numbers = #tpu.dot_dimension_numbers<[1], [0], [0], [1], [0, 0, 1, 1], [], []>} : vector<16x128xbf16>, vector<128x160xbf16>, vector<16x160xf32> -> vector<16x160xf32>
    %c0_13 = arith.constant 0 : index
    %c0_14 = arith.constant 0 : index
    %27 = vector.load %arg9[%c0_13, %c0_14] : memref<16x160xf32, #tpu.memory_space<vmem>>, vector<16x160xf32>
    %28 = arith.mulf %26, %27 : vector<16x160xf32>
    %29 = arith.truncf %28 : vector<16x160xf32> to vector<16x160xbf16>
    %c0_15 = arith.constant 0 : index
    %c0_16 = arith.constant 0 : index
    %30 = vector.load %arg10[%c0_15, %c0_16] : memref<16x160xf32, #tpu.memory_space<vmem>>, vector<16x160xf32>
    %31 = arith.mulf %26, %30 : vector<16x160xf32>
    %32 = arith.truncf %31 : vector<16x160xf32> to vector<16x160xbf16>
    %c0_17 = arith.constant 0 : index
    %c0_18 = arith.constant 0 : index
    %33 = vector.load %arg7[%c0_17, %c0_18] : memref<160x128xbf16, #tpu.memory_space<vmem>>, vector<160x128xbf16>
    %cst_19 = arith.constant dense<0.000000e+00> : vector<16x128xf32>
    %34 = tpu.matmul %29, %33, %cst_19 {dimension_numbers = #tpu.dot_dimension_numbers<[1], [0], [0], [1], [0, 0, 1, 1], [], []>} : vector<16x160xbf16>, vector<160x128xbf16>, vector<16x128xf32> -> vector<16x128xf32>
    %c0_20 = arith.constant 0 : index
    %c0_21 = arith.constant 0 : index
    %35 = vector.load %arg8[%c0_20, %c0_21] : memref<160x128xbf16, #tpu.memory_space<vmem>>, vector<160x128xbf16>
    %cst_22 = arith.constant dense<0.000000e+00> : vector<16x128xf32>
    %36 = tpu.matmul %32, %35, %cst_22 {dimension_numbers = #tpu.dot_dimension_numbers<[1], [0], [0], [1], [0, 0, 1, 1], [], []>} : vector<16x160xbf16>, vector<160x128xbf16>, vector<16x128xf32> -> vector<16x128xf32>
    %37 = arith.addf %34, %36 : vector<16x128xf32>
    %c0_23 = arith.constant 0 : index
    %c0_24 = arith.constant 0 : index
    %38 = vector.load %arg4[%c0_23, %c0_24] : memref<16x1xf32, #tpu.memory_space<vmem>>, vector<16x1xf32>
    %c0_25 = arith.constant 0 : index
    %c0_26 = arith.constant 0 : index
    %39 = vector.load %arg5[%c0_25, %c0_26] : memref<16x1xf32, #tpu.memory_space<vmem>>, vector<16x1xf32>
    %cst_27 = arith.constant dense<0.000000e+00> : vector<128xf32>
    %40 = vector.multi_reduction <add>, %37, %cst_27 [0] : vector<16x128xf32> to vector<128xf32>
    %41 = vector.shape_cast %40 : vector<128xf32> to vector<1x128xf32>
    %cst_28 = arith.constant 1.600000e+01 : f32
    %42 = vector.broadcast %cst_28 : f32 to vector<1x128xf32>
    %43 = arith.divf %41, %42 : vector<1x128xf32>
    %44 = vector.broadcast %43 : vector<1x128xf32> to vector<16x128xf32>
    %45 = arith.subf %37, %44 : vector<16x128xf32>
    %46 = arith.mulf %45, %45 : vector<16x128xf32>
    %cst_29 = arith.constant dense<0.000000e+00> : vector<128xf32>
    %47 = vector.multi_reduction <add>, %46, %cst_29 [0] : vector<16x128xf32> to vector<128xf32>
    %48 = vector.shape_cast %47 : vector<128xf32> to vector<1x128xf32>
    %cst_30 = arith.constant 1.600000e+01 : f32
    %49 = vector.broadcast %cst_30 : f32 to vector<1x128xf32>
    %50 = arith.divf %48, %49 : vector<1x128xf32>
    %cst_31 = arith.constant 9.99999974E-6 : f32
    %51 = vector.broadcast %cst_31 : f32 to vector<1x128xf32>
    %52 = arith.addf %50, %51 : vector<1x128xf32>
    %53 = math.rsqrt %52 : vector<1x128xf32>
    %54 = vector.broadcast %53 : vector<1x128xf32> to vector<16x128xf32>
    %55 = arith.mulf %45, %54 : vector<16x128xf32>
    %56 = vector.broadcast %38 : vector<16x1xf32> to vector<16x128xf32>
    %57 = arith.mulf %55, %56 : vector<16x128xf32>
    %58 = vector.broadcast %39 : vector<16x1xf32> to vector<16x128xf32>
    %59 = arith.addf %57, %58 : vector<16x128xf32>
    %60 = arith.negf %59 : vector<16x128xf32>
    %61 = math.exp %60 : vector<16x128xf32>
    %cst_32 = arith.constant 1.000000e+00 : f32
    %62 = vector.broadcast %cst_32 : f32 to vector<16x128xf32>
    %63 = arith.addf %62, %61 : vector<16x128xf32>
    %64 = arith.divf %62, %63 : vector<16x128xf32>
    %65 = arith.mulf %59, %64 : vector<16x128xf32>
    %66 = arith.truncf %65 : vector<16x128xf32> to vector<16x128xbf16>
    %c0_33 = arith.constant 0 : index
    %c0_34 = arith.constant 0 : index
    %67 = vector.load %arg14[%c0_33, %c0_34] : memref<144x128xbf16, #tpu.memory_space<vmem>>, vector<16x128xbf16>
    tpu.vector_store %arg14[%c0_33, %c0_34], %66 {strides = array<i32>} : memref<144x128xbf16, #tpu.memory_space<vmem>>, vector<16x128xbf16>,
    %cst_35 = arith.constant -2.200000e+00 : f32
    %68 = vector.broadcast %cst_35 : f32 to vector<16x128xf32>
    %69 = arith.subf %59, %68 : vector<16x128xf32>
    %cst_36 = arith.constant 2.500000e+00 : f32
    %70 = vector.broadcast %cst_36 : f32 to vector<16x128xf32>
    %71 = arith.mulf %69, %70 : vector<16x128xf32>
    %cst_37 = arith.constant 0.000000e+00 : f32
    %cst_38 = arith.constant 1.100000e+01 : f32
    %72 = vector.broadcast %cst_37 : f32 to vector<16x128xf32>
    %73 = arith.maximumf %72, %71 : vector<16x128xf32>
    %74 = vector.broadcast %cst_38 : f32 to vector<16x128xf32>
    %75 = arith.minimumf %74, %73 : vector<16x128xf32>
    %cst_39 = arith.constant 0.000000e+00 : f32
    %76 = vector.broadcast %cst_39 : f32 to vector<16x128xf32>
    %77 = arith.subf %75, %76 : vector<16x128xf32>
    %cst_40 = arith.constant 0.000000e+00 : f32
    %78 = vector.broadcast %cst_40 : f32 to vector<16x128xf32>
    %79 = arith.maximumf %77, %78 : vector<16x128xf32>
    %80 = arith.mulf %79, %79 : vector<16x128xf32>
    %81 = arith.mulf %79, %80 : vector<16x128xf32>
    %cst_41 = arith.constant 1.000000e+00 : f32
    %82 = vector.broadcast %cst_41 : f32 to vector<16x128xf32>
    %83 = arith.subf %75, %82 : vector<16x128xf32>
    %cst_42 = arith.constant 0.000000e+00 : f32
    %84 = vector.broadcast %cst_42 : f32 to vector<16x128xf32>
    %85 = arith.maximumf %83, %84 : vector<16x128xf32>
    %86 = arith.mulf %85, %85 : vector<16x128xf32>
    %87 = arith.mulf %85, %86 : vector<16x128xf32>
    %cst_43 = arith.constant 2.000000e+00 : f32
    %88 = vector.broadcast %cst_43 : f32 to vector<16x128xf32>
    %89 = arith.subf %75, %88 : vector<16x128xf32>
    %cst_44 = arith.constant 0.000000e+00 : f32
    %90 = vector.broadcast %cst_44 : f32 to vector<16x128xf32>
    %91 = arith.maximumf %89, %90 : vector<16x128xf32>
    %92 = arith.mulf %91, %91 : vector<16x128xf32>
    %93 = arith.mulf %91, %92 : vector<16x128xf32>
    %cst_45 = arith.constant 3.000000e+00 : f32
    %94 = vector.broadcast %cst_45 : f32 to vector<16x128xf32>
    %95 = arith.subf %75, %94 : vector<16x128xf32>
    %cst_46 = arith.constant 0.000000e+00 : f32
    %96 = vector.broadcast %cst_46 : f32 to vector<16x128xf32>
    %97 = arith.maximumf %95, %96 : vector<16x128xf32>
    %98 = arith.mulf %97, %97 : vector<16x128xf32>
    %99 = arith.mulf %97, %98 : vector<16x128xf32>
    %cst_47 = arith.constant 4.000000e+00 : f32
    %100 = vector.broadcast %cst_47 : f32 to vector<16x128xf32>
    %101 = arith.subf %75, %100 : vector<16x128xf32>
    %cst_48 = arith.constant 0.000000e+00 : f32
    %102 = vector.broadcast %cst_48 : f32 to vector<16x128xf32>
    %103 = arith.maximumf %101, %102 : vector<16x128xf32>
    %104 = arith.mulf %103, %103 : vector<16x128xf32>
    %105 = arith.mulf %103, %104 : vector<16x128xf32>
    %cst_49 = arith.constant 4.000000e+00 : f32
    %106 = vector.broadcast %cst_49 : f32 to vector<16x128xf32>
    %107 = arith.mulf %106, %87 : vector<16x128xf32>
    %108 = arith.subf %81, %107 : vector<16x128xf32>
    %cst_50 = arith.constant 6.000000e+00 : f32
    %109 = vector.broadcast %cst_50 : f32 to vector<16x128xf32>
    %110 = arith.mulf %109, %93 : vector<16x128xf32>
    %111 = arith.addf %108, %110 : vector<16x128xf32>
    %cst_51 = arith.constant 4.000000e+00 : f32
    %112 = vector.broadcast %cst_51 : f32 to vector<16x128xf32>
    %113 = arith.mulf %112, %99 : vector<16x128xf32>
    %114 = arith.subf %111, %113 : vector<16x128xf32>
    %115 = arith.addf %114, %105 : vector<16x128xf32>
    %cst_52 = arith.constant 0.166666672 : f32
    %116 = vector.broadcast %cst_52 : f32 to vector<16x128xf32>
    %117 = arith.mulf %115, %116 : vector<16x128xf32>
    %118 = arith.truncf %117 : vector<16x128xf32> to vector<16x128xbf16>
    %c16 = arith.constant 16 : index
    %c0_53 = arith.constant 0 : index
    %119 = vector.load %arg14[%c16, %c0_53] : memref<144x128xbf16, #tpu.memory_space<vmem>>, vector<16x128xbf16>
    tpu.vector_store %arg14[%c16, %c0_53], %118 {strides = array<i32>} : memref<144x128xbf16, #tpu.memory_space<vmem>>, vector<16x128xbf16>,
    %cst_54 = arith.constant 5.000000e+00 : f32
    %120 = vector.broadcast %cst_54 : f32 to vector<16x128xf32>
    %121 = arith.subf %75, %120 : vector<16x128xf32>
    %cst_55 = arith.constant 0.000000e+00 : f32
    %122 = vector.broadcast %cst_55 : f32 to vector<16x128xf32>
    %123 = arith.maximumf %121, %122 : vector<16x128xf32>
    %124 = arith.mulf %123, %123 : vector<16x128xf32>
    %125 = arith.mulf %123, %124 : vector<16x128xf32>
    %cst_56 = arith.constant 4.000000e+00 : f32
    %126 = vector.broadcast %cst_56 : f32 to vector<16x128xf32>
    %127 = arith.mulf %126, %93 : vector<16x128xf32>
    %128 = arith.subf %87, %127 : vector<16x128xf32>
    %cst_57 = arith.constant 6.000000e+00 : f32
    %129 = vector.broadcast %cst_57 : f32 to vector<16x128xf32>
    %130 = arith.mulf %129, %99 : vector<16x128xf32>
    %131 = arith.addf %128, %130 : vector<16x128xf32>
    %cst_58 = arith.constant 4.000000e+00 : f32
    %132 = vector.broadcast %cst_58 : f32 to vector<16x128xf32>
    %133 = arith.mulf %132, %105 : vector<16x128xf32>
    %134 = arith.subf %131, %133 : vector<16x128xf32>
    %135 = arith.addf %134, %125 : vector<16x128xf32>
    %cst_59 = arith.constant 0.166666672 : f32
    %136 = vector.broadcast %cst_59 : f32 to vector<16x128xf32>
    %137 = arith.mulf %135, %136 : vector<16x128xf32>
    %138 = arith.truncf %137 : vector<16x128xf32> to vector<16x128xbf16>
    %c32 = arith.constant 32 : index
    %c0_60 = arith.constant 0 : index
    %139 = vector.load %arg14[%c32, %c0_60] : memref<144x128xbf16, #tpu.memory_space<vmem>>, vector<16x128xbf16>
    tpu.vector_store %arg14[%c32, %c0_60], %138 {strides = array<i32>} : memref<144x128xbf16, #tpu.memory_space<vmem>>, vector<16x128xbf16>,
    %cst_61 = arith.constant 6.000000e+00 : f32
    %140 = vector.broadcast %cst_61 : f32 to vector<16x128xf32>
    %141 = arith.subf %75, %140 : vector<16x128xf32>
    %cst_62 = arith.constant 0.000000e+00 : f32
    %142 = vector.broadcast %cst_62 : f32 to vector<16x128xf32>
    %143 = arith.maximumf %141, %142 : vector<16x128xf32>
    %144 = arith.mulf %143, %143 : vector<16x128xf32>
    %145 = arith.mulf %143, %144 : vector<16x128xf32>
    %cst_63 = arith.constant 4.000000e+00 : f32
    %146 = vector.broadcast %cst_63 : f32 to vector<16x128xf32>
    %147 = arith.mulf %146, %99 : vector<16x128xf32>
    %148 = arith.subf %93, %147 : vector<16x128xf32>
    %cst_64 = arith.constant 6.000000e+00 : f32
    %149 = vector.broadcast %cst_64 : f32 to vector<16x128xf32>
    %150 = arith.mulf %149, %105 : vector<16x128xf32>
    %151 = arith.addf %148, %150 : vector<16x128xf32>
    %cst_65 = arith.constant 4.000000e+00 : f32
    %152 = vector.broadcast %cst_65 : f32 to vector<16x128xf32>
    %153 = arith.mulf %152, %125 : vector<16x128xf32>
    %154 = arith.subf %151, %153 : vector<16x128xf32>
    %155 = arith.addf %154, %145 : vector<16x128xf32>
    %cst_66 = arith.constant 0.166666672 : f32
    %156 = vector.broadcast %cst_66 : f32 to vector<16x128xf32>
    %157 = arith.mulf %155, %156 : vector<16x128xf32>
    %158 = arith.truncf %157 : vector<16x128xf32> to vector<16x128xbf16>
    %c48 = arith.constant 48 : index
    %c0_67 = arith.constant 0 : index
    %159 = vector.load %arg14[%c48, %c0_67] : memref<144x128xbf16, #tpu.memory_space<vmem>>, vector<16x128xbf16>
    tpu.vector_store %arg14[%c48, %c0_67], %158 {strides = array<i32>} : memref<144x128xbf16, #tpu.memory_space<vmem>>, vector<16x128xbf16>,
    %cst_68 = arith.constant 7.000000e+00 : f32
    %160 = vector.broadcast %cst_68 : f32 to vector<16x128xf32>
    %161 = arith.subf %75, %160 : vector<16x128xf32>
    %cst_69 = arith.constant 0.000000e+00 : f32
    %162 = vector.broadcast %cst_69 : f32 to vector<16x128xf32>
    %163 = arith.maximumf %161, %162 : vector<16x128xf32>
    %164 = arith.mulf %163, %163 : vector<16x128xf32>
    %165 = arith.mulf %163, %164 : vector<16x128xf32>
    %cst_70 = arith.constant 4.000000e+00 : f32
    %166 = vector.broadcast %cst_70 : f32 to vector<16x128xf32>
    %167 = arith.mulf %166, %105 : vector<16x128xf32>
    %168 = arith.subf %99, %167 : vector<16x128xf32>
    %cst_71 = arith.constant 6.000000e+00 : f32
    %169 = vector.broadcast %cst_71 : f32 to vector<16x128xf32>
    %170 = arith.mulf %169, %125 : vector<16x128xf32>
    %171 = arith.addf %168, %170 : vector<16x128xf32>
    %cst_72 = arith.constant 4.000000e+00 : f32
    %172 = vector.broadcast %cst_72 : f32 to vector<16x128xf32>
    %173 = arith.mulf %172, %145 : vector<16x128xf32>
    %174 = arith.subf %171, %173 : vector<16x128xf32>
    %175 = arith.addf %174, %165 : vector<16x128xf32>
    %cst_73 = arith.constant 0.166666672 : f32
    %176 = vector.broadcast %cst_73 : f32 to vector<16x128xf32>
    %177 = arith.mulf %175, %176 : vector<16x128xf32>
    %178 = arith.truncf %177 : vector<16x128xf32> to vector<16x128xbf16>
    %c64 = arith.constant 64 : index
    %c0_74 = arith.constant 0 : index
    %179 = vector.load %arg14[%c64, %c0_74] : memref<144x128xbf16, #tpu.memory_space<vmem>>, vector<16x128xbf16>
    tpu.vector_store %arg14[%c64, %c0_74], %178 {strides = array<i32>} : memref<144x128xbf16, #tpu.memory_space<vmem>>, vector<16x128xbf16>,
    %cst_75 = arith.constant 8.000000e+00 : f32
    %180 = vector.broadcast %cst_75 : f32 to vector<16x128xf32>
    %181 = arith.subf %75, %180 : vector<16x128xf32>
    %cst_76 = arith.constant 0.000000e+00 : f32
    %182 = vector.broadcast %cst_76 : f32 to vector<16x128xf32>
    %183 = arith.maximumf %181, %182 : vector<16x128xf32>
    %184 = arith.mulf %183, %183 : vector<16x128xf32>
    %185 = arith.mulf %183, %184 : vector<16x128xf32>
    %cst_77 = arith.constant 4.000000e+00 : f32
    %186 = vector.broadcast %cst_77 : f32 to vector<16x128xf32>
    %187 = arith.mulf %186, %125 : vector<16x128xf32>
    %188 = arith.subf %105, %187 : vector<16x128xf32>
    %cst_78 = arith.constant 6.000000e+00 : f32
    %189 = vector.broadcast %cst_78 : f32 to vector<16x128xf32>
    %190 = arith.mulf %189, %145 : vector<16x128xf32>
    %191 = arith.addf %188, %190 : vector<16x128xf32>
    %cst_79 = arith.constant 4.000000e+00 : f32
    %192 = vector.broadcast %cst_79 : f32 to vector<16x128xf32>
    %193 = arith.mulf %192, %165 : vector<16x128xf32>
    %194 = arith.subf %191, %193 : vector<16x128xf32>
    %195 = arith.addf %194, %185 : vector<16x128xf32>
    %cst_80 = arith.constant 0.166666672 : f32
    %196 = vector.broadcast %cst_80 : f32 to vector<16x128xf32>
    %197 = arith.mulf %195, %196 : vector<16x128xf32>
    %198 = arith.truncf %197 : vector<16x128xf32> to vector<16x128xbf16>
    %c80 = arith.constant 80 : index
    %c0_81 = arith.constant 0 : index
    %199 = vector.load %arg14[%c80, %c0_81] : memref<144x128xbf16, #tpu.memory_space<vmem>>, vector<16x128xbf16>
    tpu.vector_store %arg14[%c80, %c0_81], %198 {strides = array<i32>} : memref<144x128xbf16, #tpu.memory_space<vmem>>, vector<16x128xbf16>,
    %cst_82 = arith.constant 9.000000e+00 : f32
    %200 = vector.broadcast %cst_82 : f32 to vector<16x128xf32>
    %201 = arith.subf %75, %200 : vector<16x128xf32>
    %cst_83 = arith.constant 0.000000e+00 : f32
    %202 = vector.broadcast %cst_83 : f32 to vector<16x128xf32>
    %203 = arith.maximumf %201, %202 : vector<16x128xf32>
    %204 = arith.mulf %203, %203 : vector<16x128xf32>
    %205 = arith.mulf %203, %204 : vector<16x128xf32>
    %cst_84 = arith.constant 4.000000e+00 : f32
    %206 = vector.broadcast %cst_84 : f32 to vector<16x128xf32>
    %207 = arith.mulf %206, %145 : vector<16x128xf32>
    %208 = arith.subf %125, %207 : vector<16x128xf32>
    %cst_85 = arith.constant 6.000000e+00 : f32
    %209 = vector.broadcast %cst_85 : f32 to vector<16x128xf32>
    %210 = arith.mulf %209, %165 : vector<16x128xf32>
    %211 = arith.addf %208, %210 : vector<16x128xf32>
    %cst_86 = arith.constant 4.000000e+00 : f32
    %212 = vector.broadcast %cst_86 : f32 to vector<16x128xf32>
    %213 = arith.mulf %212, %185 : vector<16x128xf32>
    %214 = arith.subf %211, %213 : vector<16x128xf32>
    %215 = arith.addf %214, %205 : vector<16x128xf32>
    %cst_87 = arith.constant 0.166666672 : f32
    %216 = vector.broadcast %cst_87 : f32 to vector<16x128xf32>
    %217 = arith.mulf %215, %216 : vector<16x128xf32>
    %218 = arith.truncf %217 : vector<16x128xf32> to vector<16x128xbf16>
    %c96 = arith.constant 96 : index
    %c0_88 = arith.constant 0 : index
    %219 = vector.load %arg14[%c96, %c0_88] : memref<144x128xbf16, #tpu.memory_space<vmem>>, vector<16x128xbf16>
    tpu.vector_store %arg14[%c96, %c0_88], %218 {strides = array<i32>} : memref<144x128xbf16, #tpu.memory_space<vmem>>, vector<16x128xbf16>,
    %cst_89 = arith.constant 1.000000e+01 : f32
    %220 = vector.broadcast %cst_89 : f32 to vector<16x128xf32>
    %221 = arith.subf %75, %220 : vector<16x128xf32>
    %cst_90 = arith.constant 0.000000e+00 : f32
    %222 = vector.broadcast %cst_90 : f32 to vector<16x128xf32>
    %223 = arith.maximumf %221, %222 : vector<16x128xf32>
    %224 = arith.mulf %223, %223 : vector<16x128xf32>
    %225 = arith.mulf %223, %224 : vector<16x128xf32>
    %cst_91 = arith.constant 4.000000e+00 : f32
    %226 = vector.broadcast %cst_91 : f32 to vector<16x128xf32>
    %227 = arith.mulf %226, %165 : vector<16x128xf32>
    %228 = arith.subf %145, %227 : vector<16x128xf32>
    %cst_92 = arith.constant 6.000000e+00 : f32
    %229 = vector.broadcast %cst_92 : f32 to vector<16x128xf32>
    %230 = arith.mulf %229, %185 : vector<16x128xf32>
    %231 = arith.addf %228, %230 : vector<16x128xf32>
    %cst_93 = arith.constant 4.000000e+00 : f32
    %232 = vector.broadcast %cst_93 : f32 to vector<16x128xf32>
    %233 = arith.mulf %232, %205 : vector<16x128xf32>
    %234 = arith.subf %231, %233 : vector<16x128xf32>
    %235 = arith.addf %234, %225 : vector<16x128xf32>
    %cst_94 = arith.constant 0.166666672 : f32
    %236 = vector.broadcast %cst_94 : f32 to vector<16x128xf32>
    %237 = arith.mulf %235, %236 : vector<16x128xf32>
    %238 = arith.truncf %237 : vector<16x128xf32> to vector<16x128xbf16>
    %c112 = arith.constant 112 : index
    %c0_95 = arith.constant 0 : index
    %239 = vector.load %arg14[%c112, %c0_95] : memref<144x128xbf16, #tpu.memory_space<vmem>>, vector<16x128xbf16>
    tpu.vector_store %arg14[%c112, %c0_95], %238 {strides = array<i32>} : memref<144x128xbf16, #tpu.memory_space<vmem>>, vector<16x128xbf16>,
    %cst_96 = arith.constant 1.100000e+01 : f32
    %240 = vector.broadcast %cst_96 : f32 to vector<16x128xf32>
    %241 = arith.subf %75, %240 : vector<16x128xf32>
    %cst_97 = arith.constant 0.000000e+00 : f32
    %242 = vector.broadcast %cst_97 : f32 to vector<16x128xf32>
    %243 = arith.maximumf %241, %242 : vector<16x128xf32>
    %244 = arith.mulf %243, %243 : vector<16x128xf32>
    %245 = arith.mulf %243, %244 : vector<16x128xf32>
    %cst_98 = arith.constant 4.000000e+00 : f32
    %246 = vector.broadcast %cst_98 : f32 to vector<16x128xf32>
    %247 = arith.mulf %246, %185 : vector<16x128xf32>
    %248 = arith.subf %165, %247 : vector<16x128xf32>
    %cst_99 = arith.constant 6.000000e+00 : f32
    %249 = vector.broadcast %cst_99 : f32 to vector<16x128xf32>
    %250 = arith.mulf %249, %205 : vector<16x128xf32>
    %251 = arith.addf %248, %250 : vector<16x128xf32>
    %cst_100 = arith.constant 4.000000e+00 : f32
    %252 = vector.broadcast %cst_100 : f32 to vector<16x128xf32>
    %253 = arith.mulf %252, %225 : vector<16x128xf32>
    %254 = arith.subf %251, %253 : vector<16x128xf32>
    %255 = arith.addf %254, %245 : vector<16x128xf32>
    %cst_101 = arith.constant 0.166666672 : f32
    %256 = vector.broadcast %cst_101 : f32 to vector<16x128xf32>
    %257 = arith.mulf %255, %256 : vector<16x128xf32>
    %258 = arith.truncf %257 : vector<16x128xf32> to vector<16x128xbf16>
    %c128 = arith.constant 128 : index
    %c0_102 = arith.constant 0 : index
    %259 = vector.load %arg14[%c128, %c0_102] : memref<144x128xbf16, #tpu.memory_space<vmem>>, vector<16x128xbf16>
    tpu.vector_store %arg14[%c128, %c0_102], %258 {strides = array<i32>} : memref<144x128xbf16, #tpu.memory_space<vmem>>, vector<16x128xbf16>,
    %c0_103 = arith.constant 0 : index
    %c0_104 = arith.constant 0 : index
    %260 = vector.load %arg11[%c0_103, %c0_104] : memref<32x144xbf16, #tpu.memory_space<vmem>>, vector<32x144xbf16>
    %c0_105 = arith.constant 0 : index
    %c0_106 = arith.constant 0 : index
    %261 = vector.load %arg14[%c0_105, %c0_106] : memref<144x128xbf16, #tpu.memory_space<vmem>>, vector<144x128xbf16>
    %cst_107 = arith.constant dense<0.000000e+00> : vector<32x128xf32>
    %262 = tpu.matmul %260, %261, %cst_107 {dimension_numbers = #tpu.dot_dimension_numbers<[1], [0], [0], [1], [0, 0, 1, 1], [], []>} : vector<32x144xbf16>, vector<144x128xbf16>, vector<32x128xf32> -> vector<32x128xf32>
    %263 = arith.negf %262 : vector<32x128xf32>
    %264 = math.exp %263 : vector<32x128xf32>
    %cst_108 = arith.constant 1.000000e+00 : f32
    %265 = vector.broadcast %cst_108 : f32 to vector<32x128xf32>
    %266 = arith.addf %265, %264 : vector<32x128xf32>
    %267 = arith.divf %265, %266 : vector<32x128xf32>
    %268 = arith.mulf %262, %267 : vector<32x128xf32>
    %269 = arith.truncf %268 : vector<32x128xf32> to vector<32x128xbf16>
    %c0_109 = arith.constant 0 : index
    %c0_110 = arith.constant 0 : index
    %270 = vector.load %arg15[%c0_109, %c0_110] : memref<288x128xbf16, #tpu.memory_space<vmem>>, vector<32x128xbf16>
    tpu.vector_store %arg15[%c0_109, %c0_110], %269 {strides = array<i32>} : memref<288x128xbf16, #tpu.memory_space<vmem>>, vector<32x128xbf16>,
    %cst_111 = arith.constant -2.200000e+00 : f32
    %271 = vector.broadcast %cst_111 : f32 to vector<32x128xf32>
    %272 = arith.subf %262, %271 : vector<32x128xf32>
    %cst_112 = arith.constant 2.500000e+00 : f32
    %273 = vector.broadcast %cst_112 : f32 to vector<32x128xf32>
    %274 = arith.mulf %272, %273 : vector<32x128xf32>
    %cst_113 = arith.constant 0.000000e+00 : f32
    %cst_114 = arith.constant 1.100000e+01 : f32
    %275 = vector.broadcast %cst_113 : f32 to vector<32x128xf32>
    %276 = arith.maximumf %275, %274 : vector<32x128xf32>
    %277 = vector.broadcast %cst_114 : f32 to vector<32x128xf32>
    %278 = arith.minimumf %277, %276 : vector<32x128xf32>
    %cst_115 = arith.constant 0.000000e+00 : f32
    %279 = vector.broadcast %cst_115 : f32 to vector<32x128xf32>
    %280 = arith.subf %278, %279 : vector<32x128xf32>
    %cst_116 = arith.constant 0.000000e+00 : f32
    %281 = vector.broadcast %cst_116 : f32 to vector<32x128xf32>
    %282 = arith.maximumf %280, %281 : vector<32x128xf32>
    %283 = arith.mulf %282, %282 : vector<32x128xf32>
    %284 = arith.mulf %282, %283 : vector<32x128xf32>
    %cst_117 = arith.constant 1.000000e+00 : f32
    %285 = vector.broadcast %cst_117 : f32 to vector<32x128xf32>
    %286 = arith.subf %278, %285 : vector<32x128xf32>
    %cst_118 = arith.constant 0.000000e+00 : f32
    %287 = vector.broadcast %cst_118 : f32 to vector<32x128xf32>
    %288 = arith.maximumf %286, %287 : vector<32x128xf32>
    %289 = arith.mulf %288, %288 : vector<32x128xf32>
    %290 = arith.mulf %288, %289 : vector<32x128xf32>
    %cst_119 = arith.constant 2.000000e+00 : f32
    %291 = vector.broadcast %cst_119 : f32 to vector<32x128xf32>
    %292 = arith.subf %278, %291 : vector<32x128xf32>
    %cst_120 = arith.constant 0.000000e+00 : f32
    %293 = vector.broadcast %cst_120 : f32 to vector<32x128xf32>
    %294 = arith.maximumf %292, %293 : vector<32x128xf32>
    %295 = arith.mulf %294, %294 : vector<32x128xf32>
    %296 = arith.mulf %294, %295 : vector<32x128xf32>
    %cst_121 = arith.constant 3.000000e+00 : f32
    %297 = vector.broadcast %cst_121 : f32 to vector<32x128xf32>
    %298 = arith.subf %278, %297 : vector<32x128xf32>
    %cst_122 = arith.constant 0.000000e+00 : f32
    %299 = vector.broadcast %cst_122 : f32 to vector<32x128xf32>
    %300 = arith.maximumf %298, %299 : vector<32x128xf32>
    %301 = arith.mulf %300, %300 : vector<32x128xf32>
    %302 = arith.mulf %300, %301 : vector<32x128xf32>
    %cst_123 = arith.constant 4.000000e+00 : f32
    %303 = vector.broadcast %cst_123 : f32 to vector<32x128xf32>
    %304 = arith.subf %278, %303 : vector<32x128xf32>
    %cst_124 = arith.constant 0.000000e+00 : f32
    %305 = vector.broadcast %cst_124 : f32 to vector<32x128xf32>
    %306 = arith.maximumf %304, %305 : vector<32x128xf32>
    %307 = arith.mulf %306, %306 : vector<32x128xf32>
    %308 = arith.mulf %306, %307 : vector<32x128xf32>
    %cst_125 = arith.constant 4.000000e+00 : f32
    %309 = vector.broadcast %cst_125 : f32 to vector<32x128xf32>
    %310 = arith.mulf %309, %290 : vector<32x128xf32>
    %311 = arith.subf %284, %310 : vector<32x128xf32>
    %cst_126 = arith.constant 6.000000e+00 : f32
    %312 = vector.broadcast %cst_126 : f32 to vector<32x128xf32>
    %313 = arith.mulf %312, %296 : vector<32x128xf32>
    %314 = arith.addf %311, %313 : vector<32x128xf32>
    %cst_127 = arith.constant 4.000000e+00 : f32
    %315 = vector.broadcast %cst_127 : f32 to vector<32x128xf32>
    %316 = arith.mulf %315, %302 : vector<32x128xf32>
    %317 = arith.subf %314, %316 : vector<32x128xf32>
    %318 = arith.addf %317, %308 : vector<32x128xf32>
    %cst_128 = arith.constant 0.166666672 : f32
    %319 = vector.broadcast %cst_128 : f32 to vector<32x128xf32>
    %320 = arith.mulf %318, %319 : vector<32x128xf32>
    %321 = arith.truncf %320 : vector<32x128xf32> to vector<32x128xbf16>
    %c32_129 = arith.constant 32 : index
    %c0_130 = arith.constant 0 : index
    %322 = vector.load %arg15[%c32_129, %c0_130] : memref<288x128xbf16, #tpu.memory_space<vmem>>, vector<32x128xbf16>
    tpu.vector_store %arg15[%c32_129, %c0_130], %321 {strides = array<i32>} : memref<288x128xbf16, #tpu.memory_space<vmem>>, vector<32x128xbf16>,
    %cst_131 = arith.constant 5.000000e+00 : f32
    %323 = vector.broadcast %cst_131 : f32 to vector<32x128xf32>
    %324 = arith.subf %278, %323 : vector<32x128xf32>
    %cst_132 = arith.constant 0.000000e+00 : f32
    %325 = vector.broadcast %cst_132 : f32 to vector<32x128xf32>
    %326 = arith.maximumf %324, %325 : vector<32x128xf32>
    %327 = arith.mulf %326, %326 : vector<32x128xf32>
    %328 = arith.mulf %326, %327 : vector<32x128xf32>
    %cst_133 = arith.constant 4.000000e+00 : f32
    %329 = vector.broadcast %cst_133 : f32 to vector<32x128xf32>
    %330 = arith.mulf %329, %296 : vector<32x128xf32>
    %331 = arith.subf %290, %330 : vector<32x128xf32>
    %cst_134 = arith.constant 6.000000e+00 : f32
    %332 = vector.broadcast %cst_134 : f32 to vector<32x128xf32>
    %333 = arith.mulf %332, %302 : vector<32x128xf32>
    %334 = arith.addf %331, %333 : vector<32x128xf32>
    %cst_135 = arith.constant 4.000000e+00 : f32
    %335 = vector.broadcast %cst_135 : f32 to vector<32x128xf32>
    %336 = arith.mulf %335, %308 : vector<32x128xf32>
    %337 = arith.subf %334, %336 : vector<32x128xf32>
    %338 = arith.addf %337, %328 : vector<32x128xf32>
    %cst_136 = arith.constant 0.166666672 : f32
    %339 = vector.broadcast %cst_136 : f32 to vector<32x128xf32>
    %340 = arith.mulf %338, %339 : vector<32x128xf32>
    %341 = arith.truncf %340 : vector<32x128xf32> to vector<32x128xbf16>
    %c64_137 = arith.constant 64 : index
    %c0_138 = arith.constant 0 : index
    %342 = vector.load %arg15[%c64_137, %c0_138] : memref<288x128xbf16, #tpu.memory_space<vmem>>, vector<32x128xbf16>
    tpu.vector_store %arg15[%c64_137, %c0_138], %341 {strides = array<i32>} : memref<288x128xbf16, #tpu.memory_space<vmem>>, vector<32x128xbf16>,
    %cst_139 = arith.constant 6.000000e+00 : f32
    %343 = vector.broadcast %cst_139 : f32 to vector<32x128xf32>
    %344 = arith.subf %278, %343 : vector<32x128xf32>
    %cst_140 = arith.constant 0.000000e+00 : f32
    %345 = vector.broadcast %cst_140 : f32 to vector<32x128xf32>
    %346 = arith.maximumf %344, %345 : vector<32x128xf32>
    %347 = arith.mulf %346, %346 : vector<32x128xf32>
    %348 = arith.mulf %346, %347 : vector<32x128xf32>
    %cst_141 = arith.constant 4.000000e+00 : f32
    %349 = vector.broadcast %cst_141 : f32 to vector<32x128xf32>
    %350 = arith.mulf %349, %302 : vector<32x128xf32>
    %351 = arith.subf %296, %350 : vector<32x128xf32>
    %cst_142 = arith.constant 6.000000e+00 : f32
    %352 = vector.broadcast %cst_142 : f32 to vector<32x128xf32>
    %353 = arith.mulf %352, %308 : vector<32x128xf32>
    %354 = arith.addf %351, %353 : vector<32x128xf32>
    %cst_143 = arith.constant 4.000000e+00 : f32
    %355 = vector.broadcast %cst_143 : f32 to vector<32x128xf32>
    %356 = arith.mulf %355, %328 : vector<32x128xf32>
    %357 = arith.subf %354, %356 : vector<32x128xf32>
    %358 = arith.addf %357, %348 : vector<32x128xf32>
    %cst_144 = arith.constant 0.166666672 : f32
    %359 = vector.broadcast %cst_144 : f32 to vector<32x128xf32>
    %360 = arith.mulf %358, %359 : vector<32x128xf32>
    %361 = arith.truncf %360 : vector<32x128xf32> to vector<32x128xbf16>
    %c96_145 = arith.constant 96 : index
    %c0_146 = arith.constant 0 : index
    %362 = vector.load %arg15[%c96_145, %c0_146] : memref<288x128xbf16, #tpu.memory_space<vmem>>, vector<32x128xbf16>
    tpu.vector_store %arg15[%c96_145, %c0_146], %361 {strides = array<i32>} : memref<288x128xbf16, #tpu.memory_space<vmem>>, vector<32x128xbf16>,
    %cst_147 = arith.constant 7.000000e+00 : f32
    %363 = vector.broadcast %cst_147 : f32 to vector<32x128xf32>
    %364 = arith.subf %278, %363 : vector<32x128xf32>
    %cst_148 = arith.constant 0.000000e+00 : f32
    %365 = vector.broadcast %cst_148 : f32 to vector<32x128xf32>
    %366 = arith.maximumf %364, %365 : vector<32x128xf32>
    %367 = arith.mulf %366, %366 : vector<32x128xf32>
    %368 = arith.mulf %366, %367 : vector<32x128xf32>
    %cst_149 = arith.constant 4.000000e+00 : f32
    %369 = vector.broadcast %cst_149 : f32 to vector<32x128xf32>
    %370 = arith.mulf %369, %308 : vector<32x128xf32>
    %371 = arith.subf %302, %370 : vector<32x128xf32>
    %cst_150 = arith.constant 6.000000e+00 : f32
    %372 = vector.broadcast %cst_150 : f32 to vector<32x128xf32>
    %373 = arith.mulf %372, %328 : vector<32x128xf32>
    %374 = arith.addf %371, %373 : vector<32x128xf32>
    %cst_151 = arith.constant 4.000000e+00 : f32
    %375 = vector.broadcast %cst_151 : f32 to vector<32x128xf32>
    %376 = arith.mulf %375, %348 : vector<32x128xf32>
    %377 = arith.subf %374, %376 : vector<32x128xf32>
    %378 = arith.addf %377, %368 : vector<32x128xf32>
    %cst_152 = arith.constant 0.166666672 : f32
    %379 = vector.broadcast %cst_152 : f32 to vector<32x128xf32>
    %380 = arith.mulf %378, %379 : vector<32x128xf32>
    %381 = arith.truncf %380 : vector<32x128xf32> to vector<32x128xbf16>
    %c128_153 = arith.constant 128 : index
    %c0_154 = arith.constant 0 : index
    %382 = vector.load %arg15[%c128_153, %c0_154] : memref<288x128xbf16, #tpu.memory_space<vmem>>, vector<32x128xbf16>
    tpu.vector_store %arg15[%c128_153, %c0_154], %381 {strides = array<i32>} : memref<288x128xbf16, #tpu.memory_space<vmem>>, vector<32x128xbf16>,
    %cst_155 = arith.constant 8.000000e+00 : f32
    %383 = vector.broadcast %cst_155 : f32 to vector<32x128xf32>
    %384 = arith.subf %278, %383 : vector<32x128xf32>
    %cst_156 = arith.constant 0.000000e+00 : f32
    %385 = vector.broadcast %cst_156 : f32 to vector<32x128xf32>
    %386 = arith.maximumf %384, %385 : vector<32x128xf32>
    %387 = arith.mulf %386, %386 : vector<32x128xf32>
    %388 = arith.mulf %386, %387 : vector<32x128xf32>
    %cst_157 = arith.constant 4.000000e+00 : f32
    %389 = vector.broadcast %cst_157 : f32 to vector<32x128xf32>
    %390 = arith.mulf %389, %328 : vector<32x128xf32>
    %391 = arith.subf %308, %390 : vector<32x128xf32>
    %cst_158 = arith.constant 6.000000e+00 : f32
    %392 = vector.broadcast %cst_158 : f32 to vector<32x128xf32>
    %393 = arith.mulf %392, %348 : vector<32x128xf32>
    %394 = arith.addf %391, %393 : vector<32x128xf32>
    %cst_159 = arith.constant 4.000000e+00 : f32
    %395 = vector.broadcast %cst_159 : f32 to vector<32x128xf32>
    %396 = arith.mulf %395, %368 : vector<32x128xf32>
    %397 = arith.subf %394, %396 : vector<32x128xf32>
    %398 = arith.addf %397, %388 : vector<32x128xf32>
    %cst_160 = arith.constant 0.166666672 : f32
    %399 = vector.broadcast %cst_160 : f32 to vector<32x128xf32>
    %400 = arith.mulf %398, %399 : vector<32x128xf32>
    %401 = arith.truncf %400 : vector<32x128xf32> to vector<32x128xbf16>
    %c160 = arith.constant 160 : index
    %c0_161 = arith.constant 0 : index
    %402 = vector.load %arg15[%c160, %c0_161] : memref<288x128xbf16, #tpu.memory_space<vmem>>, vector<32x128xbf16>
    tpu.vector_store %arg15[%c160, %c0_161], %401 {strides = array<i32>} : memref<288x128xbf16, #tpu.memory_space<vmem>>, vector<32x128xbf16>,
    %cst_162 = arith.constant 9.000000e+00 : f32
    %403 = vector.broadcast %cst_162 : f32 to vector<32x128xf32>
    %404 = arith.subf %278, %403 : vector<32x128xf32>
    %cst_163 = arith.constant 0.000000e+00 : f32
    %405 = vector.broadcast %cst_163 : f32 to vector<32x128xf32>
    %406 = arith.maximumf %404, %405 : vector<32x128xf32>
    %407 = arith.mulf %406, %406 : vector<32x128xf32>
    %408 = arith.mulf %406, %407 : vector<32x128xf32>
    %cst_164 = arith.constant 4.000000e+00 : f32
    %409 = vector.broadcast %cst_164 : f32 to vector<32x128xf32>
    %410 = arith.mulf %409, %348 : vector<32x128xf32>
    %411 = arith.subf %328, %410 : vector<32x128xf32>
    %cst_165 = arith.constant 6.000000e+00 : f32
    %412 = vector.broadcast %cst_165 : f32 to vector<32x128xf32>
    %413 = arith.mulf %412, %368 : vector<32x128xf32>
    %414 = arith.addf %411, %413 : vector<32x128xf32>
    %cst_166 = arith.constant 4.000000e+00 : f32
    %415 = vector.broadcast %cst_166 : f32 to vector<32x128xf32>
    %416 = arith.mulf %415, %388 : vector<32x128xf32>
    %417 = arith.subf %414, %416 : vector<32x128xf32>
    %418 = arith.addf %417, %408 : vector<32x128xf32>
    %cst_167 = arith.constant 0.166666672 : f32
    %419 = vector.broadcast %cst_167 : f32 to vector<32x128xf32>
    %420 = arith.mulf %418, %419 : vector<32x128xf32>
    %421 = arith.truncf %420 : vector<32x128xf32> to vector<32x128xbf16>
    %c192 = arith.constant 192 : index
    %c0_168 = arith.constant 0 : index
    %422 = vector.load %arg15[%c192, %c0_168] : memref<288x128xbf16, #tpu.memory_space<vmem>>, vector<32x128xbf16>
    tpu.vector_store %arg15[%c192, %c0_168], %421 {strides = array<i32>} : memref<288x128xbf16, #tpu.memory_space<vmem>>, vector<32x128xbf16>,
    %cst_169 = arith.constant 1.000000e+01 : f32
    %423 = vector.broadcast %cst_169 : f32 to vector<32x128xf32>
    %424 = arith.subf %278, %423 : vector<32x128xf32>
    %cst_170 = arith.constant 0.000000e+00 : f32
    %425 = vector.broadcast %cst_170 : f32 to vector<32x128xf32>
    %426 = arith.maximumf %424, %425 : vector<32x128xf32>
    %427 = arith.mulf %426, %426 : vector<32x128xf32>
    %428 = arith.mulf %426, %427 : vector<32x128xf32>
    %cst_171 = arith.constant 4.000000e+00 : f32
    %429 = vector.broadcast %cst_171 : f32 to vector<32x128xf32>
    %430 = arith.mulf %429, %368 : vector<32x128xf32>
    %431 = arith.subf %348, %430 : vector<32x128xf32>
    %cst_172 = arith.constant 6.000000e+00 : f32
    %432 = vector.broadcast %cst_172 : f32 to vector<32x128xf32>
    %433 = arith.mulf %432, %388 : vector<32x128xf32>
    %434 = arith.addf %431, %433 : vector<32x128xf32>
    %cst_173 = arith.constant 4.000000e+00 : f32
    %435 = vector.broadcast %cst_173 : f32 to vector<32x128xf32>
    %436 = arith.mulf %435, %408 : vector<32x128xf32>
    %437 = arith.subf %434, %436 : vector<32x128xf32>
    %438 = arith.addf %437, %428 : vector<32x128xf32>
    %cst_174 = arith.constant 0.166666672 : f32
    %439 = vector.broadcast %cst_174 : f32 to vector<32x128xf32>
    %440 = arith.mulf %438, %439 : vector<32x128xf32>
    %441 = arith.truncf %440 : vector<32x128xf32> to vector<32x128xbf16>
    %c224 = arith.constant 224 : index
    %c0_175 = arith.constant 0 : index
    %442 = vector.load %arg15[%c224, %c0_175] : memref<288x128xbf16, #tpu.memory_space<vmem>>, vector<32x128xbf16>
    tpu.vector_store %arg15[%c224, %c0_175], %441 {strides = array<i32>} : memref<288x128xbf16, #tpu.memory_space<vmem>>, vector<32x128xbf16>,
    %cst_176 = arith.constant 1.100000e+01 : f32
    %443 = vector.broadcast %cst_176 : f32 to vector<32x128xf32>
    %444 = arith.subf %278, %443 : vector<32x128xf32>
    %cst_177 = arith.constant 0.000000e+00 : f32
    %445 = vector.broadcast %cst_177 : f32 to vector<32x128xf32>
    %446 = arith.maximumf %444, %445 : vector<32x128xf32>
    %447 = arith.mulf %446, %446 : vector<32x128xf32>
    %448 = arith.mulf %446, %447 : vector<32x128xf32>
    %cst_178 = arith.constant 4.000000e+00 : f32
    %449 = vector.broadcast %cst_178 : f32 to vector<32x128xf32>
    %450 = arith.mulf %449, %388 : vector<32x128xf32>
    %451 = arith.subf %368, %450 : vector<32x128xf32>
    %cst_179 = arith.constant 6.000000e+00 : f32
    %452 = vector.broadcast %cst_179 : f32 to vector<32x128xf32>
    %453 = arith.mulf %452, %408 : vector<32x128xf32>
    %454 = arith.addf %451, %453 : vector<32x128xf32>
    %cst_180 = arith.constant 4.000000e+00 : f32
    %455 = vector.broadcast %cst_180 : f32 to vector<32x128xf32>
    %456 = arith.mulf %455, %428 : vector<32x128xf32>
    %457 = arith.subf %454, %456 : vector<32x128xf32>
    %458 = arith.addf %457, %448 : vector<32x128xf32>
    %cst_181 = arith.constant 0.166666672 : f32
    %459 = vector.broadcast %cst_181 : f32 to vector<32x128xf32>
    %460 = arith.mulf %458, %459 : vector<32x128xf32>
    %461 = arith.truncf %460 : vector<32x128xf32> to vector<32x128xbf16>
    %c256 = arith.constant 256 : index
    %c0_182 = arith.constant 0 : index
    %462 = vector.load %arg15[%c256, %c0_182] : memref<288x128xbf16, #tpu.memory_space<vmem>>, vector<32x128xbf16>
    tpu.vector_store %arg15[%c256, %c0_182], %461 {strides = array<i32>} : memref<288x128xbf16, #tpu.memory_space<vmem>>, vector<32x128xbf16>,
    %c0_183 = arith.constant 0 : index
    %c0_184 = arith.constant 0 : index
    %463 = vector.load %arg12[%c0_183, %c0_184] : memref<16x288xbf16, #tpu.memory_space<vmem>>, vector<16x288xbf16>
    %c0_185 = arith.constant 0 : index
    %c0_186 = arith.constant 0 : index
    %464 = vector.load %arg15[%c0_185, %c0_186] : memref<288x128xbf16, #tpu.memory_space<vmem>>, vector<288x128xbf16>
    %cst_187 = arith.constant dense<0.000000e+00> : vector<16x128xf32>
    %465 = tpu.matmul %463, %464, %cst_187 {dimension_numbers = #tpu.dot_dimension_numbers<[1], [0], [0], [1], [0, 0, 1, 1], [], []>} : vector<16x288xbf16>, vector<288x128xbf16>, vector<16x128xf32> -> vector<16x128xf32>
    %466 = arith.addf %1, %465 : vector<16x128xf32>
    %c0_188 = arith.constant 0 : index
    %c0_189 = arith.constant 0 : index
    %c0_190 = arith.constant 0 : index
    %467 = vector.load %arg13[%c0_188, %c0_189, %c0_190] : memref<1x16x128xf32, #tpu.memory_space<vmem>>, vector<1x16x128xf32>
    %468 = vector.shape_cast %467 : vector<1x16x128xf32> to vector<16x128xf32>
    %469 = vector.shape_cast %466 : vector<16x128xf32> to vector<1x16x128xf32>
    tpu.vector_store %arg13[%c0_188, %c0_189, %c0_190], %469 {strides = array<i32>} : memref<1x16x128xf32, #tpu.memory_space<vmem>>, vector<1x16x128xf32>,
    return
  }
  func.func @transform_0(%arg0: i32) -> (i32, i32, i32) {
    %c0_i32 = arith.constant 0 : i32
    %c0_i32_0 = arith.constant 0 : i32
    %c0_i32_1 = arith.constant 0 : i32
    return %arg0, %c0_i32, %c0_i32_0 : i32, i32, i32
  }
  func.func @transform_1(%arg0: i32) -> (i32, i32) {
    %c0_i32 = arith.constant 0 : i32
    %c0_i32_0 = arith.constant 0 : i32
    %c0_i32_1 = arith.constant 0 : i32
    return %c0_i32, %c0_i32_0 : i32, i32
  }
  func.func @transform_2(%arg0: i32) -> (i32, i32) {
    %c0_i32 = arith.constant 0 : i32
    %c0_i32_0 = arith.constant 0 : i32
    %c0_i32_1 = arith.constant 0 : i32
    return %c0_i32, %c0_i32_0 : i32, i32
  }
  func.func @transform_3(%arg0: i32) -> (i32, i32) {
    %c0_i32 = arith.constant 0 : i32
    %c0_i32_0 = arith.constant 0 : i32
    %c0_i32_1 = arith.constant 0 : i32
    return %c0_i32, %c0_i32_0 : i32, i32
  }
  func.func @transform_4(%arg0: i32) -> (i32, i32) {
    %c0_i32 = arith.constant 0 : i32
    %c0_i32_0 = arith.constant 0 : i32
    %c0_i32_1 = arith.constant 0 : i32
    return %c0_i32, %c0_i32_0 : i32, i32
  }
  func.func @transform_5(%arg0: i32) -> (i32, i32) {
    %c0_i32 = arith.constant 0 : i32
    %c0_i32_0 = arith.constant 0 : i32
    %c0_i32_1 = arith.constant 0 : i32
    return %c0_i32, %c0_i32_0 : i32, i32
  }
  func.func @transform_6(%arg0: i32) -> (i32, i32) {
    %c0_i32 = arith.constant 0 : i32
    %c0_i32_0 = arith.constant 0 : i32
    %c0_i32_1 = arith.constant 0 : i32
    return %c0_i32, %c0_i32_0 : i32, i32
  }
  func.func @transform_7(%arg0: i32) -> (i32, i32) {
    %c0_i32 = arith.constant 0 : i32
    %c0_i32_0 = arith.constant 0 : i32
    %c0_i32_1 = arith.constant 0 : i32
    return %c0_i32, %c0_i32_0 : i32, i32
  }
  func.func @transform_8(%arg0: i32) -> (i32, i32) {
    %c0_i32 = arith.constant 0 : i32
    %c0_i32_0 = arith.constant 0 : i32
    %c0_i32_1 = arith.constant 0 : i32
    return %c0_i32, %c0_i32_0 : i32, i32
  }
  func.func @transform_9(%arg0: i32) -> (i32, i32) {
    %c0_i32 = arith.constant 0 : i32
    %c0_i32_0 = arith.constant 0 : i32
    %c0_i32_1 = arith.constant 0 : i32
    return %c0_i32, %c0_i32_0 : i32, i32
  }
  func.func @transform_10(%arg0: i32) -> (i32, i32) {
    %c0_i32 = arith.constant 0 : i32
    %c0_i32_0 = arith.constant 0 : i32
    %c0_i32_1 = arith.constant 0 : i32
    return %c0_i32, %c0_i32_0 : i32, i32
  }
  func.func @transform_11(%arg0: i32) -> (i32, i32) {
    %c0_i32 = arith.constant 0 : i32
    %c0_i32_0 = arith.constant 0 : i32
    %c0_i32_1 = arith.constant 0 : i32
    return %c0_i32, %c0_i32_0 : i32, i32
  }
  func.func @transform_12(%arg0: i32) -> (i32, i32, i32) {
    %c0_i32 = arith.constant 0 : i32
    %c0_i32_0 = arith.constant 0 : i32
    %c0_i32_1 = arith.constant 0 : i32
    return %arg0, %c0_i32, %c0_i32_0 : i32, i32, i32
  }
}

</mosaic_0001>

<llo_original>
// kernel: tpu_custom_call.1
$region0: #{tpu_custom_call.1}
  #allocation0 [shape = 'u32[]', space=smem, size = 0x4, offset = 0x4, fixed_abs, tag = 'smem constant byte address 0x4 - core index']
  #allocation1 [shape = 'u32[144,128]{1,0:T(1,128)}', space=vmem, size = 0x12000, scoped, tag = 'internal scratch']
  #allocation2 [shape = 'bf16[144,128]{1,0:T(8,128)(2,1)}', space=vmem, size = 0x9000, scoped, tag = 'scratch operand']
  #allocation3 [shape = 'bf16[288,128]{1,0:T(8,128)(2,1)}', space=vmem, size = 0x12000, scoped, tag = 'scratch operand']
  %s0 = inlined_call_operand.hbm [shape: f32[1,16,128], index: 0, kind: input, shape index: {}]
  %s1 = inlined_call_operand.vmem [shape: f32[16,1], index: 1, kind: input, shape index: {}]
  %s2 = inlined_call_operand.vmem [shape: f32[16,1], index: 2, kind: input, shape index: {}]
  %s3 = inlined_call_operand.vmem [shape: f32[16,1], index: 3, kind: input, shape index: {}]
  %s4 = inlined_call_operand.vmem [shape: f32[16,1], index: 4, kind: input, shape index: {}]
  %s5 = inlined_call_operand.vmem [shape: bf16[128,160], index: 5, kind: input, shape index: {}]
  %s6 = inlined_call_operand.vmem [shape: bf16[160,128], index: 6, kind: input, shape index: {}]
  %s7 = inlined_call_operand.vmem [shape: bf16[160,128], index: 7, kind: input, shape index: {}]
  %s8 = inlined_call_operand.vmem [shape: f32[16,160], index: 8, kind: input, shape index: {}]
  %s9 = inlined_call_operand.vmem [shape: f32[16,160], index: 9, kind: input, shape index: {}]
  %s10 = inlined_call_operand.vmem [shape: bf16[32,144], index: 10, kind: input, shape index: {}]
  %s11 = inlined_call_operand.vmem [shape: bf16[16,288], index: 11, kind: input, shape index: {}]
  %s12 = inlined_call_operand.hbm [shape: f32[1,16,128], index: 12, kind: output, shape index: {}]
  %s13 = sld [smem:[#allocation0]]
  $region62: #{tpu_custom_call.1} parent=0
    _
  %s15 = ssub.s32 1, %s13
  %s16 = scalar_select 0, %s15, %s13
  $region1: #{tpu_custom_call.1} parent=0
    #allocation4 [shape = 'u8[8192]{0}', space=vmem, size = 0x2000, scoped, tag = 'input window, operand 0, single buffered']
    #allocation5 [shape = 's32[1]{0}', space=sflag, size = 0x4, scoped, tag = 'scoped memory for tpu_custom_call.1']
    #allocation6 [shape = 's32[1]{0}', space=sflag, size = 0x4, scoped, tag = 'scoped memory for tpu_custom_call.1']
    #allocation7 [shape = 'u8[8192]{0}', space=vmem, size = 0x2000, scoped, tag = 'output window, operand 0, single buffered']
    %17 = vsyncpa [#allocation5], 0
    %18 = vsyncpa [#allocation6], 0
    // Predicated region
    $region2: #{tpu_custom_call.1} parent=1 // pred_check
      _
    $region3: #{tpu_custom_call.1} parent=1 // pred_check_branch
      %20 = sbr.rel (0) target = $region5
    $region4: #{tpu_custom_call.1} parent=1 // pred_region
      %s22 = ssub.s32 256, 256
      %23 = vsyncadd [#allocation5], %s22
      %s24 = sshll.u32 [#allocation4], 4
      %s25 = int_to_ptr.vmem [resolvable:$true] %s24
      %30 = dma.hbm_to_vmem [thread:$0]  %s0, 256, %s25, [#allocation5], 128, 128, 8
    $region5: #{tpu_custom_call.1} parent=1 // pred_fallthru
      _
    // Predicated region
    $region6: #{tpu_custom_call.1} parent=1 // pred_check
      _
    $region7: #{tpu_custom_call.1} parent=1 // pred_check_branch
      %32 = sbr.rel (0) target = $region9
    $region8: #{tpu_custom_call.1} parent=1 // pred_region
      _
    $region9: #{tpu_custom_call.1} parent=1 // pred_fallthru
      _
    // Predicated region
    $region10: #{tpu_custom_call.1} parent=1 // pred_check
      _
    $region11: #{tpu_custom_call.1} parent=1 // pred_check_branch
      %34 = sbr.rel (0) target = $region13
    $region12: #{tpu_custom_call.1} parent=1 // pred_region
      _
    $region13: #{tpu_custom_call.1} parent=1 // pred_fallthru
      _
    // Predicated region
    $region14: #{tpu_custom_call.1} parent=1 // pred_check
      _
    $region15: #{tpu_custom_call.1} parent=1 // pred_check_branch
      %36 = sbr.rel (0) target = $region17
    $region16: #{tpu_custom_call.1} parent=1 // pred_region
      _
    $region17: #{tpu_custom_call.1} parent=1 // pred_fallthru
      _
    // Predicated region
    $region18: #{tpu_custom_call.1} parent=1 // pred_check
      _
    $region19: #{tpu_custom_call.1} parent=1 // pred_check_branch
      %38 = sbr.rel (0) target = $region21
    $region20: #{tpu_custom_call.1} parent=1 // pred_region
      _
    $region21: #{tpu_custom_call.1} parent=1 // pred_fallthru
      _
    // Predicated region
    $region22: #{tpu_custom_call.1} parent=1 // pred_check
      _
    $region23: #{tpu_custom_call.1} parent=1 // pred_check_branch
      %40 = sbr.rel (0) target = $region25
    $region24: #{tpu_custom_call.1} parent=1 // pred_region
      _
    $region25: #{tpu_custom_call.1} parent=1 // pred_fallthru
      _
    // Predicated region
    $region26: #{tpu_custom_call.1} parent=1 // pred_check
      _
    $region27: #{tpu_custom_call.1} parent=1 // pred_check_branch
      %42 = sbr.rel (0) target = $region29
    $region28: #{tpu_custom_call.1} parent=1 // pred_region
      _
    $region29: #{tpu_custom_call.1} parent=1 // pred_fallthru
      _
    // Predicated region
    $region30: #{tpu_custom_call.1} parent=1 // pred_check
      _
    $region31: #{tpu_custom_call.1} parent=1 // pred_check_branch
      %44 = sbr.rel (0) target = $region33
    $region32: #{tpu_custom_call.1} parent=1 // pred_region
      _
    $region33: #{tpu_custom_call.1} parent=1 // pred_fallthru
      _
    // Predicated region
    $region34: #{tpu_custom_call.1} parent=1 // pred_check
      _
    $region35: #{tpu_custom_call.1} parent=1 // pred_check_branch
      %46 = sbr.rel (0) target = $region37
    $region36: #{tpu_custom_call.1} parent=1 // pred_region
      _
    $region37: #{tpu_custom_call.1} parent=1 // pred_fallthru
      _
    // Predicated region
    $region38: #{tpu_custom_call.1} parent=1 // pred_check
      _
    $region39: #{tpu_custom_call.1} parent=1 // pred_check_branch
      %48 = sbr.rel (0) target = $region41
    $region40: #{tpu_custom_call.1} parent=1 // pred_region
      _
    $region41: #{tpu_custom_call.1} parent=1 // pred_fallthru
      _
    // Predicated region
    $region42: #{tpu_custom_call.1} parent=1 // pred_check
      _
    $region43: #{tpu_custom_call.1} parent=1 // pred_check_branch
      %50 = sbr.rel (0) target = $region45
    $region44: #{tpu_custom_call.1} parent=1 // pred_region
      _
    $region45: #{tpu_custom_call.1} parent=1 // pred_fallthru
      _
    // Predicated region
    $region46: #{tpu_custom_call.1} parent=1 // pred_check
      _
    $region47: #{tpu_custom_call.1} parent=1 // pred_check_branch
      %52 = sbr.rel (0) target = $region49
    $region48: #{tpu_custom_call.1} parent=1 // pred_region
      _
    $region49: #{tpu_custom_call.1} parent=1 // pred_fallthru
      _
    // Predicated region
    $region50: #{tpu_custom_call.1} parent=1 // pred_check
      _
    $region51: #{tpu_custom_call.1} parent=1 // pred_check_branch
      %54 = sbr.rel (0) target = $region53
    $region52: #{tpu_custom_call.1} parent=1 // pred_region
      %55 = dma.done [#allocation5], 256
    $region53: #{tpu_custom_call.1} parent=1 // pred_fallthru
      _
    %v57 = vld [vmem:[#allocation4] sm:$0xff]
    %v58 = vld [vmem:[#allocation4 + $0x8] sm:$0xff]
    %v59 = vld [vmem:[%s1] sm:$0xff]
    %v60 = vld [vmem:[%s1 + $0x8] sm:$0xff]
    %v61 = vld [vmem:[%s2] sm:$0xff]
    %v62 = vld [vmem:[%s2 + $0x8] sm:$0xff]
    %v63 = vadd.f32 %v57, %v58
    %v64 = vrot.slane %v63, 4
    %v65 = vadd.f32 %v63, %v64
    %v66 = vrot.slane %v65, 2
    %v67 = vadd.f32 %v65, %v66
    %v68 = vrot.slane %v67, 1
    %v69 = vadd.f32 %v67, %v68
    %v70 = vrcp.pop 16.0
    %v71 = vmul.f32 %v69, %v70
    %v72 = vsub.f32 %v57, %v71
    %v73 = vsub.f32 %v58, %v71
    %v74 = vmul.f32 %v72, %v72
    %v75 = vmul.f32 %v73, %v73
    %v76 = vadd.f32 %v74, %v75
    %v77 = vrot.slane %v76, 4
    %v78 = vadd.f32 %v76, %v77
    %v79 = vrot.slane %v78, 2
    %v80 = vadd.f32 %v78, %v79
    %v81 = vrot.slane %v80, 1
    %v82 = vadd.f32 %v80, %v81
    %v83 = vmul.f32 %v82, %v70
    %v84 = vadd.f32 %v83, 1e-05
    %v85 = vrsqrt.pop %v84
    %v86 = vmul.f32 %v72, %v85
    %v87 = vmul.f32 %v73, %v85
    %89 = vset.pattern.permute.xlu0 0
    %90 = vperm.xlu0 %89, %v59
    %v91 = vpop.permute.xlu0 %90
    %94 = vset.pattern.permute.xlu0 0
    %95 = vperm.xlu0 %94, %v60
    %v96 = vpop.permute.xlu0 %95
    %v98 = vmul.f32 %v86, %v91
    %v99 = vmul.f32 %v87, %v96
    %101 = vset.pattern.permute.xlu0 0
    %102 = vperm.xlu0 %101, %v61
    %v103 = vpop.permute.xlu0 %102
    %106 = vset.pattern.permute.xlu0 0
    %107 = vperm.xlu0 %106, %v62
    %v108 = vpop.permute.xlu0 %107
    %v110 = vadd.f32 %v98, %v103
    %v111 = vadd.f32 %v99, %v108
    %v112 = vpack.c.bf16 %v111, %v110
    %v113 = vld [vmem:[%s5] sm:$0xff]
    %v114 = vld [vmem:[%s5 + $0x8] sm:$0xff]
    %v115 = vld [vmem:[%s5 + $0x10] sm:$0xff]
    %v116 = vld [vmem:[%s5 + $0x18] sm:$0xff]
    %v117 = vld [vmem:[%s5 + $0x20] sm:$0xff]
    %v118 = vld [vmem:[%s5 + $0x28] sm:$0xff]
    %v119 = vld [vmem:[%s5 + $0x30] sm:$0xff]
    %v120 = vld [vmem:[%s5 + $0x38] sm:$0xff]
    %v121 = vld [vmem:[%s5 + $0x40] sm:$0xff]
    %v122 = vld [vmem:[%s5 + $0x48] sm:$0xff]
    %v123 = vld [vmem:[%s5 + $0x50] sm:$0xff]
    %v124 = vld [vmem:[%s5 + $0x58] sm:$0xff]
    %v125 = vld [vmem:[%s5 + $0x60] sm:$0xff]
    %v126 = vld [vmem:[%s5 + $0x68] sm:$0xff]
    %v127 = vld [vmem:[%s5 + $0x70] sm:$0xff]
    %v128 = vld [vmem:[%s5 + $0x78] sm:$0xff]
    %v145 = vunpack.c.l.b16 %v113
    %v146 = vunpack.c.h.b16 %v113
    %v147 = vunpack.c.l.b16 %v114
    %v148 = vunpack.c.h.b16 %v114
    %v149 = vunpack.c.l.b16 %v115
    %v150 = vunpack.c.h.b16 %v115
    %v151 = vunpack.c.l.b16 %v116
    %v152 = vunpack.c.h.b16 %v116
    %v153 = vunpack.c.l.b16 %v117
    %v154 = vunpack.c.h.b16 %v117
    %v155 = vunpack.c.l.b16 %v118
    %v156 = vunpack.c.h.b16 %v118
    %v157 = vunpack.c.l.b16 %v119
    %v158 = vunpack.c.h.b16 %v119
    %v159 = vunpack.c.l.b16 %v120
    %v160 = vunpack.c.h.b16 %v120
    %v161 = vunpack.c.l.b16 %v121
    %v162 = vunpack.c.h.b16 %v121
    %v163 = vunpack.c.l.b16 %v122
    %v164 = vunpack.c.h.b16 %v122
    %v165 = vunpack.c.l.b16 %v123
    %v166 = vunpack.c.h.b16 %v123
    %v167 = vunpack.c.l.b16 %v124
    %v168 = vunpack.c.h.b16 %v124
    %v169 = vunpack.c.l.b16 %v125
    %v170 = vunpack.c.h.b16 %v125
    %v171 = vunpack.c.l.b16 %v126
    %v172 = vunpack.c.h.b16 %v126
    %v173 = vunpack.c.l.b16 %v127
    %v174 = vunpack.c.h.b16 %v127
    %v175 = vunpack.c.l.b16 %v128
    %v176 = vunpack.c.h.b16 %v128
    %v177 = vpack.c.b16 %v147, %v145
    %v178 = vpack.c.b16 %v148, %v146
    %v179 = vpack.c.b16 %v151, %v149
    %v180 = vpack.c.b16 %v152, %v150
    %v181 = vpack.c.b16 %v155, %v153
    %v182 = vpack.c.b16 %v156, %v154
    %v183 = vpack.c.b16 %v159, %v157
    %v184 = vpack.c.b16 %v160, %v158
    %v185 = vpack.c.b16 %v163, %v161
    %v186 = vpack.c.b16 %v164, %v162
    %v187 = vpack.c.b16 %v167, %v165
    %v188 = vpack.c.b16 %v168, %v166
    %v189 = vpack.c.b16 %v171, %v169
    %v190 = vpack.c.b16 %v172, %v170
    %v191 = vpack.c.b16 %v175, %v173
    %v192 = vpack.c.b16 %v176, %v174
    %209 = vmatprep.subr.bf16.mxu0 %v192
    %210 = vmatpush1.bf16.msra.mxu0 %v191
    %211 = vmatprep.subr.bf16.mxu0 %v190
    %212 = vmatpush1.bf16.msra.mxu0 %v189
    %213 = vmatprep.subr.bf16.mxu0 %v188
    %214 = vmatpush1.bf16.msra.mxu0 %v187
    %215 = vmatprep.subr.bf16.mxu0 %v186
    %216 = vmatpush1.bf16.msra.mxu0 %v185
    %217 = vmatprep.subr.bf16.mxu0 %v184
    %218 = vmatpush1.bf16.msra.mxu0 %v183
    %219 = vmatprep.subr.bf16.mxu0 %v182
    %220 = vmatpush1.bf16.msra.mxu0 %v181
    %221 = vmatprep.subr.bf16.mxu0 %v180
    %222 = vmatpush1.bf16.msra.mxu0 %v179
    %223 = vmatprep.subr.bf16.mxu0 %v178
    %224 = vmatpush1.bf16.msra.mxu0 %v177
    %225 = vmatprep.subr.bf16.mxu0 0
    %226 = vmatpush2.bf16.msra.mxu0 0
    %227 = vmatprep.subr.bf16.mxu0 0
    %228 = vmatpush2.bf16.msra.mxu0 0
    %229 = vmatprep.subr.bf16.mxu0 0
    %230 = vmatpush2.bf16.msra.mxu0 0
    %231 = vmatprep.subr.bf16.mxu0 0
    %232 = vmatpush2.bf16.msra.mxu0 0
    %233 = vmatprep.subr.bf16.mxu0 0
    %234 = vmatpush2.bf16.msra.mxu0 0
    %235 = vmatprep.subr.bf16.mxu0 0
    %236 = vmatpush2.bf16.msra.mxu0 0
    %237 = vmatprep.subr.bf16.mxu0 0
    %238 = vmatpush2.bf16.msra.mxu0 0
    %239 = vmatprep.subr.bf16.mxu0 0
    %240 = vmatpush2.bf16.msra.mxu0 0
    %241 = vmatprep.mubr.bf16.mxu0 0
    %242 = vmatmul.mubr.bf16.gmra.mxu0 %v112
    %v243 = vpop.f32.mrf.mxu0
    %v244 = vadd.f32 0.0, %v243
    %v245 = vpop.f32.mrf.mxu0
    %v246 = vadd.f32 0.0, %v245
    %v247 = vpop.f32.mrf.mxu0
    %v248 = vadd.f32 0.0, %v247
    %v249 = vpop.f32.mrf.mxu0
    %v250 = vadd.f32 0.0, %v249
    %251 = vdwg.mxu0
    %v252 = vld [vmem:[%s8] sm:$0xff]
    %v253 = vld [vmem:[%s8 + $0x8] sm:$0xff]
    %v254 = vld [vmem:[%s8 + $0x10] sm:$0xff]
    %v255 = vld [vmem:[%s8 + $0x18] sm:$0xff]
    %v256 = vmul.f32 %v244, %v252
    %v257 = vmul.f32 %v246, %v253
    %v258 = vmul.f32 %v248, %v254
    %v259 = vmul.f32 %v250, %v255
    %v260 = vpack.c.bf16 %v258, %v256
    %v261 = vpack.c.bf16 %v259, %v257
    %v262 = vld [vmem:[%s9] sm:$0xff]
    %v263 = vld [vmem:[%s9 + $0x8] sm:$0xff]
    %v264 = vld [vmem:[%s9 + $0x10] sm:$0xff]
    %v265 = vld [vmem:[%s9 + $0x18] sm:$0xff]
    %v266 = vmul.f32 %v244, %v262
    %v267 = vmul.f32 %v246, %v263
    %v268 = vmul.f32 %v248, %v264
    %v269 = vmul.f32 %v250, %v265
    %v270 = vpack.c.bf16 %v268, %v266
    %v271 = vpack.c.bf16 %v269, %v267
    %v272 = vld [vmem:[%s6] sm:$0xf]
    %v273 = vld [vmem:[%s6 + $0x4] sm:$0xf]
    %v274 = vld [vmem:[%s6 + $0x8] sm:$0xf]
    %v275 = vld [vmem:[%s6 + $0xc] sm:$0xf]
    %v276 = vld [vmem:[%s6 + $0x10] sm:$0xf]
    %v277 = vld [vmem:[%s6 + $0x14] sm:$0xf]
    %v278 = vld [vmem:[%s6 + $0x18] sm:$0xf]
    %v279 = vld [vmem:[%s6 + $0x1c] sm:$0xf]
    %v280 = vld [vmem:[%s6 + $0x20] sm:$0xf]
    %v281 = vld [vmem:[%s6 + $0x24] sm:$0xf]
    %v282 = vld [vmem:[%s6 + $0x28] sm:$0xf]
    %v283 = vld [vmem:[%s6 + $0x2c] sm:$0xf]
    %v284 = vld [vmem:[%s6 + $0x30] sm:$0xf]
    %v285 = vld [vmem:[%s6 + $0x34] sm:$0xf]
    %v286 = vld [vmem:[%s6 + $0x38] sm:$0xf]
    %v287 = vld [vmem:[%s6 + $0x3c] sm:$0xf]
    %v288 = vld [vmem:[%s6 + $0x40] sm:$0xf]
    %v289 = vld [vmem:[%s6 + $0x44] sm:$0xf]
    %v290 = vld [vmem:[%s6 + $0x48] sm:$0xf]
    %v291 = vld [vmem:[%s6 + $0x4c] sm:$0xf]
    %v292 = vld [vmem:[%s7] sm:$0xf]
    %v293 = vld [vmem:[%s7 + $0x4] sm:$0xf]
    %v294 = vld [vmem:[%s7 + $0x8] sm:$0xf]
    %v295 = vld [vmem:[%s7 + $0xc] sm:$0xf]
    %v296 = vld [vmem:[%s7 + $0x10] sm:$0xf]
    %v297 = vld [vmem:[%s7 + $0x14] sm:$0xf]
    %v298 = vld [vmem:[%s7 + $0x18] sm:$0xf]
    %v299 = vld [vmem:[%s7 + $0x1c] sm:$0xf]
    %v300 = vld [vmem:[%s7 + $0x20] sm:$0xf]
    %v301 = vld [vmem:[%s7 + $0x24] sm:$0xf]
    %v302 = vld [vmem:[%s7 + $0x28] sm:$0xf]
    %v303 = vld [vmem:[%s7 + $0x2c] sm:$0xf]
    %v304 = vld [vmem:[%s7 + $0x30] sm:$0xf]
    %v305 = vld [vmem:[%s7 + $0x34] sm:$0xf]
    %v306 = vld [vmem:[%s7 + $0x38] sm:$0xf]
    %v307 = vld [vmem:[%s7 + $0x3c] sm:$0xf]
    %v308 = vld [vmem:[%s7 + $0x40] sm:$0xf]
    %v309 = vld [vmem:[%s7 + $0x44] sm:$0xf]
    %v310 = vld [vmem:[%s7 + $0x48] sm:$0xf]
    %v311 = vld [vmem:[%s7 + $0x4c] sm:$0xf]
    %v332 = vunpack.c.l.b16 %v292
    %v333 = vunpack.c.l.b16 %v293
    %v334 = vunpack.c.l.b16 %v294
    %v335 = vunpack.c.l.b16 %v295
    %v336 = vunpack.c.l.b16 %v296
    %v337 = vunpack.c.l.b16 %v297
    %v338 = vunpack.c.l.b16 %v298
    %v339 = vunpack.c.l.b16 %v299
    %v340 = vunpack.c.l.b16 %v300
    %v341 = vunpack.c.l.b16 %v301
    %v342 = vunpack.c.l.b16 %v302
    %v343 = vunpack.c.l.b16 %v303
    %v344 = vunpack.c.l.b16 %v304
    %v345 = vunpack.c.l.b16 %v305
    %v346 = vunpack.c.l.b16 %v306
    %v347 = vunpack.c.l.b16 %v307
    %v348 = vunpack.c.l.b16 %v308
    %v349 = vunpack.c.l.b16 %v309
    %v350 = vunpack.c.l.b16 %v310
    %v351 = vunpack.c.l.b16 %v311
    %v352 = vpack.c.b16 %v333, %v332
    %v353 = vpack.c.b16 %v335, %v334
    %v354 = vpack.c.b16 %v337, %v336
    %v355 = vpack.c.b16 %v339, %v338
    %v356 = vpack.c.b16 %v341, %v340
    %v357 = vpack.c.b16 %v343, %v342
    %v358 = vpack.c.b16 %v345, %v344
    %v359 = vpack.c.b16 %v347, %v346
    %v360 = vpack.c.b16 %v349, %v348
    %v361 = vpack.c.b16 %v351, %v350
    %vm372 = vcmask 261120
    %v374 = vsel %vm372, %v271, 0
    %376 = vmatprep.subr.bf16.mxu0 0
    %377 = vmatpush1.bf16.msra.mxu0 %v359
    %378 = vmatprep.subr.bf16.mxu0 0
    %379 = vmatpush1.bf16.msra.mxu0 %v358
    %380 = vmatprep.subr.bf16.mxu0 0
    %381 = vmatpush1.bf16.msra.mxu0 %v357
    %382 = vmatprep.subr.bf16.mxu0 0
    %383 = vmatpush1.bf16.msra.mxu0 %v356
    %384 = vmatprep.subr.bf16.mxu0 0
    %385 = vmatpush1.bf16.msra.mxu0 %v355
    %386 = vmatprep.subr.bf16.mxu0 0
    %387 = vmatpush1.bf16.msra.mxu0 %v354
    %388 = vmatprep.subr.bf16.mxu0 0
    %389 = vmatpush1.bf16.msra.mxu0 %v353
    %390 = vmatprep.subr.bf16.mxu0 0
    %391 = vmatpush1.bf16.msra.mxu0 %v352
    %392 = vmatprep.subr.bf16.mxu0 0
    %393 = vmatpush2.bf16.msra.mxu0 0
    %394 = vmatprep.subr.bf16.mxu0 0
    %395 = vmatpush2.bf16.msra.mxu0 0
    %396 = vmatprep.subr.bf16.mxu0 0
    %397 = vmatpush2.bf16.msra.mxu0 0
    %398 = vmatprep.subr.bf16.mxu0 0
    %399 = vmatpush2.bf16.msra.mxu0 0
    %400 = vmatprep.subr.bf16.mxu0 0
    %401 = vmatpush2.bf16.msra.mxu0 0
    %402 = vmatprep.subr.bf16.mxu0 0
    %403 = vmatpush2.bf16.msra.mxu0 0
    %404 = vmatprep.subr.bf16.mxu0 0
    %405 = vmatpush2.bf16.msra.mxu0 %v361
    %406 = vmatprep.subr.bf16.mxu0 0
    %407 = vmatpush2.bf16.msra.mxu0 %v360
    %408 = vmatprep.mubr.bf16.mxu0 %v374
    %409 = vmatmul.mubr.bf16.gmra.mxu0 %v270
    %v410 = vpop.f32.mrf.mxu0
    %v411 = vadd.f32 0.0, %v410
    %v412 = vpop.f32.mrf.mxu0
    %v413 = vpop.f32.mrf.mxu0
    %v414 = vadd.f32 0.0, %v413
    %v415 = vpop.f32.mrf.mxu0
    %416 = vdwg.mxu0
    %v437 = vunpack.c.l.b16 %v272
    %v438 = vunpack.c.l.b16 %v273
    %v439 = vunpack.c.l.b16 %v274
    %v440 = vunpack.c.l.b16 %v275
    %v441 = vunpack.c.l.b16 %v276
    %v442 = vunpack.c.l.b16 %v277
    %v443 = vunpack.c.l.b16 %v278
    %v444 = vunpack.c.l.b16 %v279
    %v445 = vunpack.c.l.b16 %v280
    %v446 = vunpack.c.l.b16 %v281
    %v447 = vunpack.c.l.b16 %v282
    %v448 = vunpack.c.l.b16 %v283
    %v449 = vunpack.c.l.b16 %v284
    %v450 = vunpack.c.l.b16 %v285
    %v451 = vunpack.c.l.b16 %v286
    %v452 = vunpack.c.l.b16 %v287
    %v453 = vunpack.c.l.b16 %v288
    %v454 = vunpack.c.l.b16 %v289
    %v455 = vunpack.c.l.b16 %v290
    %v456 = vunpack.c.l.b16 %v291
    %v457 = vpack.c.b16 %v438, %v437
    %v458 = vpack.c.b16 %v440, %v439
    %v459 = vpack.c.b16 %v442, %v441
    %v460 = vpack.c.b16 %v444, %v443
    %v461 = vpack.c.b16 %v446, %v445
    %v462 = vpack.c.b16 %v448, %v447
    %v463 = vpack.c.b16 %v450, %v449
    %v464 = vpack.c.b16 %v452, %v451
    %v465 = vpack.c.b16 %v454, %v453
    %v466 = vpack.c.b16 %v456, %v455
    %v478 = vsel %vm372, %v261, 0
    %480 = vmatprep.subr.bf16.mxu0 0
    %481 = vmatpush1.bf16.msra.mxu0 %v464
    %482 = vmatprep.subr.bf16.mxu0 0
    %483 = vmatpush1.bf16.msra.mxu0 %v463
    %484 = vmatprep.subr.bf16.mxu0 0
    %485 = vmatpush1.bf16.msra.mxu0 %v462
    %486 = vmatprep.subr.bf16.mxu0 0
    %487 = vmatpush1.bf16.msra.mxu0 %v461
    %488 = vmatprep.subr.bf16.mxu0 0
    %489 = vmatpush1.bf16.msra.mxu0 %v460
    %490 = vmatprep.subr.bf16.mxu0 0
    %491 = vmatpush1.bf16.msra.mxu0 %v459
    %492 = vmatprep.subr.bf16.mxu0 0
    %493 = vmatpush1.bf16.msra.mxu0 %v458
    %494 = vmatprep.subr.bf16.mxu0 0
    %495 = vmatpush1.bf16.msra.mxu0 %v457
    %496 = vmatprep.subr.bf16.mxu0 0
    %497 = vmatpush2.bf16.msra.mxu0 0
    %498 = vmatprep.subr.bf16.mxu0 0
    %499 = vmatpush2.bf16.msra.mxu0 0
    %500 = vmatprep.subr.bf16.mxu0 0
    %501 = vmatpush2.bf16.msra.mxu0 0
    %502 = vmatprep.subr.bf16.mxu0 0
    %503 = vmatpush2.bf16.msra.mxu0 0
    %504 = vmatprep.subr.bf16.mxu0 0
    %505 = vmatpush2.bf16.msra.mxu0 0
    %506 = vmatprep.subr.bf16.mxu0 0
    %507 = vmatpush2.bf16.msra.mxu0 0
    %508 = vmatprep.subr.bf16.mxu0 0
    %509 = vmatpush2.bf16.msra.mxu0 %v466
    %510 = vmatprep.subr.bf16.mxu0 0
    %511 = vmatpush2.bf16.msra.mxu0 %v465
    %512 = vmatprep.mubr.bf16.mxu0 %v478
    %513 = vmatmul.mubr.bf16.gmra.mxu0 %v260
    %v514 = vpop.f32.mrf.mxu0
    %v515 = vadd.f32 %v411, %v514
    %v516 = vpop.f32.mrf.mxu0
    %v517 = vpop.f32.mrf.mxu0
    %v518 = vadd.f32 %v414, %v517
    %v519 = vpop.f32.mrf.mxu0
    %520 = vdwg.mxu0
    %v521 = vld [vmem:[%s3] sm:$0xff]
    %v522 = vld [vmem:[%s3 + $0x8] sm:$0xff]
    %v523 = vld [vmem:[%s4] sm:$0xff]
    %v524 = vld [vmem:[%s4 + $0x8] sm:$0xff]
    %v525 = vadd.f32 %v515, %v518
    %v526 = vrot.slane %v525, 4
    %v527 = vadd.f32 %v525, %v526
    %v528 = vrot.slane %v527, 2
    %v529 = vadd.f32 %v527, %v528
    %v530 = vrot.slane %v529, 1
    %v531 = vadd.f32 %v529, %v530
    %v532 = vmul.f32 %v531, %v70
    %v533 = vsub.f32 %v515, %v532
    %v534 = vsub.f32 %v518, %v532
    %v535 = vmul.f32 %v533, %v533
    %v536 = vmul.f32 %v534, %v534
    %v537 = vadd.f32 %v535, %v536
    %v538 = vrot.slane %v537, 4
    %v539 = vadd.f32 %v537, %v538
    %v540 = vrot.slane %v539, 2
    %v541 = vadd.f32 %v539, %v540
    %v542 = vrot.slane %v541, 1
    %v543 = vadd.f32 %v541, %v542
    %v544 = vmul.f32 %v543, %v70
    %v545 = vadd.f32 %v544, 1e-05
    %v546 = vrsqrt.pop %v545
    %v547 = vmul.f32 %v533, %v546
    %v548 = vmul.f32 %v534, %v546
    %550 = vset.pattern.permute.xlu0 0
    %551 = vperm.xlu0 %550, %v521
    %v552 = vpop.permute.xlu0 %551
    %555 = vset.pattern.permute.xlu0 0
    %556 = vperm.xlu0 %555, %v522
    %v557 = vpop.permute.xlu0 %556
    %v559 = vmul.f32 %v547, %v552
    %v560 = vmul.f32 %v548, %v557
    %562 = vset.pattern.permute.xlu0 0
    %563 = vperm.xlu0 %562, %v523
    %v564 = vpop.permute.xlu0 %563
    %567 = vset.pattern.permute.xlu0 0
    %568 = vperm.xlu0 %567, %v524
    %v569 = vpop.permute.xlu0 %568
    %v571 = vadd.f32 %v559, %v564
    %v572 = vadd.f32 %v560, %v569
    %v573 = vxor.u32 %v571, 2147483648
    %v574 = vxor.u32 %v572, 2147483648
    %v575 = vmul.f32 %v573, 1.442695
    %v576 = vpow.pop %v575
    %v577 = vmul.f32 %v574, 1.442695
    %v578 = vpow.pop %v577
    %v579 = vadd.f32 %v576, 1.0
    %v580 = vadd.f32 %v578, 1.0
    %v581 = vrcp.pop %v579
    %v582 = vmul.f32 1.0, %v581
    %v583 = vrcp.pop %v580
    %v584 = vmul.f32 1.0, %v583
    %v585 = vmul.f32 %v571, %v582
    %v586 = vmul.f32 %v572, %v584
    %v587 = vpack.c.bf16 %v586, %v585
    %v589 = vunpack.c.l.b16 %v587
    %v590 = vunpack.c.h.b16 %v587
    %v591 = vpack.c.b16 %v589, %v589
    %v592 = vpack.c.b16 %v590, %v590
    %595 = vst [vmem:[#allocation2] sm:$0xf] %v591
    %596 = vst [vmem:[#allocation2 + $0x4] sm:$0xf] %v592
    %v597 = vsub.f32 %v571, -2.2
    %v598 = vsub.f32 %v572, -2.2
    %v599 = vmul.f32 %v597, 2.5
    %v600 = vmul.f32 %v598, 2.5
    %v601 = vmax.f32 %v599, 0.0
    %v602 = vmax.f32 %v600, 0.0
    %v603 = vmin.f32 %v601, 11.0
    %v604 = vmin.f32 %v602, 11.0
    %v605 = vmax.f32 %v603, 0.0
    %v606 = vmax.f32 %v604, 0.0
    %v607 = vmul.f32 %v605, %v605
    %v608 = vmul.f32 %v606, %v606
    %v609 = vmul.f32 %v605, %v607
    %v610 = vmul.f32 %v606, %v608
    %v611 = vsub.f32 %v603, 1.0
    %v612 = vsub.f32 %v604, 1.0
    %v613 = vmax.f32 %v611, 0.0
    %v614 = vmax.f32 %v612, 0.0
    %v615 = vmul.f32 %v613, %v613
    %v616 = vmul.f32 %v614, %v614
    %v617 = vmul.f32 %v613, %v615
    %v618 = vmul.f32 %v614, %v616
    %v619 = vsub.f32 %v603, 2.0
    %v620 = vsub.f32 %v604, 2.0
    %v621 = vmax.f32 %v619, 0.0
    %v622 = vmax.f32 %v620, 0.0
    %v623 = vmul.f32 %v621, %v621
    %v624 = vmul.f32 %v622, %v622
    %v625 = vmul.f32 %v621, %v623
    %v626 = vmul.f32 %v622, %v624
    %v627 = vsub.f32 %v603, 3.0
    %v628 = vsub.f32 %v604, 3.0
    %v629 = vmax.f32 %v627, 0.0
    %v630 = vmax.f32 %v628, 0.0
    %v631 = vmul.f32 %v629, %v629
    %v632 = vmul.f32 %v630, %v630
    %v633 = vmul.f32 %v629, %v631
    %v634 = vmul.f32 %v630, %v632
    %v635 = vsub.f32 %v603, 4.0
    %v636 = vsub.f32 %v604, 4.0
    %v637 = vmax.f32 %v635, 0.0
    %v638 = vmax.f32 %v636, 0.0
    %v639 = vmul.f32 %v637, %v637
    %v640 = vmul.f32 %v638, %v638
    %v641 = vmul.f32 %v637, %v639
    %v642 = vmul.f32 %v638, %v640
    %v643 = vmul.f32 %v617, 4.0
    %v644 = vmul.f32 %v618, 4.0
    %v645 = vsub.f32 %v609, %v643
    %v646 = vsub.f32 %v610, %v644
    %v647 = vmul.f32 %v625, 6.0
    %v648 = vmul.f32 %v626, 6.0
    %v649 = vadd.f32 %v645, %v647
    %v650 = vadd.f32 %v646, %v648
    %v651 = vmul.f32 %v633, 4.0
    %v652 = vmul.f32 %v634, 4.0
    %v653 = vsub.f32 %v649, %v651
    %v654 = vsub.f32 %v650, %v652
    %v655 = vadd.f32 %v653, %v641
    %v656 = vadd.f32 %v654, %v642
    %v657 = vmul.f32 %v655, 0.16666667
    %v658 = vmul.f32 %v656, 0.16666667
    %v659 = vpack.c.bf16 %v658, %v657
    %v661 = vunpack.c.l.b16 %v659
    %v662 = vunpack.c.h.b16 %v659
    %v663 = vpack.c.b16 %v661, %v661
    %v664 = vpack.c.b16 %v662, %v662
    %667 = vst [vmem:[#allocation2 + $0x8] sm:$0xf] %v663
    %668 = vst [vmem:[#allocation2 + $0xc] sm:$0xf] %v664
    %v669 = vsub.f32 %v603, 5.0
    %v670 = vsub.f32 %v604, 5.0
    %v671 = vmax.f32 %v669, 0.0
    %v672 = vmax.f32 %v670, 0.0
    %v673 = vmul.f32 %v671, %v671
    %v674 = vmul.f32 %v672, %v672
    %v675 = vmul.f32 %v671, %v673
    %v676 = vmul.f32 %v672, %v674
    %v677 = vmul.f32 %v625, 4.0
    %v678 = vmul.f32 %v626, 4.0
    %v679 = vsub.f32 %v617, %v677
    %v680 = vsub.f32 %v618, %v678
    %v681 = vmul.f32 %v633, 6.0
    %v682 = vmul.f32 %v634, 6.0
    %v683 = vadd.f32 %v679, %v681
    %v684 = vadd.f32 %v680, %v682
    %v685 = vmul.f32 %v641, 4.0
    %v686 = vmul.f32 %v642, 4.0
    %v687 = vsub.f32 %v683, %v685
    %v688 = vsub.f32 %v684, %v686
    %v689 = vadd.f32 %v687, %v675
    %v690 = vadd.f32 %v688, %v676
    %v691 = vmul.f32 %v689, 0.16666667
    %v692 = vmul.f32 %v690, 0.16666667
    %v693 = vpack.c.bf16 %v692, %v691
    %v695 = vunpack.c.l.b16 %v693
    %v696 = vunpack.c.h.b16 %v693
    %v697 = vpack.c.b16 %v695, %v695
    %v698 = vpack.c.b16 %v696, %v696
    %701 = vst [vmem:[#allocation2 + $0x10] sm:$0xf] %v697
    %702 = vst [vmem:[#allocation2 + $0x14] sm:$0xf] %v698
    %v703 = vsub.f32 %v603, 6.0
    %v704 = vsub.f32 %v604, 6.0
    %v705 = vmax.f32 %v703, 0.0
    %v706 = vmax.f32 %v704, 0.0
    %v707 = vmul.f32 %v705, %v705
    %v708 = vmul.f32 %v706, %v706
    %v709 = vmul.f32 %v705, %v707
    %v710 = vmul.f32 %v706, %v708
    %v711 = vsub.f32 %v625, %v651
    %v712 = vsub.f32 %v626, %v652
    %v713 = vmul.f32 %v641, 6.0
    %v714 = vmul.f32 %v642, 6.0
    %v715 = vadd.f32 %v711, %v713
    %v716 = vadd.f32 %v712, %v714
    %v717 = vmul.f32 %v675, 4.0
    %v718 = vmul.f32 %v676, 4.0
    %v719 = vsub.f32 %v715, %v717
    %v720 = vsub.f32 %v716, %v718
    %v721 = vadd.f32 %v719, %v709
    %v722 = vadd.f32 %v720, %v710
    %v723 = vmul.f32 %v721, 0.16666667
    %v724 = vmul.f32 %v722, 0.16666667
    %v725 = vpack.c.bf16 %v724, %v723
    %v727 = vunpack.c.l.b16 %v725
    %v728 = vunpack.c.h.b16 %v725
    %v729 = vpack.c.b16 %v727, %v727
    %v730 = vpack.c.b16 %v728, %v728
    %733 = vst [vmem:[#allocation2 + $0x18] sm:$0xf] %v729
    %734 = vst [vmem:[#allocation2 + $0x1c] sm:$0xf] %v730
    %v735 = vsub.f32 %v603, 7.0
    %v736 = vsub.f32 %v604, 7.0
    %v737 = vmax.f32 %v735, 0.0
    %v738 = vmax.f32 %v736, 0.0
    %v739 = vmul.f32 %v737, %v737
    %v740 = vmul.f32 %v738, %v738
    %v741 = vmul.f32 %v737, %v739
    %v742 = vmul.f32 %v738, %v740
    %v743 = vsub.f32 %v633, %v685
    %v744 = vsub.f32 %v634, %v686
    %v745 = vmul.f32 %v675, 6.0
    %v746 = vmul.f32 %v676, 6.0
    %v747 = vadd.f32 %v743, %v745
    %v748 = vadd.f32 %v744, %v746
    %v749 = vmul.f32 %v709, 4.0
    %v750 = vmul.f32 %v710, 4.0
    %v751 = vsub.f32 %v747, %v749
    %v752 = vsub.f32 %v748, %v750
    %v753 = vadd.f32 %v751, %v741
    %v754 = vadd.f32 %v752, %v742
    %v755 = vmul.f32 %v753, 0.16666667
    %v756 = vmul.f32 %v754, 0.16666667
    %v757 = vpack.c.bf16 %v756, %v755
    %v759 = vunpack.c.l.b16 %v757
    %v760 = vunpack.c.h.b16 %v757
    %v761 = vpack.c.b16 %v759, %v759
    %v762 = vpack.c.b16 %v760, %v760
    %765 = vst [vmem:[#allocation2 + $0x20] sm:$0xf] %v761
    %766 = vst [vmem:[#allocation2 + $0x24] sm:$0xf] %v762
    %v767 = vsub.f32 %v603, 8.0
    %v768 = vsub.f32 %v604, 8.0
    %v769 = vmax.f32 %v767, 0.0
    %v770 = vmax.f32 %v768, 0.0
    %v771 = vmul.f32 %v769, %v769
    %v772 = vmul.f32 %v770, %v770
    %v773 = vmul.f32 %v769, %v771
    %v774 = vmul.f32 %v770, %v772
    %v775 = vsub.f32 %v641, %v717
    %v776 = vsub.f32 %v642, %v718
    %v777 = vmul.f32 %v709, 6.0
    %v778 = vmul.f32 %v710, 6.0
    %v779 = vadd.f32 %v775, %v777
    %v780 = vadd.f32 %v776, %v778
    %v781 = vmul.f32 %v741, 4.0
    %v782 = vmul.f32 %v742, 4.0
    %v783 = vsub.f32 %v779, %v781
    %v784 = vsub.f32 %v780, %v782
    %v785 = vadd.f32 %v783, %v773
    %v786 = vadd.f32 %v784, %v774
    %v787 = vmul.f32 %v785, 0.16666667
    %v788 = vmul.f32 %v786, 0.16666667
    %v789 = vpack.c.bf16 %v788, %v787
    %v791 = vunpack.c.l.b16 %v789
    %v792 = vunpack.c.h.b16 %v789
    %v793 = vpack.c.b16 %v791, %v791
    %v794 = vpack.c.b16 %v792, %v792
    %797 = vst [vmem:[#allocation2 + $0x28] sm:$0xf] %v793
    %798 = vst [vmem:[#allocation2 + $0x2c] sm:$0xf] %v794
    %v799 = vsub.f32 %v603, 9.0
    %v800 = vsub.f32 %v604, 9.0
    %v801 = vmax.f32 %v799, 0.0
    %v802 = vmax.f32 %v800, 0.0
    %v803 = vmul.f32 %v801, %v801
    %v804 = vmul.f32 %v802, %v802
    %v805 = vmul.f32 %v801, %v803
    %v806 = vmul.f32 %v802, %v804
    %v807 = vsub.f32 %v675, %v749
    %v808 = vsub.f32 %v676, %v750
    %v809 = vmul.f32 %v741, 6.0
    %v810 = vmul.f32 %v742, 6.0
    %v811 = vadd.f32 %v807, %v809
    %v812 = vadd.f32 %v808, %v810
    %v813 = vmul.f32 %v773, 4.0
    %v814 = vmul.f32 %v774, 4.0
    %v815 = vsub.f32 %v811, %v813
    %v816 = vsub.f32 %v812, %v814
    %v817 = vadd.f32 %v815, %v805
    %v818 = vadd.f32 %v816, %v806
    %v819 = vmul.f32 %v817, 0.16666667
    %v820 = vmul.f32 %v818, 0.16666667
    %v821 = vpack.c.bf16 %v820, %v819
    %v823 = vunpack.c.l.b16 %v821
    %v824 = vunpack.c.h.b16 %v821
    %v825 = vpack.c.b16 %v823, %v823
    %v826 = vpack.c.b16 %v824, %v824
    %829 = vst [vmem:[#allocation2 + $0x30] sm:$0xf] %v825
    %830 = vst [vmem:[#allocation2 + $0x34] sm:$0xf] %v826
    %v831 = vsub.f32 %v603, 10.0
    %v832 = vsub.f32 %v604, 10.0
    %v833 = vmax.f32 %v831, 0.0
    %v834 = vmax.f32 %v832, 0.0
    %v835 = vmul.f32 %v833, %v833
    %v836 = vmul.f32 %v834, %v834
    %v837 = vmul.f32 %v833, %v835
    %v838 = vmul.f32 %v834, %v836
    %v839 = vsub.f32 %v709, %v781
    %v840 = vsub.f32 %v710, %v782
    %v841 = vmul.f32 %v773, 6.0
    %v842 = vmul.f32 %v774, 6.0
    %v843 = vadd.f32 %v839, %v841
    %v844 = vadd.f32 %v840, %v842
    %v845 = vmul.f32 %v805, 4.0
    %v846 = vmul.f32 %v806, 4.0
    %v847 = vsub.f32 %v843, %v845
    %v848 = vsub.f32 %v844, %v846
    %v849 = vadd.f32 %v847, %v837
    %v850 = vadd.f32 %v848, %v838
    %v851 = vmul.f32 %v849, 0.16666667
    %v852 = vmul.f32 %v850, 0.16666667
    %v853 = vpack.c.bf16 %v852, %v851
    %v855 = vunpack.c.l.b16 %v853
    %v856 = vunpack.c.h.b16 %v853
    %v857 = vpack.c.b16 %v855, %v855
    %v858 = vpack.c.b16 %v856, %v856
    %861 = vst [vmem:[#allocation2 + $0x38] sm:$0xf] %v857
    %862 = vst [vmem:[#allocation2 + $0x3c] sm:$0xf] %v858
    %v863 = vsub.f32 %v603, 11.0
    %v864 = vsub.f32 %v604, 11.0
    %v865 = vmax.f32 %v863, 0.0
    %v866 = vmax.f32 %v864, 0.0
    %v867 = vmul.f32 %v865, %v865
    %v868 = vmul.f32 %v866, %v866
    %v869 = vmul.f32 %v865, %v867
    %v870 = vmul.f32 %v866, %v868
    %v871 = vsub.f32 %v741, %v813
    %v872 = vsub.f32 %v742, %v814
    %v873 = vmul.f32 %v805, 6.0
    %v874 = vmul.f32 %v806, 6.0
    %v875 = vadd.f32 %v871, %v873
    %v876 = vadd.f32 %v872, %v874
    %v877 = vmul.f32 %v837, 4.0
    %v878 = vmul.f32 %v838, 4.0
    %v879 = vsub.f32 %v875, %v877
    %v880 = vsub.f32 %v876, %v878
    %v881 = vadd.f32 %v879, %v869
    %v882 = vadd.f32 %v880, %v870
    %v883 = vmul.f32 %v881, 0.16666667
    %v884 = vmul.f32 %v882, 0.16666667
    %v885 = vpack.c.bf16 %v884, %v883
    %v887 = vunpack.c.l.b16 %v885
    %v888 = vunpack.c.h.b16 %v885
    %v889 = vpack.c.b16 %v887, %v887
    %v890 = vpack.c.b16 %v888, %v888
    %893 = vst [vmem:[#allocation2 + $0x40] sm:$0xf] %v889
    %894 = vst [vmem:[#allocation2 + $0x44] sm:$0xf] %v890
    %v895 = vld [vmem:[%s10] sm:$0xff]
    %v896 = vld [vmem:[%s10 + $0x8] sm:$0xff]
    %v897 = vld [vmem:[%s10 + $0x10] sm:$0xff]
    %v898 = vld [vmem:[%s10 + $0x18] sm:$0xff]
    %v899 = vld [vmem:[#allocation2] sm:$0xf]
    %v900 = vld [vmem:[#allocation2 + $0x4] sm:$0xf]
    %v901 = vld [vmem:[#allocation2 + $0x8] sm:$0xf]
    %v902 = vld [vmem:[#allocation2 + $0xc] sm:$0xf]
    %v903 = vld [vmem:[#allocation2 + $0x10] sm:$0xf]
    %v904 = vld [vmem:[#allocation2 + $0x14] sm:$0xf]
    %v905 = vld [vmem:[#allocation2 + $0x18] sm:$0xf]
    %v906 = vld [vmem:[#allocation2 + $0x1c] sm:$0xf]
    %v907 = vld [vmem:[#allocation2 + $0x20] sm:$0xf]
    %v908 = vld [vmem:[#allocation2 + $0x24] sm:$0xf]
    %v909 = vld [vmem:[#allocation2 + $0x28] sm:$0xf]
    %v910 = vld [vmem:[#allocation2 + $0x2c] sm:$0xf]
    %v911 = vld [vmem:[#allocation2 + $0x30] sm:$0xf]
    %v912 = vld [vmem:[#allocation2 + $0x34] sm:$0xf]
    %v913 = vld [vmem:[#allocation2 + $0x38] sm:$0xf]
    %v914 = vld [vmem:[#allocation2 + $0x3c] sm:$0xf]
    %v915 = vld [vmem:[#allocation2 + $0x40] sm:$0xf]
    %v916 = vld [vmem:[#allocation2 + $0x44] sm:$0xf]
    %v921 = vunpack.c.l.b16 %v895
    %v922 = vunpack.c.h.b16 %v895
    %v923 = vunpack.c.l.b16 %v896
    %v924 = vunpack.c.h.b16 %v896
    %v925 = vunpack.c.l.b16 %v897
    %v926 = vunpack.c.h.b16 %v897
    %v927 = vunpack.c.l.b16 %v898
    %v928 = vunpack.c.h.b16 %v898
    %v929 = vpack.c.b16 %v923, %v921
    %v930 = vpack.c.b16 %v924, %v922
    %v931 = vpack.c.b16 %v927, %v925
    %v932 = vpack.c.b16 %v928, %v926
    %v953 = vunpack.c.l.b16 %v899
    %v954 = vunpack.c.l.b16 %v900
    %v955 = vunpack.c.l.b16 %v901
    %v956 = vunpack.c.l.b16 %v902
    %v957 = vunpack.c.l.b16 %v903
    %v958 = vunpack.c.l.b16 %v904
    %v959 = vunpack.c.l.b16 %v905
    %v960 = vunpack.c.l.b16 %v906
    %v961 = vunpack.c.l.b16 %v907
    %v962 = vunpack.c.l.b16 %v908
    %v963 = vunpack.c.l.b16 %v909
    %v964 = vunpack.c.l.b16 %v910
    %v965 = vunpack.c.l.b16 %v911
    %v966 = vunpack.c.l.b16 %v912
    %v967 = vunpack.c.l.b16 %v913
    %v968 = vunpack.c.l.b16 %v914
    %v969 = vunpack.c.l.b16 %v915
    %v970 = vunpack.c.l.b16 %v916
    %v971 = vpack.c.b16 %v954, %v953
    %v972 = vpack.c.b16 %v956, %v955
    %v973 = vpack.c.b16 %v958, %v957
    %v974 = vpack.c.b16 %v960, %v959
    %v975 = vpack.c.b16 %v962, %v961
    %v976 = vpack.c.b16 %v964, %v963
    %v977 = vpack.c.b16 %v966, %v965
    %v978 = vpack.c.b16 %v968, %v967
    %v979 = vpack.c.b16 %v970, %v969
    %vm989 = vcmask 130048
    %v991 = vsel %vm989, %v930, 0
    %v994 = vsel %vm989, %v932, 0
    %996 = vmatprep.subr.bf16.mxu0 0
    %997 = vmatpush1.bf16.msra.mxu0 %v978
    %998 = vmatprep.subr.bf16.mxu0 0
    %999 = vmatpush1.bf16.msra.mxu0 %v977
    %1000 = vmatprep.subr.bf16.mxu0 0
    %1001 = vmatpush1.bf16.msra.mxu0 %v976
    %1002 = vmatprep.subr.bf16.mxu0 0
    %1003 = vmatpush1.bf16.msra.mxu0 %v975
    %1004 = vmatprep.subr.bf16.mxu0 0
    %1005 = vmatpush1.bf16.msra.mxu0 %v974
    %1006 = vmatprep.subr.bf16.mxu0 0
    %1007 = vmatpush1.bf16.msra.mxu0 %v973
    %1008 = vmatprep.subr.bf16.mxu0 0
    %1009 = vmatpush1.bf16.msra.mxu0 %v972
    %1010 = vmatprep.subr.bf16.mxu0 0
    %1011 = vmatpush1.bf16.msra.mxu0 %v971
    %1012 = vmatprep.subr.bf16.mxu0 0
    %1013 = vmatpush2.bf16.msra.mxu0 0
    %1014 = vmatprep.subr.bf16.mxu0 0
    %1015 = vmatpush2.bf16.msra.mxu0 0
    %1016 = vmatprep.subr.bf16.mxu0 0
    %1017 = vmatpush2.bf16.msra.mxu0 0
    %1018 = vmatprep.subr.bf16.mxu0 0
    %1019 = vmatpush2.bf16.msra.mxu0 0
    %1020 = vmatprep.subr.bf16.mxu0 0
    %1021 = vmatpush2.bf16.msra.mxu0 0
    %1022 = vmatprep.subr.bf16.mxu0 0
    %1023 = vmatpush2.bf16.msra.mxu0 0
    %1024 = vmatprep.subr.bf16.mxu0 0
    %1025 = vmatpush2.bf16.msra.mxu0 0
    %1026 = vmatprep.subr.bf16.mxu0 0
    %1027 = vmatpush2.bf16.msra.mxu0 %v979
    %1028 = vmatprep.mubr.bf16.mxu0 %v991
    %1029 = vmatmul.mubr.bf16.gmra.mxu0 %v929
    %v1030 = vpop.f32.mrf.mxu0
    %v1031 = vadd.f32 0.0, %v1030
    %v1032 = vpop.f32.mrf.mxu0
    %v1033 = vpop.f32.mrf.mxu0
    %v1034 = vadd.f32 0.0, %v1033
    %v1035 = vpop.f32.mrf.mxu0
    %1036 = vmatprep.mubr.bf16.mxu0 %v994
    %1037 = vmatmul.mubr.bf16.gmra.mxu0 %v931
    %v1038 = vpop.f32.mrf.mxu0
    %v1039 = vadd.f32 0.0, %v1038
    %v1040 = vpop.f32.mrf.mxu0
    %v1041 = vpop.f32.mrf.mxu0
    %v1042 = vadd.f32 0.0, %v1041
    %v1043 = vpop.f32.mrf.mxu0
    %1044 = vdwg.mxu0
    %v1045 = vxor.u32 %v1031, 2147483648
    %v1046 = vxor.u32 %v1034, 2147483648
    %v1047 = vxor.u32 %v1039, 2147483648
    %v1048 = vxor.u32 %v1042, 2147483648
    %v1049 = vmul.f32 %v1045, 1.442695
    %v1050 = vpow.pop %v1049
    %v1051 = vmul.f32 %v1046, 1.442695
    %v1052 = vpow.pop %v1051
    %v1053 = vmul.f32 %v1047, 1.442695
    %v1054 = vpow.pop %v1053
    %v1055 = vmul.f32 %v1048, 1.442695
    %v1056 = vpow.pop %v1055
    %v1057 = vadd.f32 %v1050, 1.0
    %v1058 = vadd.f32 %v1052, 1.0
    %v1059 = vadd.f32 %v1054, 1.0
    %v1060 = vadd.f32 %v1056, 1.0
    %v1061 = vrcp.pop %v1057
    %v1062 = vmul.f32 1.0, %v1061
    %v1063 = vrcp.pop %v1058
    %v1064 = vmul.f32 1.0, %v1063
    %v1065 = vrcp.pop %v1059
    %v1066 = vmul.f32 1.0, %v1065
    %v1067 = vrcp.pop %v1060
    %v1068 = vmul.f32 1.0, %v1067
    %v1069 = vmul.f32 %v1031, %v1062
    %v1070 = vmul.f32 %v1034, %v1064
    %v1071 = vmul.f32 %v1039, %v1066
    %v1072 = vmul.f32 %v1042, %v1068
    %v1073 = vpack.c.bf16 %v1070, %v1069
    %v1074 = vpack.c.bf16 %v1072, %v1071
    %v1077 = vunpack.c.l.b16 %v1073
    %v1078 = vunpack.c.h.b16 %v1073
    %v1079 = vunpack.c.l.b16 %v1074
    %v1080 = vunpack.c.h.b16 %v1074
    %v1081 = vpack.c.b16 %v1077, %v1077
    %v1082 = vpack.c.b16 %v1078, %v1078
    %v1083 = vpack.c.b16 %v1079, %v1079
    %v1084 = vpack.c.b16 %v1080, %v1080
    %1089 = vst [vmem:[#allocation3] sm:$0xf] %v1081
    %1090 = vst [vmem:[#allocation3 + $0x4] sm:$0xf] %v1082
    %1091 = vst [vmem:[#allocation3 + $0x8] sm:$0xf] %v1083
    %1092 = vst [vmem:[#allocation3 + $0xc] sm:$0xf] %v1084
    %v1093 = vsub.f32 %v1031, -2.2
    %v1094 = vsub.f32 %v1034, -2.2
    %v1095 = vsub.f32 %v1039, -2.2
    %v1096 = vsub.f32 %v1042, -2.2
    %v1097 = vmul.f32 %v1093, 2.5
    %v1098 = vmul.f32 %v1094, 2.5
    %v1099 = vmul.f32 %v1095, 2.5
    %v1100 = vmul.f32 %v1096, 2.5
    %v1101 = vmax.f32 %v1097, 0.0
    %v1102 = vmax.f32 %v1098, 0.0
    %v1103 = vmax.f32 %v1099, 0.0
    %v1104 = vmax.f32 %v1100, 0.0
    %v1105 = vmin.f32 %v1101, 11.0
    %v1106 = vmin.f32 %v1102, 11.0
    %v1107 = vmin.f32 %v1103, 11.0
    %v1108 = vmin.f32 %v1104, 11.0
    %v1109 = vmax.f32 %v1105, 0.0
    %v1110 = vmax.f32 %v1106, 0.0
    %v1111 = vmax.f32 %v1107, 0.0
    %v1112 = vmax.f32 %v1108, 0.0
    %v1113 = vmul.f32 %v1109, %v1109
    %v1114 = vmul.f32 %v1110, %v1110
    %v1115 = vmul.f32 %v1111, %v1111
    %v1116 = vmul.f32 %v1112, %v1112
    %v1117 = vmul.f32 %v1109, %v1113
    %v1118 = vmul.f32 %v1110, %v1114
    %v1119 = vmul.f32 %v1111, %v1115
    %v1120 = vmul.f32 %v1112, %v1116
    %v1121 = vsub.f32 %v1105, 1.0
    %v1122 = vsub.f32 %v1106, 1.0
    %v1123 = vsub.f32 %v1107, 1.0
    %v1124 = vsub.f32 %v1108, 1.0
    %v1125 = vmax.f32 %v1121, 0.0
    %v1126 = vmax.f32 %v1122, 0.0
    %v1127 = vmax.f32 %v1123, 0.0
    %v1128 = vmax.f32 %v1124, 0.0
    %v1129 = vmul.f32 %v1125, %v1125
    %v1130 = vmul.f32 %v1126, %v1126
    %v1131 = vmul.f32 %v1127, %v1127
    %v1132 = vmul.f32 %v1128, %v1128
    %v1133 = vmul.f32 %v1125, %v1129
    %v1134 = vmul.f32 %v1126, %v1130
    %v1135 = vmul.f32 %v1127, %v1131
    %v1136 = vmul.f32 %v1128, %v1132
    %v1137 = vsub.f32 %v1105, 2.0
    %v1138 = vsub.f32 %v1106, 2.0
    %v1139 = vsub.f32 %v1107, 2.0
    %v1140 = vsub.f32 %v1108, 2.0
    %v1141 = vmax.f32 %v1137, 0.0
    %v1142 = vmax.f32 %v1138, 0.0
    %v1143 = vmax.f32 %v1139, 0.0
    %v1144 = vmax.f32 %v1140, 0.0
    %v1145 = vmul.f32 %v1141, %v1141
    %v1146 = vmul.f32 %v1142, %v1142
    %v1147 = vmul.f32 %v1143, %v1143
    %v1148 = vmul.f32 %v1144, %v1144
    %v1149 = vmul.f32 %v1141, %v1145
    %v1150 = vmul.f32 %v1142, %v1146
    %v1151 = vmul.f32 %v1143, %v1147
    %v1152 = vmul.f32 %v1144, %v1148
    %v1153 = vsub.f32 %v1105, 3.0
    %v1154 = vsub.f32 %v1106, 3.0
    %v1155 = vsub.f32 %v1107, 3.0
    %v1156 = vsub.f32 %v1108, 3.0
    %v1157 = vmax.f32 %v1153, 0.0
    %v1158 = vmax.f32 %v1154, 0.0
    %v1159 = vmax.f32 %v1155, 0.0
    %v1160 = vmax.f32 %v1156, 0.0
    %v1161 = vmul.f32 %v1157, %v1157
    %v1162 = vmul.f32 %v1158, %v1158
    %v1163 = vmul.f32 %v1159, %v1159
    %v1164 = vmul.f32 %v1160, %v1160
    %v1165 = vmul.f32 %v1157, %v1161
    %v1166 = vmul.f32 %v1158, %v1162
    %v1167 = vmul.f32 %v1159, %v1163
    %v1168 = vmul.f32 %v1160, %v1164
    %v1169 = vsub.f32 %v1105, 4.0
    %v1170 = vsub.f32 %v1106, 4.0
    %v1171 = vsub.f32 %v1107, 4.0
    %v1172 = vsub.f32 %v1108, 4.0
    %v1173 = vmax.f32 %v1169, 0.0
    %v1174 = vmax.f32 %v1170, 0.0
    %v1175 = vmax.f32 %v1171, 0.0
    %v1176 = vmax.f32 %v1172, 0.0
    %v1177 = vmul.f32 %v1173, %v1173
    %v1178 = vmul.f32 %v1174, %v1174
    %v1179 = vmul.f32 %v1175, %v1175
    %v1180 = vmul.f32 %v1176, %v1176
    %v1181 = vmul.f32 %v1173, %v1177
    %v1182 = vmul.f32 %v1174, %v1178
    %v1183 = vmul.f32 %v1175, %v1179
    %v1184 = vmul.f32 %v1176, %v1180
    %v1185 = vmul.f32 %v1133, 4.0
    %v1186 = vmul.f32 %v1134, 4.0
    %v1187 = vmul.f32 %v1135, 4.0
    %v1188 = vmul.f32 %v1136, 4.0
    %v1189 = vsub.f32 %v1117, %v1185
    %v1190 = vsub.f32 %v1118, %v1186
    %v1191 = vsub.f32 %v1119, %v1187
    %v1192 = vsub.f32 %v1120, %v1188
    %v1193 = vmul.f32 %v1149, 6.0
    %v1194 = vmul.f32 %v1150, 6.0
    %v1195 = vmul.f32 %v1151, 6.0
    %v1196 = vmul.f32 %v1152, 6.0
    %v1197 = vadd.f32 %v1189, %v1193
    %v1198 = vadd.f32 %v1190, %v1194
    %v1199 = vadd.f32 %v1191, %v1195
    %v1200 = vadd.f32 %v1192, %v1196
    %v1201 = vmul.f32 %v1165, 4.0
    %v1202 = vmul.f32 %v1166, 4.0
    %v1203 = vmul.f32 %v1167, 4.0
    %v1204 = vmul.f32 %v1168, 4.0
    %v1205 = vsub.f32 %v1197, %v1201
    %v1206 = vsub.f32 %v1198, %v1202
    %v1207 = vsub.f32 %v1199, %v1203
    %v1208 = vsub.f32 %v1200, %v1204
    %v1209 = vadd.f32 %v1205, %v1181
    %v1210 = vadd.f32 %v1206, %v1182
    %v1211 = vadd.f32 %v1207, %v1183
    %v1212 = vadd.f32 %v1208, %v1184
    %v1213 = vmul.f32 %v1209, 0.16666667
    %v1214 = vmul.f32 %v1210, 0.16666667
    %v1215 = vmul.f32 %v1211, 0.16666667
    %v1216 = vmul.f32 %v1212, 0.16666667
    %v1217 = vpack.c.bf16 %v1214, %v1213
    %v1218 = vpack.c.bf16 %v1216, %v1215
    %v1221 = vunpack.c.l.b16 %v1217
    %v1222 = vunpack.c.h.b16 %v1217
    %v1223 = vunpack.c.l.b16 %v1218
    %v1224 = vunpack.c.h.b16 %v1218
    %v1225 = vpack.c.b16 %v1221, %v1221
    %v1226 = vpack.c.b16 %v1222, %v1222
    %v1227 = vpack.c.b16 %v1223, %v1223
    %v1228 = vpack.c.b16 %v1224, %v1224
    %1233 = vst [vmem:[#allocation3 + $0x10] sm:$0xf] %v1225
    %1234 = vst [vmem:[#allocation3 + $0x14] sm:$0xf] %v1226
    %1235 = vst [vmem:[#allocation3 + $0x18] sm:$0xf] %v1227
    %1236 = vst [vmem:[#allocation3 + $0x1c] sm:$0xf] %v1228
    %v1237 = vsub.f32 %v1105, 5.0
    %v1238 = vsub.f32 %v1106, 5.0
    %v1239 = vsub.f32 %v1107, 5.0
    %v1240 = vsub.f32 %v1108, 5.0
    %v1241 = vmax.f32 %v1237, 0.0
    %v1242 = vmax.f32 %v1238, 0.0
    %v1243 = vmax.f32 %v1239, 0.0
    %v1244 = vmax.f32 %v1240, 0.0
    %v1245 = vmul.f32 %v1241, %v1241
    %v1246 = vmul.f32 %v1242, %v1242
    %v1247 = vmul.f32 %v1243, %v1243
    %v1248 = vmul.f32 %v1244, %v1244
    %v1249 = vmul.f32 %v1241, %v1245
    %v1250 = vmul.f32 %v1242, %v1246
    %v1251 = vmul.f32 %v1243, %v1247
    %v1252 = vmul.f32 %v1244, %v1248
    %v1253 = vmul.f32 %v1149, 4.0
    %v1254 = vmul.f32 %v1150, 4.0
    %v1255 = vmul.f32 %v1151, 4.0
    %v1256 = vmul.f32 %v1152, 4.0
    %v1257 = vsub.f32 %v1133, %v1253
    %v1258 = vsub.f32 %v1134, %v1254
    %v1259 = vsub.f32 %v1135, %v1255
    %v1260 = vsub.f32 %v1136, %v1256
    %v1261 = vmul.f32 %v1165, 6.0
    %v1262 = vmul.f32 %v1166, 6.0
    %v1263 = vmul.f32 %v1167, 6.0
    %v1264 = vmul.f32 %v1168, 6.0
    %v1265 = vadd.f32 %v1257, %v1261
    %v1266 = vadd.f32 %v1258, %v1262
    %v1267 = vadd.f32 %v1259, %v1263
    %v1268 = vadd.f32 %v1260, %v1264
    %v1269 = vmul.f32 %v1181, 4.0
    %v1270 = vmul.f32 %v1182, 4.0
    %v1271 = vmul.f32 %v1183, 4.0
    %v1272 = vmul.f32 %v1184, 4.0
    %v1273 = vsub.f32 %v1265, %v1269
    %v1274 = vsub.f32 %v1266, %v1270
    %v1275 = vsub.f32 %v1267, %v1271
    %v1276 = vsub.f32 %v1268, %v1272
    %v1277 = vadd.f32 %v1273, %v1249
    %v1278 = vadd.f32 %v1274, %v1250
    %v1279 = vadd.f32 %v1275, %v1251
    %v1280 = vadd.f32 %v1276, %v1252
    %v1281 = vmul.f32 %v1277, 0.16666667
    %v1282 = vmul.f32 %v1278, 0.16666667
    %v1283 = vmul.f32 %v1279, 0.16666667
    %v1284 = vmul.f32 %v1280, 0.16666667
    %v1285 = vpack.c.bf16 %v1282, %v1281
    %v1286 = vpack.c.bf16 %v1284, %v1283
    %v1289 = vunpack.c.l.b16 %v1285
    %v1290 = vunpack.c.h.b16 %v1285
    %v1291 = vunpack.c.l.b16 %v1286
    %v1292 = vunpack.c.h.b16 %v1286
    %v1293 = vpack.c.b16 %v1289, %v1289
    %v1294 = vpack.c.b16 %v1290, %v1290
    %v1295 = vpack.c.b16 %v1291, %v1291
    %v1296 = vpack.c.b16 %v1292, %v1292
    %1301 = vst [vmem:[#allocation3 + $0x20] sm:$0xf] %v1293
    %1302 = vst [vmem:[#allocation3 + $0x24] sm:$0xf] %v1294
    %1303 = vst [vmem:[#allocation3 + $0x28] sm:$0xf] %v1295
    %1304 = vst [vmem:[#allocation3 + $0x2c] sm:$0xf] %v1296
    %v1305 = vsub.f32 %v1105, 6.0
    %v1306 = vsub.f32 %v1106, 6.0
    %v1307 = vsub.f32 %v1107, 6.0
    %v1308 = vsub.f32 %v1108, 6.0
    %v1309 = vmax.f32 %v1305, 0.0
    %v1310 = vmax.f32 %v1306, 0.0
    %v1311 = vmax.f32 %v1307, 0.0
    %v1312 = vmax.f32 %v1308, 0.0
    %v1313 = vmul.f32 %v1309, %v1309
    %v1314 = vmul.f32 %v1310, %v1310
    %v1315 = vmul.f32 %v1311, %v1311
    %v1316 = vmul.f32 %v1312, %v1312
    %v1317 = vmul.f32 %v1309, %v1313
    %v1318 = vmul.f32 %v1310, %v1314
    %v1319 = vmul.f32 %v1311, %v1315
    %v1320 = vmul.f32 %v1312, %v1316
    %v1321 = vsub.f32 %v1149, %v1201
    %v1322 = vsub.f32 %v1150, %v1202
    %v1323 = vsub.f32 %v1151, %v1203
    %v1324 = vsub.f32 %v1152, %v1204
    %v1325 = vmul.f32 %v1181, 6.0
    %v1326 = vmul.f32 %v1182, 6.0
    %v1327 = vmul.f32 %v1183, 6.0
    %v1328 = vmul.f32 %v1184, 6.0
    %v1329 = vadd.f32 %v1321, %v1325
    %v1330 = vadd.f32 %v1322, %v1326
    %v1331 = vadd.f32 %v1323, %v1327
    %v1332 = vadd.f32 %v1324, %v1328
    %v1333 = vmul.f32 %v1249, 4.0
    %v1334 = vmul.f32 %v1250, 4.0
    %v1335 = vmul.f32 %v1251, 4.0
    %v1336 = vmul.f32 %v1252, 4.0
    %v1337 = vsub.f32 %v1329, %v1333
    %v1338 = vsub.f32 %v1330, %v1334
    %v1339 = vsub.f32 %v1331, %v1335
    %v1340 = vsub.f32 %v1332, %v1336
    %v1341 = vadd.f32 %v1337, %v1317
    %v1342 = vadd.f32 %v1338, %v1318
    %v1343 = vadd.f32 %v1339, %v1319
    %v1344 = vadd.f32 %v1340, %v1320
    %v1345 = vmul.f32 %v1341, 0.16666667
    %v1346 = vmul.f32 %v1342, 0.16666667
    %v1347 = vmul.f32 %v1343, 0.16666667
    %v1348 = vmul.f32 %v1344, 0.16666667
    %v1349 = vpack.c.bf16 %v1346, %v1345
    %v1350 = vpack.c.bf16 %v1348, %v1347
    %v1353 = vunpack.c.l.b16 %v1349
    %v1354 = vunpack.c.h.b16 %v1349
    %v1355 = vunpack.c.l.b16 %v1350
    %v1356 = vunpack.c.h.b16 %v1350
    %v1357 = vpack.c.b16 %v1353, %v1353
    %v1358 = vpack.c.b16 %v1354, %v1354
    %v1359 = vpack.c.b16 %v1355, %v1355
    %v1360 = vpack.c.b16 %v1356, %v1356
    %1365 = vst [vmem:[#allocation3 + $0x30] sm:$0xf] %v1357
    %1366 = vst [vmem:[#allocation3 + $0x34] sm:$0xf] %v1358
    %1367 = vst [vmem:[#allocation3 + $0x38] sm:$0xf] %v1359
    %1368 = vst [vmem:[#allocation3 + $0x3c] sm:$0xf] %v1360
    %v1369 = vsub.f32 %v1105, 7.0
    %v1370 = vsub.f32 %v1106, 7.0
    %v1371 = vsub.f32 %v1107, 7.0
    %v1372 = vsub.f32 %v1108, 7.0
    %v1373 = vmax.f32 %v1369, 0.0
    %v1374 = vmax.f32 %v1370, 0.0
    %v1375 = vmax.f32 %v1371, 0.0
    %v1376 = vmax.f32 %v1372, 0.0
    %v1377 = vmul.f32 %v1373, %v1373
    %v1378 = vmul.f32 %v1374, %v1374
    %v1379 = vmul.f32 %v1375, %v1375
    %v1380 = vmul.f32 %v1376, %v1376
    %v1381 = vmul.f32 %v1373, %v1377
    %v1382 = vmul.f32 %v1374, %v1378
    %v1383 = vmul.f32 %v1375, %v1379
    %v1384 = vmul.f32 %v1376, %v1380
    %v1385 = vsub.f32 %v1165, %v1269
    %v1386 = vsub.f32 %v1166, %v1270
    %v1387 = vsub.f32 %v1167, %v1271
    %v1388 = vsub.f32 %v1168, %v1272
    %v1389 = vmul.f32 %v1249, 6.0
    %v1390 = vmul.f32 %v1250, 6.0
    %v1391 = vmul.f32 %v1251, 6.0
    %v1392 = vmul.f32 %v1252, 6.0
    %v1393 = vadd.f32 %v1385, %v1389
    %v1394 = vadd.f32 %v1386, %v1390
    %v1395 = vadd.f32 %v1387, %v1391
    %v1396 = vadd.f32 %v1388, %v1392
    %v1397 = vmul.f32 %v1317, 4.0
    %v1398 = vmul.f32 %v1318, 4.0
    %v1399 = vmul.f32 %v1319, 4.0
    %v1400 = vmul.f32 %v1320, 4.0
    %v1401 = vsub.f32 %v1393, %v1397
    %v1402 = vsub.f32 %v1394, %v1398
    %v1403 = vsub.f32 %v1395, %v1399
    %v1404 = vsub.f32 %v1396, %v1400
    %v1405 = vadd.f32 %v1401, %v1381
    %v1406 = vadd.f32 %v1402, %v1382
    %v1407 = vadd.f32 %v1403, %v1383
    %v1408 = vadd.f32 %v1404, %v1384
    %v1409 = vmul.f32 %v1405, 0.16666667
    %v1410 = vmul.f32 %v1406, 0.16666667
    %v1411 = vmul.f32 %v1407, 0.16666667
    %v1412 = vmul.f32 %v1408, 0.16666667
    %v1413 = vpack.c.bf16 %v1410, %v1409
    %v1414 = vpack.c.bf16 %v1412, %v1411
    %v1417 = vunpack.c.l.b16 %v1413
    %v1418 = vunpack.c.h.b16 %v1413
    %v1419 = vunpack.c.l.b16 %v1414
    %v1420 = vunpack.c.h.b16 %v1414
    %v1421 = vpack.c.b16 %v1417, %v1417
    %v1422 = vpack.c.b16 %v1418, %v1418
    %v1423 = vpack.c.b16 %v1419, %v1419
    %v1424 = vpack.c.b16 %v1420, %v1420
    %1429 = vst [vmem:[#allocation3 + $0x40] sm:$0xf] %v1421
    %1430 = vst [vmem:[#allocation3 + $0x44] sm:$0xf] %v1422
    %1431 = vst [vmem:[#allocation3 + $0x48] sm:$0xf] %v1423
    %1432 = vst [vmem:[#allocation3 + $0x4c] sm:$0xf] %v1424
    %v1433 = vsub.f32 %v1105, 8.0
    %v1434 = vsub.f32 %v1106, 8.0
    %v1435 = vsub.f32 %v1107, 8.0
    %v1436 = vsub.f32 %v1108, 8.0
    %v1437 = vmax.f32 %v1433, 0.0
    %v1438 = vmax.f32 %v1434, 0.0
    %v1439 = vmax.f32 %v1435, 0.0
    %v1440 = vmax.f32 %v1436, 0.0
    %v1441 = vmul.f32 %v1437, %v1437
    %v1442 = vmul.f32 %v1438, %v1438
    %v1443 = vmul.f32 %v1439, %v1439
    %v1444 = vmul.f32 %v1440, %v1440
    %v1445 = vmul.f32 %v1437, %v1441
    %v1446 = vmul.f32 %v1438, %v1442
    %v1447 = vmul.f32 %v1439, %v1443
    %v1448 = vmul.f32 %v1440, %v1444
    %v1449 = vsub.f32 %v1181, %v1333
    %v1450 = vsub.f32 %v1182, %v1334
    %v1451 = vsub.f32 %v1183, %v1335
    %v1452 = vsub.f32 %v1184, %v1336
    %v1453 = vmul.f32 %v1317, 6.0
    %v1454 = vmul.f32 %v1318, 6.0
    %v1455 = vmul.f32 %v1319, 6.0
    %v1456 = vmul.f32 %v1320, 6.0
    %v1457 = vadd.f32 %v1449, %v1453
    %v1458 = vadd.f32 %v1450, %v1454
    %v1459 = vadd.f32 %v1451, %v1455
    %v1460 = vadd.f32 %v1452, %v1456
    %v1461 = vmul.f32 %v1381, 4.0
    %v1462 = vmul.f32 %v1382, 4.0
    %v1463 = vmul.f32 %v1383, 4.0
    %v1464 = vmul.f32 %v1384, 4.0
    %v1465 = vsub.f32 %v1457, %v1461
    %v1466 = vsub.f32 %v1458, %v1462
    %v1467 = vsub.f32 %v1459, %v1463
    %v1468 = vsub.f32 %v1460, %v1464
    %v1469 = vadd.f32 %v1465, %v1445
    %v1470 = vadd.f32 %v1466, %v1446
    %v1471 = vadd.f32 %v1467, %v1447
    %v1472 = vadd.f32 %v1468, %v1448
    %v1473 = vmul.f32 %v1469, 0.16666667
    %v1474 = vmul.f32 %v1470, 0.16666667
    %v1475 = vmul.f32 %v1471, 0.16666667
    %v1476 = vmul.f32 %v1472, 0.16666667
    %v1477 = vpack.c.bf16 %v1474, %v1473
    %v1478 = vpack.c.bf16 %v1476, %v1475
    %v1481 = vunpack.c.l.b16 %v1477
    %v1482 = vunpack.c.h.b16 %v1477
    %v1483 = vunpack.c.l.b16 %v1478
    %v1484 = vunpack.c.h.b16 %v1478
    %v1485 = vpack.c.b16 %v1481, %v1481
    %v1486 = vpack.c.b16 %v1482, %v1482
    %v1487 = vpack.c.b16 %v1483, %v1483
    %v1488 = vpack.c.b16 %v1484, %v1484
    %1493 = vst [vmem:[#allocation3 + $0x50] sm:$0xf] %v1485
    %1494 = vst [vmem:[#allocation3 + $0x54] sm:$0xf] %v1486
    %1495 = vst [vmem:[#allocation3 + $0x58] sm:$0xf] %v1487
    %1496 = vst [vmem:[#allocation3 + $0x5c] sm:$0xf] %v1488
    %v1497 = vsub.f32 %v1105, 9.0
    %v1498 = vsub.f32 %v1106, 9.0
    %v1499 = vsub.f32 %v1107, 9.0
    %v1500 = vsub.f32 %v1108, 9.0
    %v1501 = vmax.f32 %v1497, 0.0
    %v1502 = vmax.f32 %v1498, 0.0
    %v1503 = vmax.f32 %v1499, 0.0
    %v1504 = vmax.f32 %v1500, 0.0
    %v1505 = vmul.f32 %v1501, %v1501
    %v1506 = vmul.f32 %v1502, %v1502
    %v1507 = vmul.f32 %v1503, %v1503
    %v1508 = vmul.f32 %v1504, %v1504
    %v1509 = vmul.f32 %v1501, %v1505
    %v1510 = vmul.f32 %v1502, %v1506
    %v1511 = vmul.f32 %v1503, %v1507
    %v1512 = vmul.f32 %v1504, %v1508
    %v1513 = vsub.f32 %v1249, %v1397
    %v1514 = vsub.f32 %v1250, %v1398
    %v1515 = vsub.f32 %v1251, %v1399
    %v1516 = vsub.f32 %v1252, %v1400
    %v1517 = vmul.f32 %v1381, 6.0
    %v1518 = vmul.f32 %v1382, 6.0
    %v1519 = vmul.f32 %v1383, 6.0
    %v1520 = vmul.f32 %v1384, 6.0
    %v1521 = vadd.f32 %v1513, %v1517
    %v1522 = vadd.f32 %v1514, %v1518
    %v1523 = vadd.f32 %v1515, %v1519
    %v1524 = vadd.f32 %v1516, %v1520
    %v1525 = vmul.f32 %v1445, 4.0
    %v1526 = vmul.f32 %v1446, 4.0
    %v1527 = vmul.f32 %v1447, 4.0
    %v1528 = vmul.f32 %v1448, 4.0
    %v1529 = vsub.f32 %v1521, %v1525
    %v1530 = vsub.f32 %v1522, %v1526
    %v1531 = vsub.f32 %v1523, %v1527
    %v1532 = vsub.f32 %v1524, %v1528
    %v1533 = vadd.f32 %v1529, %v1509
    %v1534 = vadd.f32 %v1530, %v1510
    %v1535 = vadd.f32 %v1531, %v1511
    %v1536 = vadd.f32 %v1532, %v1512
    %v1537 = vmul.f32 %v1533, 0.16666667
    %v1538 = vmul.f32 %v1534, 0.16666667
    %v1539 = vmul.f32 %v1535, 0.16666667
    %v1540 = vmul.f32 %v1536, 0.16666667
    %v1541 = vpack.c.bf16 %v1538, %v1537
    %v1542 = vpack.c.bf16 %v1540, %v1539
    %v1545 = vunpack.c.l.b16 %v1541
    %v1546 = vunpack.c.h.b16 %v1541
    %v1547 = vunpack.c.l.b16 %v1542
    %v1548 = vunpack.c.h.b16 %v1542
    %v1549 = vpack.c.b16 %v1545, %v1545
    %v1550 = vpack.c.b16 %v1546, %v1546
    %v1551 = vpack.c.b16 %v1547, %v1547
    %v1552 = vpack.c.b16 %v1548, %v1548
    %1557 = vst [vmem:[#allocation3 + $0x60] sm:$0xf] %v1549
    %1558 = vst [vmem:[#allocation3 + $0x64] sm:$0xf] %v1550
    %1559 = vst [vmem:[#allocation3 + $0x68] sm:$0xf] %v1551
    %1560 = vst [vmem:[#allocation3 + $0x6c] sm:$0xf] %v1552
    %v1561 = vsub.f32 %v1105, 10.0
    %v1562 = vsub.f32 %v1106, 10.0
    %v1563 = vsub.f32 %v1107, 10.0
    %v1564 = vsub.f32 %v1108, 10.0
    %v1565 = vmax.f32 %v1561, 0.0
    %v1566 = vmax.f32 %v1562, 0.0
    %v1567 = vmax.f32 %v1563, 0.0
    %v1568 = vmax.f32 %v1564, 0.0
    %v1569 = vmul.f32 %v1565, %v1565
    %v1570 = vmul.f32 %v1566, %v1566
    %v1571 = vmul.f32 %v1567, %v1567
    %v1572 = vmul.f32 %v1568, %v1568
    %v1573 = vmul.f32 %v1565, %v1569
    %v1574 = vmul.f32 %v1566, %v1570
    %v1575 = vmul.f32 %v1567, %v1571
    %v1576 = vmul.f32 %v1568, %v1572
    %v1577 = vsub.f32 %v1317, %v1461
    %v1578 = vsub.f32 %v1318, %v1462
    %v1579 = vsub.f32 %v1319, %v1463
    %v1580 = vsub.f32 %v1320, %v1464
    %v1581 = vmul.f32 %v1445, 6.0
    %v1582 = vmul.f32 %v1446, 6.0
    %v1583 = vmul.f32 %v1447, 6.0
    %v1584 = vmul.f32 %v1448, 6.0
    %v1585 = vadd.f32 %v1577, %v1581
    %v1586 = vadd.f32 %v1578, %v1582
    %v1587 = vadd.f32 %v1579, %v1583
    %v1588 = vadd.f32 %v1580, %v1584
    %v1589 = vmul.f32 %v1509, 4.0
    %v1590 = vmul.f32 %v1510, 4.0
    %v1591 = vmul.f32 %v1511, 4.0
    %v1592 = vmul.f32 %v1512, 4.0
    %v1593 = vsub.f32 %v1585, %v1589
    %v1594 = vsub.f32 %v1586, %v1590
    %v1595 = vsub.f32 %v1587, %v1591
    %v1596 = vsub.f32 %v1588, %v1592
    %v1597 = vadd.f32 %v1593, %v1573
    %v1598 = vadd.f32 %v1594, %v1574
    %v1599 = vadd.f32 %v1595, %v1575
    %v1600 = vadd.f32 %v1596, %v1576
    %v1601 = vmul.f32 %v1597, 0.16666667
    %v1602 = vmul.f32 %v1598, 0.16666667
    %v1603 = vmul.f32 %v1599, 0.16666667
    %v1604 = vmul.f32 %v1600, 0.16666667
    %v1605 = vpack.c.bf16 %v1602, %v1601
    %v1606 = vpack.c.bf16 %v1604, %v1603
    %v1609 = vunpack.c.l.b16 %v1605
    %v1610 = vunpack.c.h.b16 %v1605
    %v1611 = vunpack.c.l.b16 %v1606
    %v1612 = vunpack.c.h.b16 %v1606
    %v1613 = vpack.c.b16 %v1609, %v1609
    %v1614 = vpack.c.b16 %v1610, %v1610
    %v1615 = vpack.c.b16 %v1611, %v1611
    %v1616 = vpack.c.b16 %v1612, %v1612
    %1621 = vst [vmem:[#allocation3 + $0x70] sm:$0xf] %v1613
    %1622 = vst [vmem:[#allocation3 + $0x74] sm:$0xf] %v1614
    %1623 = vst [vmem:[#allocation3 + $0x78] sm:$0xf] %v1615
    %1624 = vst [vmem:[#allocation3 + $0x7c] sm:$0xf] %v1616
    %v1625 = vsub.f32 %v1105, 11.0
    %v1626 = vsub.f32 %v1106, 11.0
    %v1627 = vsub.f32 %v1107, 11.0
    %v1628 = vsub.f32 %v1108, 11.0
    %v1629 = vmax.f32 %v1625, 0.0
    %v1630 = vmax.f32 %v1626, 0.0
    %v1631 = vmax.f32 %v1627, 0.0
    %v1632 = vmax.f32 %v1628, 0.0
    %v1633 = vmul.f32 %v1629, %v1629
    %v1634 = vmul.f32 %v1630, %v1630
    %v1635 = vmul.f32 %v1631, %v1631
    %v1636 = vmul.f32 %v1632, %v1632
    %v1637 = vmul.f32 %v1629, %v1633
    %v1638 = vmul.f32 %v1630, %v1634
    %v1639 = vmul.f32 %v1631, %v1635
    %v1640 = vmul.f32 %v1632, %v1636
    %v1641 = vsub.f32 %v1381, %v1525
    %v1642 = vsub.f32 %v1382, %v1526
    %v1643 = vsub.f32 %v1383, %v1527
    %v1644 = vsub.f32 %v1384, %v1528
    %v1645 = vmul.f32 %v1509, 6.0
    %v1646 = vmul.f32 %v1510, 6.0
    %v1647 = vmul.f32 %v1511, 6.0
    %v1648 = vmul.f32 %v1512, 6.0
    %v1649 = vadd.f32 %v1641, %v1645
    %v1650 = vadd.f32 %v1642, %v1646
    %v1651 = vadd.f32 %v1643, %v1647
    %v1652 = vadd.f32 %v1644, %v1648
    %v1653 = vmul.f32 %v1573, 4.0
    %v1654 = vmul.f32 %v1574, 4.0
    %v1655 = vmul.f32 %v1575, 4.0
    %v1656 = vmul.f32 %v1576, 4.0
    %v1657 = vsub.f32 %v1649, %v1653
    %v1658 = vsub.f32 %v1650, %v1654
    %v1659 = vsub.f32 %v1651, %v1655
    %v1660 = vsub.f32 %v1652, %v1656
    %v1661 = vadd.f32 %v1657, %v1637
    %v1662 = vadd.f32 %v1658, %v1638
    %v1663 = vadd.f32 %v1659, %v1639
    %v1664 = vadd.f32 %v1660, %v1640
    %v1665 = vmul.f32 %v1661, 0.16666667
    %v1666 = vmul.f32 %v1662, 0.16666667
    %v1667 = vmul.f32 %v1663, 0.16666667
    %v1668 = vmul.f32 %v1664, 0.16666667
    %v1669 = vpack.c.bf16 %v1666, %v1665
    %v1670 = vpack.c.bf16 %v1668, %v1667
    %v1673 = vunpack.c.l.b16 %v1669
    %v1674 = vunpack.c.h.b16 %v1669
    %v1675 = vunpack.c.l.b16 %v1670
    %v1676 = vunpack.c.h.b16 %v1670
    %v1677 = vpack.c.b16 %v1673, %v1673
    %v1678 = vpack.c.b16 %v1674, %v1674
    %v1679 = vpack.c.b16 %v1675, %v1675
    %v1680 = vpack.c.b16 %v1676, %v1676
    %1685 = vst [vmem:[#allocation3 + $0x80] sm:$0xf] %v1677
    %1686 = vst [vmem:[#allocation3 + $0x84] sm:$0xf] %v1678
    %1687 = vst [vmem:[#allocation3 + $0x88] sm:$0xf] %v1679
    %1688 = vst [vmem:[#allocation3 + $0x8c] sm:$0xf] %v1680
    %v1689 = vld [vmem:[%s11] sm:$0xff]
    %v1690 = vld [vmem:[%s11 + $0x8] sm:$0xf]
    %v1691 = vld [vmem:[%s11 + $0xc] sm:$0xff]
    %v1692 = vld [vmem:[%s11 + $0x14] sm:$0xf]
    %v1693 = vld [vmem:[#allocation3] sm:$0xf]
    %v1694 = vld [vmem:[#allocation3 + $0x4] sm:$0xf]
    %v1695 = vld [vmem:[#allocation3 + $0x8] sm:$0xf]
    %v1696 = vld [vmem:[#allocation3 + $0xc] sm:$0xf]
    %v1697 = vld [vmem:[#allocation3 + $0x10] sm:$0xf]
    %v1698 = vld [vmem:[#allocation3 + $0x14] sm:$0xf]
    %v1699 = vld [vmem:[#allocation3 + $0x18] sm:$0xf]
    %v1700 = vld [vmem:[#allocation3 + $0x1c] sm:$0xf]
    %v1701 = vld [vmem:[#allocation3 + $0x20] sm:$0xf]
    %v1702 = vld [vmem:[#allocation3 + $0x24] sm:$0xf]
    %v1703 = vld [vmem:[#allocation3 + $0x28] sm:$0xf]
    %v1704 = vld [vmem:[#allocation3 + $0x2c] sm:$0xf]
    %v1705 = vld [vmem:[#allocation3 + $0x30] sm:$0xf]
    %v1706 = vld [vmem:[#allocation3 + $0x34] sm:$0xf]
    %v1707 = vld [vmem:[#allocation3 + $0x38] sm:$0xf]
    %v1708 = vld [vmem:[#allocation3 + $0x3c] sm:$0xf]
    %v1709 = vld [vmem:[#allocation3 + $0x40] sm:$0xf]
    %v1710 = vld [vmem:[#allocation3 + $0x44] sm:$0xf]
    %v1711 = vld [vmem:[#allocation3 + $0x48] sm:$0xf]
    %v1712 = vld [vmem:[#allocation3 + $0x4c] sm:$0xf]
    %v1713 = vld [vmem:[#allocation3 + $0x50] sm:$0xf]
    %v1714 = vld [vmem:[#allocation3 + $0x54] sm:$0xf]
    %v1715 = vld [vmem:[#allocation3 + $0x58] sm:$0xf]
    %v1716 = vld [vmem:[#allocation3 + $0x5c] sm:$0xf]
    %v1717 = vld [vmem:[#allocation3 + $0x60] sm:$0xf]
    %v1718 = vld [vmem:[#allocation3 + $0x64] sm:$0xf]
    %v1719 = vld [vmem:[#allocation3 + $0x68] sm:$0xf]
    %v1720 = vld [vmem:[#allocation3 + $0x6c] sm:$0xf]
    %v1721 = vld [vmem:[#allocation3 + $0x70] sm:$0xf]
    %v1722 = vld [vmem:[#allocation3 + $0x74] sm:$0xf]
    %v1723 = vld [vmem:[#allocation3 + $0x78] sm:$0xf]
    %v1724 = vld [vmem:[#allocation3 + $0x7c] sm:$0xf]
    %v1725 = vld [vmem:[#allocation3 + $0x80] sm:$0xf]
    %v1726 = vld [vmem:[#allocation3 + $0x84] sm:$0xf]
    %v1727 = vld [vmem:[#allocation3 + $0x88] sm:$0xf]
    %v1728 = vld [vmem:[#allocation3 + $0x8c] sm:$0xf]
    %v1733 = vunpack.c.l.b16 %v1689
    %v1734 = vunpack.c.h.b16 %v1689
    %v1735 = vunpack.c.l.b16 %v1690
    %v1736 = vunpack.c.l.b16 %v1691
    %v1737 = vunpack.c.h.b16 %v1691
    %v1738 = vunpack.c.l.b16 %v1692
    %v1739 = vpack.c.b16 %v1736, %v1733
    %v1740 = vpack.c.b16 %v1737, %v1734
    %v1741 = vpack.c.b16 %v1738, %v1735
    %v1780 = vunpack.c.l.b16 %v1693
    %v1781 = vunpack.c.l.b16 %v1694
    %v1782 = vunpack.c.l.b16 %v1695
    %v1783 = vunpack.c.l.b16 %v1696
    %v1784 = vunpack.c.l.b16 %v1697
    %v1785 = vunpack.c.l.b16 %v1698
    %v1786 = vunpack.c.l.b16 %v1699
    %v1787 = vunpack.c.l.b16 %v1700
    %v1788 = vunpack.c.l.b16 %v1701
    %v1789 = vunpack.c.l.b16 %v1702
    %v1790 = vunpack.c.l.b16 %v1703
    %v1791 = vunpack.c.l.b16 %v1704
    %v1792 = vunpack.c.l.b16 %v1705
    %v1793 = vunpack.c.l.b16 %v1706
    %v1794 = vunpack.c.l.b16 %v1707
    %v1795 = vunpack.c.l.b16 %v1708
    %v1796 = vunpack.c.l.b16 %v1709
    %v1797 = vunpack.c.l.b16 %v1710
    %v1798 = vunpack.c.l.b16 %v1711
    %v1799 = vunpack.c.l.b16 %v1712
    %v1800 = vunpack.c.l.b16 %v1713
    %v1801 = vunpack.c.l.b16 %v1714
    %v1802 = vunpack.c.l.b16 %v1715
    %v1803 = vunpack.c.l.b16 %v1716
    %v1804 = vunpack.c.l.b16 %v1717
    %v1805 = vunpack.c.l.b16 %v1718
    %v1806 = vunpack.c.l.b16 %v1719
    %v1807 = vunpack.c.l.b16 %v1720
    %v1808 = vunpack.c.l.b16 %v1721
    %v1809 = vunpack.c.l.b16 %v1722
    %v1810 = vunpack.c.l.b16 %v1723
    %v1811 = vunpack.c.l.b16 %v1724
    %v1812 = vunpack.c.l.b16 %v1725
    %v1813 = vunpack.c.l.b16 %v1726
    %v1814 = vunpack.c.l.b16 %v1727
    %v1815 = vunpack.c.l.b16 %v1728
    %v1816 = vpack.c.b16 %v1781, %v1780
    %v1817 = vpack.c.b16 %v1783, %v1782
    %v1818 = vpack.c.b16 %v1785, %v1784
    %v1819 = vpack.c.b16 %v1787, %v1786
    %v1820 = vpack.c.b16 %v1789, %v1788
    %v1821 = vpack.c.b16 %v1791, %v1790
    %v1822 = vpack.c.b16 %v1793, %v1792
    %v1823 = vpack.c.b16 %v1795, %v1794
    %v1824 = vpack.c.b16 %v1797, %v1796
    %v1825 = vpack.c.b16 %v1799, %v1798
    %v1826 = vpack.c.b16 %v1801, %v1800
    %v1827 = vpack.c.b16 %v1803, %v1802
    %v1828 = vpack.c.b16 %v1805, %v1804
    %v1829 = vpack.c.b16 %v1807, %v1806
    %v1830 = vpack.c.b16 %v1809, %v1808
    %v1831 = vpack.c.b16 %v1811, %v1810
    %v1832 = vpack.c.b16 %v1813, %v1812
    %v1833 = vpack.c.b16 %v1815, %v1814
    %v1853 = vsel %vm372, %v1741, 0
    %1855 = vmatprep.subr.bf16.mxu0 0
    %1856 = vmatpush1.bf16.msra.mxu0 %v1823
    %1857 = vmatprep.subr.bf16.mxu0 0
    %1858 = vmatpush1.bf16.msra.mxu0 %v1822
    %1859 = vmatprep.subr.bf16.mxu0 0
    %1860 = vmatpush1.bf16.msra.mxu0 %v1821
    %1861 = vmatprep.subr.bf16.mxu0 0
    %1862 = vmatpush1.bf16.msra.mxu0 %v1820
    %1863 = vmatprep.subr.bf16.mxu0 0
    %1864 = vmatpush1.bf16.msra.mxu0 %v1819
    %1865 = vmatprep.subr.bf16.mxu0 0
    %1866 = vmatpush1.bf16.msra.mxu0 %v1818
    %1867 = vmatprep.subr.bf16.mxu0 0
    %1868 = vmatpush1.bf16.msra.mxu0 %v1817
    %1869 = vmatprep.subr.bf16.mxu0 0
    %1870 = vmatpush1.bf16.msra.mxu0 %v1816
    %1871 = vmatprep.subr.bf16.mxu0 0
    %1872 = vmatpush2.bf16.msra.mxu0 %v1831
    %1873 = vmatprep.subr.bf16.mxu0 0
    %1874 = vmatpush2.bf16.msra.mxu0 %v1830
    %1875 = vmatprep.subr.bf16.mxu0 0
    %1876 = vmatpush2.bf16.msra.mxu0 %v1829
    %1877 = vmatprep.subr.bf16.mxu0 0
    %1878 = vmatpush2.bf16.msra.mxu0 %v1828
    %1879 = vmatprep.subr.bf16.mxu0 0
    %1880 = vmatpush2.bf16.msra.mxu0 %v1827
    %1881 = vmatprep.subr.bf16.mxu0 0
    %1882 = vmatpush2.bf16.msra.mxu0 %v1826
    %1883 = vmatprep.subr.bf16.mxu0 0
    %1884 = vmatpush2.bf16.msra.mxu0 %v1825
    %1885 = vmatprep.subr.bf16.mxu0 0
    %1886 = vmatpush2.bf16.msra.mxu0 %v1824
    %1887 = vmatprep.mubr.bf16.mxu0 %v1740
    %1888 = vmatmul.mubr.bf16.gmra.mxu0 %v1739
    %v1889 = vpop.f32.mrf.mxu0
    %v1890 = vadd.f32 0.0, %v1889
    %v1891 = vpop.f32.mrf.mxu0
    %v1892 = vpop.f32.mrf.mxu0
    %v1893 = vadd.f32 0.0, %v1892
    %v1894 = vpop.f32.mrf.mxu0
    %1895 = vdwg.mxu0
    %1896 = vmatprep.subr.bf16.mxu0 0
    %1897 = vmatpush1.bf16.msra.mxu0 0
    %1898 = vmatprep.subr.bf16.mxu0 0
    %1899 = vmatpush1.bf16.msra.mxu0 0
    %1900 = vmatprep.subr.bf16.mxu0 0
    %1901 = vmatpush1.bf16.msra.mxu0 0
    %1902 = vmatprep.subr.bf16.mxu0 0
    %1903 = vmatpush1.bf16.msra.mxu0 0
    %1904 = vmatprep.subr.bf16.mxu0 0
    %1905 = vmatpush1.bf16.msra.mxu0 0
    %1906 = vmatprep.subr.bf16.mxu0 0
    %1907 = vmatpush1.bf16.msra.mxu0 0
    %1908 = vmatprep.subr.bf16.mxu0 0
    %1909 = vmatpush1.bf16.msra.mxu0 %v1833
    %1910 = vmatprep.subr.bf16.mxu0 0
    %1911 = vmatpush1.bf16.msra.mxu0 %v1832
    %1912 = vmatprep.subr.bf16.mxu0 0
    %1913 = vmatpush2.bf16.msra.mxu0 0
    %1914 = vmatprep.subr.bf16.mxu0 0
    %1915 = vmatpush2.bf16.msra.mxu0 0
    %1916 = vmatprep.subr.bf16.mxu0 0
    %1917 = vmatpush2.bf16.msra.mxu0 0
    %1918 = vmatprep.subr.bf16.mxu0 0
    %1919 = vmatpush2.bf16.msra.mxu0 0
    %1920 = vmatprep.subr.bf16.mxu0 0
    %1921 = vmatpush2.bf16.msra.mxu0 0
    %1922 = vmatprep.subr.bf16.mxu0 0
    %1923 = vmatpush2.bf16.msra.mxu0 0
    %1924 = vmatprep.subr.bf16.mxu0 0
    %1925 = vmatpush2.bf16.msra.mxu0 0
    %1926 = vmatprep.subr.bf16.mxu0 0
    %1927 = vmatpush2.bf16.msra.mxu0 0
    %1928 = vmatprep.mubr.bf16.mxu0 0
    %1929 = vmatmul.mubr.bf16.gmra.mxu0 %v1853
    %v1930 = vpop.f32.mrf.mxu0
    %v1931 = vadd.f32 %v1890, %v1930
    %v1932 = vpop.f32.mrf.mxu0
    %v1933 = vpop.f32.mrf.mxu0
    %v1934 = vadd.f32 %v1893, %v1933
    %v1935 = vpop.f32.mrf.mxu0
    %1936 = vdwg.mxu0
    %v1937 = vadd.f32 %v57, %v1931
    %v1938 = vadd.f32 %v58, %v1934
    %1939 = vst [vmem:[#allocation7] sm:$0xff] %v1937
    %1940 = vst [vmem:[#allocation7 + $0x8] sm:$0xff] %v1938
    // Predicated region
    $region54: #{tpu_custom_call.1} parent=1 // pred_check
      _
    $region55: #{tpu_custom_call.1} parent=1 // pred_check_branch
      %1942 = sbr.rel (0) target = $region57
    $region56: #{tpu_custom_call.1} parent=1 // pred_region
      %s1944 = ssub.s32 256, 256
      %1945 = vsyncadd [#allocation6], %s1944
      %s1946 = sshll.u32 [#allocation7], 4
      %s1947 = int_to_ptr.vmem [resolvable:$true] %s1946
      %1952 = dma.vmem_to_hbm [thread:$0]  %s1947, 256, %s12, [#allocation6], 128, 128, 8
    $region57: #{tpu_custom_call.1} parent=1 // pred_fallthru
      _
    // Predicated region
    $region58: #{tpu_custom_call.1} parent=1 // pred_check
      _
    $region59: #{tpu_custom_call.1} parent=1 // pred_check_branch
      %1954 = sbr.rel (0) target = $region61
    $region60: #{tpu_custom_call.1} parent=1 // pred_region
      %1955 = dma.done [#allocation6], 256
    $region61: #{tpu_custom_call.1} parent=1 // pred_fallthru
      _
    %1956 = vsyncpa [#allocation5], 1
    %1957 = vsyncpa [#allocation6], 1

// kernel: tpu_custom_call.1
$region0: #{tpu_custom_call.1}
  #allocation0 [shape = 'u32[]', space=smem, size = 0x4, offset = 0x4, fixed_abs, tag = 'smem constant byte address 0x4 - core index']
  #allocation1 [shape = 'u32[144,128]{1,0:T(1,128)}', space=vmem, size = 0x12000, scoped, tag = 'internal scratch']
  #allocation2 [shape = 'bf16[144,128]{1,0:T(8,128)(2,1)}', space=vmem, size = 0x9000, scoped, tag = 'scratch operand']
  #allocation3 [shape = 'bf16[288,128]{1,0:T(8,128)(2,1)}', space=vmem, size = 0x12000, scoped, tag = 'scratch operand']
  %s0 = inlined_call_operand.hbm [shape: f32[1,16,128], index: 0, kind: input, shape index: {}]
  %s1 = inlined_call_operand.vmem [shape: f32[16,1], index: 1, kind: input, shape index: {}]
  %s2 = inlined_call_operand.vmem [shape: f32[16,1], index: 2, kind: input, shape index: {}]
  %s3 = inlined_call_operand.vmem [shape: f32[16,1], index: 3, kind: input, shape index: {}]
  %s4 = inlined_call_operand.vmem [shape: f32[16,1], index: 4, kind: input, shape index: {}]
  %s5 = inlined_call_operand.vmem [shape: bf16[128,160], index: 5, kind: input, shape index: {}]
  %s6 = inlined_call_operand.vmem [shape: bf16[160,128], index: 6, kind: input, shape index: {}]
  %s7 = inlined_call_operand.vmem [shape: bf16[160,128], index: 7, kind: input, shape index: {}]
  %s8 = inlined_call_operand.vmem [shape: f32[16,160], index: 8, kind: input, shape index: {}]
  %s9 = inlined_call_operand.vmem [shape: f32[16,160], index: 9, kind: input, shape index: {}]
  %s10 = inlined_call_operand.vmem [shape: bf16[32,144], index: 10, kind: input, shape index: {}]
  %s11 = inlined_call_operand.vmem [shape: bf16[16,288], index: 11, kind: input, shape index: {}]
  %s12 = inlined_call_operand.hbm [shape: f32[1,16,128], index: 12, kind: output, shape index: {}]
  %s13 = sld [smem:[#allocation0]]
  $region62: #{tpu_custom_call.1} parent=0
    _
  %s15 = ssub.s32 1, %s13
  %s16 = scalar_select 0, %s15, %s13
  $region1: #{tpu_custom_call.1} parent=0
    #allocation4 [shape = 'u8[8192]{0}', space=vmem, size = 0x2000, scoped, tag = 'input window, operand 0, single buffered']
    #allocation5 [shape = 's32[1]{0}', space=sflag, size = 0x4, scoped, tag = 'scoped memory for tpu_custom_call.1']
    #allocation6 [shape = 's32[1]{0}', space=sflag, size = 0x4, scoped, tag = 'scoped memory for tpu_custom_call.1']
    #allocation7 [shape = 'u8[8192]{0}', space=vmem, size = 0x2000, scoped, tag = 'output window, operand 0, single buffered']
    %17 = vsyncpa [#allocation5], 0
    %18 = vsyncpa [#allocation6], 0
    // Predicated region
    $region2: #{tpu_custom_call.1} parent=1 // pred_check
      _
    $region3: #{tpu_custom_call.1} parent=1 // pred_check_branch
      %20 = sbr.rel (0) target = $region5
    $region4: #{tpu_custom_call.1} parent=1 // pred_region
      %s22 = ssub.s32 256, 256
      %23 = vsyncadd [#allocation5], %s22
      %s24 = sshll.u32 [#allocation4], 4
      %s25 = int_to_ptr.vmem [resolvable:$true] %s24
      %30 = dma.hbm_to_vmem [thread:$0]  %s0, 256, %s25, [#allocation5], 128, 128, 8
    $region5: #{tpu_custom_call.1} parent=1 // pred_fallthru
      _
    // Predicated region
    $region6: #{tpu_custom_call.1} parent=1 // pred_check
      _
    $region7: #{tpu_custom_call.1} parent=1 // pred_check_branch
      %32 = sbr.rel (0) target = $region9
    $region8: #{tpu_custom_call.1} parent=1 // pred_region
      _
    $region9: #{tpu_custom_call.1} parent=1 // pred_fallthru
      _
    // Predicated region
    $region10: #{tpu_custom_call.1} parent=1 // pred_check
      _
    $region11: #{tpu_custom_call.1} parent=1 // pred_check_branch
      %34 = sbr.rel (0) target = $region13
    $region12: #{tpu_custom_call.1} parent=1 // pred_region
      _
    $region13: #{tpu_custom_call.1} parent=1 // pred_fallthru
      _
    // Predicated region
    $region14: #{tpu_custom_call.1} parent=1 // pred_check
      _
    $region15: #{tpu_custom_call.1} parent=1 // pred_check_branch
      %36 = sbr.rel (0) target = $region17
    $region16: #{tpu_custom_call.1} parent=1 // pred_region
      _
    $region17: #{tpu_custom_call.1} parent=1 // pred_fallthru
      _
    // Predicated region
    $region18: #{tpu_custom_call.1} parent=1 // pred_check
      _
    $region19: #{tpu_custom_call.1} parent=1 // pred_check_branch
      %38 = sbr.rel (0) target = $region21
    $region20: #{tpu_custom_call.1} parent=1 // pred_region
      _
    $region21: #{tpu_custom_call.1} parent=1 // pred_fallthru
      _
    // Predicated region
    $region22: #{tpu_custom_call.1} parent=1 // pred_check
      _
    $region23: #{tpu_custom_call.1} parent=1 // pred_check_branch
      %40 = sbr.rel (0) target = $region25
    $region24: #{tpu_custom_call.1} parent=1 // pred_region
      _
    $region25: #{tpu_custom_call.1} parent=1 // pred_fallthru
      _
    // Predicated region
    $region26: #{tpu_custom_call.1} parent=1 // pred_check
      _
    $region27: #{tpu_custom_call.1} parent=1 // pred_check_branch
      %42 = sbr.rel (0) target = $region29
    $region28: #{tpu_custom_call.1} parent=1 // pred_region
      _
    $region29: #{tpu_custom_call.1} parent=1 // pred_fallthru
      _
    // Predicated region
    $region30: #{tpu_custom_call.1} parent=1 // pred_check
      _
    $region31: #{tpu_custom_call.1} parent=1 // pred_check_branch
      %44 = sbr.rel (0) target = $region33
    $region32: #{tpu_custom_call.1} parent=1 // pred_region
      _
    $region33: #{tpu_custom_call.1} parent=1 // pred_fallthru
      _
    // Predicated region
    $region34: #{tpu_custom_call.1} parent=1 // pred_check
      _
    $region35: #{tpu_custom_call.1} parent=1 // pred_check_branch
      %46 = sbr.rel (0) target = $region37
    $region36: #{tpu_custom_call.1} parent=1 // pred_region
      _
    $region37: #{tpu_custom_call.1} parent=1 // pred_fallthru
      _
    // Predicated region
    $region38: #{tpu_custom_call.1} parent=1 // pred_check
      _
    $region39: #{tpu_custom_call.1} parent=1 // pred_check_branch
      %48 = sbr.rel (0) target = $region41
    $region40: #{tpu_custom_call.1} parent=1 // pred_region
      _
    $region41: #{tpu_custom_call.1} parent=1 // pred_fallthru
      _
    // Predicated region
    $region42: #{tpu_custom_call.1} parent=1 // pred_check
      _
    $region43: #{tpu_custom_call.1} parent=1 // pred_check_branch
      %50 = sbr.rel (0) target = $region45
    $region44: #{tpu_custom_call.1} parent=1 // pred_region
      _
    $region45: #{tpu_custom_call.1} parent=1 // pred_fallthru
      _
    // Predicated region
    $region46: #{tpu_custom_call.1} parent=1 // pred_check
      _
    $region47: #{tpu_custom_call.1} parent=1 // pred_check_branch
      %52 = sbr.rel (0) target = $region49
    $region48: #{tpu_custom_call.1} parent=1 // pred_region
      _
    $region49: #{tpu_custom_call.1} parent=1 // pred_fallthru
      _
    // Predicated region
    $region50: #{tpu_custom_call.1} parent=1 // pred_check
      _
    $region51: #{tpu_custom_call.1} parent=1 // pred_check_branch
      %54 = sbr.rel (0) target = $region53
    $region52: #{tpu_custom_call.1} parent=1 // pred_region
      %55 = dma.done [#allocation5], 256
    $region53: #{tpu_custom_call.1} parent=1 // pred_fallthru
      _
    %v57 = vld [vmem:[#allocation4] sm:$0xff]
    %v58 = vld [vmem:[#allocation4 + $0x8] sm:$0xff]
    %v59 = vld [vmem:[%s1] sm:$0xff]
    %v60 = vld [vmem:[%s1 + $0x8] sm:$0xff]
    %v61 = vld [vmem:[%s2] sm:$0xff]
    %v62 = vld [vmem:[%s2 + $0x8] sm:$0xff]
    %v63 = vadd.f32 %v57, %v58
    %v64 = vrot.slane %v63, 4
    %v65 = vadd.f32 %v63, %v64
    %v66 = vrot.slane %v65, 2
    %v67 = vadd.f32 %v65, %v66
    %v68 = vrot.slane %v67, 1
    %v69 = vadd.f32 %v67, %v68
    %v70 = vrcp.pop 16.0
    %v71 = vmul.f32 %v69, %v70
    %v72 = vsub.f32 %v57, %v71
    %v73 = vsub.f32 %v58, %v71
    %v74 = vmul.f32 %v72, %v72
    %v75 = vmul.f32 %v73, %v73
    %v76 = vadd.f32 %v74, %v75
    %v77 = vrot.slane %v76, 4
    %v78 = vadd.f32 %v76, %v77
    %v79 = vrot.slane %v78, 2
    %v80 = vadd.f32 %v78, %v79
    %v81 = vrot.slane %v80, 1
    %v82 = vadd.f32 %v80, %v81
    %v83 = vmul.f32 %v82, %v70
    %v84 = vadd.f32 %v83, 1e-05
    %v85 = vrsqrt.pop %v84
    %v86 = vmul.f32 %v72, %v85
    %v87 = vmul.f32 %v73, %v85
    %89 = vset.pattern.permute.xlu0 0
    %90 = vperm.xlu0 %89, %v59
    %v91 = vpop.permute.xlu0 %90
    %94 = vset.pattern.permute.xlu0 0
    %95 = vperm.xlu0 %94, %v60
    %v96 = vpop.permute.xlu0 %95
    %v98 = vmul.f32 %v86, %v91
    %v99 = vmul.f32 %v87, %v96
    %101 = vset.pattern.permute.xlu0 0
    %102 = vperm.xlu0 %101, %v61
    %v103 = vpop.permute.xlu0 %102
    %106 = vset.pattern.permute.xlu0 0
    %107 = vperm.xlu0 %106, %v62
    %v108 = vpop.permute.xlu0 %107
    %v110 = vadd.f32 %v98, %v103
    %v111 = vadd.f32 %v99, %v108
    %v112 = vpack.c.bf16 %v111, %v110
    %v113 = vld [vmem:[%s5] sm:$0xff]
    %v114 = vld [vmem:[%s5 + $0x8] sm:$0xff]
    %v115 = vld [vmem:[%s5 + $0x10] sm:$0xff]
    %v116 = vld [vmem:[%s5 + $0x18] sm:$0xff]
    %v117 = vld [vmem:[%s5 + $0x20] sm:$0xff]
    %v118 = vld [vmem:[%s5 + $0x28] sm:$0xff]
    %v119 = vld [vmem:[%s5 + $0x30] sm:$0xff]
    %v120 = vld [vmem:[%s5 + $0x38] sm:$0xff]
    %v121 = vld [vmem:[%s5 + $0x40] sm:$0xff]
    %v122 = vld [vmem:[%s5 + $0x48] sm:$0xff]
    %v123 = vld [vmem:[%s5 + $0x50] sm:$0xff]
    %v124 = vld [vmem:[%s5 + $0x58] sm:$0xff]
    %v125 = vld [vmem:[%s5 + $0x60] sm:$0xff]
    %v126 = vld [vmem:[%s5 + $0x68] sm:$0xff]
    %v127 = vld [vmem:[%s5 + $0x70] sm:$0xff]
    %v128 = vld [vmem:[%s5 + $0x78] sm:$0xff]
    %v145 = vunpack.c.l.b16 %v113
    %v146 = vunpack.c.h.b16 %v113
    %v147 = vunpack.c.l.b16 %v114
    %v148 = vunpack.c.h.b16 %v114
    %v149 = vunpack.c.l.b16 %v115
    %v150 = vunpack.c.h.b16 %v115
    %v151 = vunpack.c.l.b16 %v116
    %v152 = vunpack.c.h.b16 %v116
    %v153 = vunpack.c.l.b16 %v117
    %v154 = vunpack.c.h.b16 %v117
    %v155 = vunpack.c.l.b16 %v118
    %v156 = vunpack.c.h.b16 %v118
    %v157 = vunpack.c.l.b16 %v119
    %v158 = vunpack.c.h.b16 %v119
    %v159 = vunpack.c.l.b16 %v120
    %v160 = vunpack.c.h.b16 %v120
    %v161 = vunpack.c.l.b16 %v121
    %v162 = vunpack.c.h.b16 %v121
    %v163 = vunpack.c.l.b16 %v122
    %v164 = vunpack.c.h.b16 %v122
    %v165 = vunpack.c.l.b16 %v123
    %v166 = vunpack.c.h.b16 %v123
    %v167 = vunpack.c.l.b16 %v124
    %v168 = vunpack.c.h.b16 %v124
    %v169 = vunpack.c.l.b16 %v125
    %v170 = vunpack.c.h.b16 %v125
    %v171 = vunpack.c.l.b16 %v126
    %v172 = vunpack.c.h.b16 %v126
    %v173 = vunpack.c.l.b16 %v127
    %v174 = vunpack.c.h.b16 %v127
    %v175 = vunpack.c.l.b16 %v128
    %v176 = vunpack.c.h.b16 %v128
    %v177 = vpack.c.b16 %v147, %v145
    %v178 = vpack.c.b16 %v148, %v146
    %v179 = vpack.c.b16 %v151, %v149
    %v180 = vpack.c.b16 %v152, %v150
    %v181 = vpack.c.b16 %v155, %v153
    %v182 = vpack.c.b16 %v156, %v154
    %v183 = vpack.c.b16 %v159, %v157
    %v184 = vpack.c.b16 %v160, %v158
    %v185 = vpack.c.b16 %v163, %v161
    %v186 = vpack.c.b16 %v164, %v162
    %v187 = vpack.c.b16 %v167, %v165
    %v188 = vpack.c.b16 %v168, %v166
    %v189 = vpack.c.b16 %v171, %v169
    %v190 = vpack.c.b16 %v172, %v170
    %v191 = vpack.c.b16 %v175, %v173
    %v192 = vpack.c.b16 %v176, %v174
    %209 = vmatprep.subr.bf16.mxu0 %v192
    %210 = vmatpush1.bf16.msra.mxu0 %v191
    %211 = vmatprep.subr.bf16.mxu0 %v190
    %212 = vmatpush1.bf16.msra.mxu0 %v189
    %213 = vmatprep.subr.bf16.mxu0 %v188
    %214 = vmatpush1.bf16.msra.mxu0 %v187
    %215 = vmatprep.subr.bf16.mxu0 %v186
    %216 = vmatpush1.bf16.msra.mxu0 %v185
    %217 = vmatprep.subr.bf16.mxu0 %v184
    %218 = vmatpush1.bf16.msra.mxu0 %v183
    %219 = vmatprep.subr.bf16.mxu0 %v182
    %220 = vmatpush1.bf16.msra.mxu0 %v181
    %221 = vmatprep.subr.bf16.mxu0 %v180
    %222 = vmatpush1.bf16.msra.mxu0 %v179
    %223 = vmatprep.subr.bf16.mxu0 %v178
    %224 = vmatpush1.bf16.msra.mxu0 %v177
    %225 = vmatprep.subr.bf16.mxu0 0
    %226 = vmatpush2.bf16.msra.mxu0 0
    %227 = vmatprep.subr.bf16.mxu0 0
    %228 = vmatpush2.bf16.msra.mxu0 0
    %229 = vmatprep.subr.bf16.mxu0 0
    %230 = vmatpush2.bf16.msra.mxu0 0
    %231 = vmatprep.subr.bf16.mxu0 0
    %232 = vmatpush2.bf16.msra.mxu0 0
    %233 = vmatprep.subr.bf16.mxu0 0
    %234 = vmatpush2.bf16.msra.mxu0 0
    %235 = vmatprep.subr.bf16.mxu0 0
    %236 = vmatpush2.bf16.msra.mxu0 0
    %237 = vmatprep.subr.bf16.mxu0 0
    %238 = vmatpush2.bf16.msra.mxu0 0
    %239 = vmatprep.subr.bf16.mxu0 0
    %240 = vmatpush2.bf16.msra.mxu0 0
    %241 = vmatprep.mubr.bf16.mxu0 0
    %242 = vmatmul.mubr.bf16.gmra.mxu0 %v112
    %v243 = vpop.f32.mrf.mxu0
    %v244 = vadd.f32 0.0, %v243
    %v245 = vpop.f32.mrf.mxu0
    %v246 = vadd.f32 0.0, %v245
    %v247 = vpop.f32.mrf.mxu0
    %v248 = vadd.f32 0.0, %v247
    %v249 = vpop.f32.mrf.mxu0
    %v250 = vadd.f32 0.0, %v249
    %251 = vdwg.mxu0
    %v252 = vld [vmem:[%s8] sm:$0xff]
    %v253 = vld [vmem:[%s8 + $0x8] sm:$0xff]
    %v254 = vld [vmem:[%s8 + $0x10] sm:$0xff]
    %v255 = vld [vmem:[%s8 + $0x18] sm:$0xff]
    %v256 = vmul.f32 %v244, %v252
    %v257 = vmul.f32 %v246, %v253
    %v258 = vmul.f32 %v248, %v254
    %v259 = vmul.f32 %v250, %v255
    %v260 = vpack.c.bf16 %v258, %v256
    %v261 = vpack.c.bf16 %v259, %v257
    %v262 = vld [vmem:[%s9] sm:$0xff]
    %v263 = vld [vmem:[%s9 + $0x8] sm:$0xff]
    %v264 = vld [vmem:[%s9 + $0x10] sm:$0xff]
    %v265 = vld [vmem:[%s9 + $0x18] sm:$0xff]
    %v266 = vmul.f32 %v244, %v262
    %v267 = vmul.f32 %v246, %v263
    %v268 = vmul.f32 %v248, %v264
    %v269 = vmul.f32 %v250, %v265
    %v270 = vpack.c.bf16 %v268, %v266
    %v271 = vpack.c.bf16 %v269, %v267
    %v272 = vld [vmem:[%s6] sm:$0xf]
    %v273 = vld [vmem:[%s6 + $0x4] sm:$0xf]
    %v274 = vld [vmem:[%s6 + $0x8] sm:$0xf]
    %v275 = vld [vmem:[%s6 + $0xc] sm:$0xf]
    %v276 = vld [vmem:[%s6 + $0x10] sm:$0xf]
    %v277 = vld [vmem:[%s6 + $0x14] sm:$0xf]
    %v278 = vld [vmem:[%s6 + $0x18] sm:$0xf]
    %v279 = vld [vmem:[%s6 + $0x1c] sm:$0xf]
    %v280 = vld [vmem:[%s6 + $0x20] sm:$0xf]
    %v281 = vld [vmem:[%s6 + $0x24] sm:$0xf]
    %v282 = vld [vmem:[%s6 + $0x28] sm:$0xf]
    %v283 = vld [vmem:[%s6 + $0x2c] sm:$0xf]
    %v284 = vld [vmem:[%s6 + $0x30] sm:$0xf]
    %v285 = vld [vmem:[%s6 + $0x34] sm:$0xf]
    %v286 = vld [vmem:[%s6 + $0x38] sm:$0xf]
    %v287 = vld [vmem:[%s6 + $0x3c] sm:$0xf]
    %v288 = vld [vmem:[%s6 + $0x40] sm:$0xf]
    %v289 = vld [vmem:[%s6 + $0x44] sm:$0xf]
    %v290 = vld [vmem:[%s6 + $0x48] sm:$0xf]
    %v291 = vld [vmem:[%s6 + $0x4c] sm:$0xf]
    %v292 = vld [vmem:[%s7] sm:$0xf]
    %v293 = vld [vmem:[%s7 + $0x4] sm:$0xf]
    %v294 = vld [vmem:[%s7 + $0x8] sm:$0xf]
    %v295 = vld [vmem:[%s7 + $0xc] sm:$0xf]
    %v296 = vld [vmem:[%s7 + $0x10] sm:$0xf]
    %v297 = vld [vmem:[%s7 + $0x14] sm:$0xf]
    %v298 = vld [vmem:[%s7 + $0x18] sm:$0xf]
    %v299 = vld [vmem:[%s7 + $0x1c] sm:$0xf]
    %v300 = vld [vmem:[%s7 + $0x20] sm:$0xf]
    %v301 = vld [vmem:[%s7 + $0x24] sm:$0xf]
    %v302 = vld [vmem:[%s7 + $0x28] sm:$0xf]
    %v303 = vld [vmem:[%s7 + $0x2c] sm:$0xf]
    %v304 = vld [vmem:[%s7 + $0x30] sm:$0xf]
    %v305 = vld [vmem:[%s7 + $0x34] sm:$0xf]
    %v306 = vld [vmem:[%s7 + $0x38] sm:$0xf]
    %v307 = vld [vmem:[%s7 + $0x3c] sm:$0xf]
    %v308 = vld [vmem:[%s7 + $0x40] sm:$0xf]
    %v309 = vld [vmem:[%s7 + $0x44] sm:$0xf]
    %v310 = vld [vmem:[%s7 + $0x48] sm:$0xf]
    %v311 = vld [vmem:[%s7 + $0x4c] sm:$0xf]
    %v332 = vunpack.c.l.b16 %v292
    %v333 = vunpack.c.l.b16 %v293
    %v334 = vunpack.c.l.b16 %v294
    %v335 = vunpack.c.l.b16 %v295
    %v336 = vunpack.c.l.b16 %v296
    %v337 = vunpack.c.l.b16 %v297
    %v338 = vunpack.c.l.b16 %v298
    %v339 = vunpack.c.l.b16 %v299
    %v340 = vunpack.c.l.b16 %v300
    %v341 = vunpack.c.l.b16 %v301
    %v342 = vunpack.c.l.b16 %v302
    %v343 = vunpack.c.l.b16 %v303
    %v344 = vunpack.c.l.b16 %v304
    %v345 = vunpack.c.l.b16 %v305
    %v346 = vunpack.c.l.b16 %v306
    %v347 = vunpack.c.l.b16 %v307
    %v348 = vunpack.c.l.b16 %v308
    %v349 = vunpack.c.l.b16 %v309
    %v350 = vunpack.c.l.b16 %v310
    %v351 = vunpack.c.l.b16 %v311
    %v352 = vpack.c.b16 %v333, %v332
    %v353 = vpack.c.b16 %v335, %v334
    %v354 = vpack.c.b16 %v337, %v336
    %v355 = vpack.c.b16 %v339, %v338
    %v356 = vpack.c.b16 %v341, %v340
    %v357 = vpack.c.b16 %v343, %v342
    %v358 = vpack.c.b16 %v345, %v344
    %v359 = vpack.c.b16 %v347, %v346
    %v360 = vpack.c.b16 %v349, %v348
    %v361 = vpack.c.b16 %v351, %v350
    %vm372 = vcmask 261120
    %v374 = vsel %vm372, %v271, 0
    %376 = vmatprep.subr.bf16.mxu0 0
    %377 = vmatpush1.bf16.msra.mxu0 %v359
    %378 = vmatprep.subr.bf16.mxu0 0
    %379 = vmatpush1.bf16.msra.mxu0 %v358
    %380 = vmatprep.subr.bf16.mxu0 0
    %381 = vmatpush1.bf16.msra.mxu0 %v357
    %382 = vmatprep.subr.bf16.mxu0 0
    %383 = vmatpush1.bf16.msra.mxu0 %v356
    %384 = vmatprep.subr.bf16.mxu0 0
    %385 = vmatpush1.bf16.msra.mxu0 %v355
    %386 = vmatprep.subr.bf16.mxu0 0
    %387 = vmatpush1.bf16.msra.mxu0 %v354
    %388 = vmatprep.subr.bf16.mxu0 0
    %389 = vmatpush1.bf16.msra.mxu0 %v353
    %390 = vmatprep.subr.bf16.mxu0 0
    %391 = vmatpush1.bf16.msra.mxu0 %v352
    %392 = vmatprep.subr.bf16.mxu0 0
    %393 = vmatpush2.bf16.msra.mxu0 0
    %394 = vmatprep.subr.bf16.mxu0 0
    %395 = vmatpush2.bf16.msra.mxu0 0
    %396 = vmatprep.subr.bf16.mxu0 0
    %397 = vmatpush2.bf16.msra.mxu0 0
    %398 = vmatprep.subr.bf16.mxu0 0
    %399 = vmatpush2.bf16.msra.mxu0 0
    %400 = vmatprep.subr.bf16.mxu0 0
    %401 = vmatpush2.bf16.msra.mxu0 0
    %402 = vmatprep.subr.bf16.mxu0 0
    %403 = vmatpush2.bf16.msra.mxu0 0
    %404 = vmatprep.subr.bf16.mxu0 0
    %405 = vmatpush2.bf16.msra.mxu0 %v361
    %406 = vmatprep.subr.bf16.mxu0 0
    %407 = vmatpush2.bf16.msra.mxu0 %v360
    %408 = vmatprep.mubr.bf16.mxu0 %v374
    %409 = vmatmul.mubr.bf16.gmra.mxu0 %v270
    %v410 = vpop.f32.mrf.mxu0
    %v411 = vadd.f32 0.0, %v410
    %v412 = vpop.f32.mrf.mxu0
    %v413 = vpop.f32.mrf.mxu0
    %v414 = vadd.f32 0.0, %v413
    %v415 = vpop.f32.mrf.mxu0
    %416 = vdwg.mxu0
    %v437 = vunpack.c.l.b16 %v272
    %v438 = vunpack.c.l.b16 %v273
    %v439 = vunpack.c.l.b16 %v274
    %v440 = vunpack.c.l.b16 %v275
    %v441 = vunpack.c.l.b16 %v276
    %v442 = vunpack.c.l.b16 %v277
    %v443 = vunpack.c.l.b16 %v278
    %v444 = vunpack.c.l.b16 %v279
    %v445 = vunpack.c.l.b16 %v280
    %v446 = vunpack.c.l.b16 %v281
    %v447 = vunpack.c.l.b16 %v282
    %v448 = vunpack.c.l.b16 %v283
    %v449 = vunpack.c.l.b16 %v284
    %v450 = vunpack.c.l.b16 %v285
    %v451 = vunpack.c.l.b16 %v286
    %v452 = vunpack.c.l.b16 %v287
    %v453 = vunpack.c.l.b16 %v288
    %v454 = vunpack.c.l.b16 %v289
    %v455 = vunpack.c.l.b16 %v290
    %v456 = vunpack.c.l.b16 %v291
    %v457 = vpack.c.b16 %v438, %v437
    %v458 = vpack.c.b16 %v440, %v439
    %v459 = vpack.c.b16 %v442, %v441
    %v460 = vpack.c.b16 %v444, %v443
    %v461 = vpack.c.b16 %v446, %v445
    %v462 = vpack.c.b16 %v448, %v447
    %v463 = vpack.c.b16 %v450, %v449
    %v464 = vpack.c.b16 %v452, %v451
    %v465 = vpack.c.b16 %v454, %v453
    %v466 = vpack.c.b16 %v456, %v455
    %v478 = vsel %vm372, %v261, 0
    %480 = vmatprep.subr.bf16.mxu0 0
    %481 = vmatpush1.bf16.msra.mxu0 %v464
    %482 = vmatprep.subr.bf16.mxu0 0
    %483 = vmatpush1.bf16.msra.mxu0 %v463
    %484 = vmatprep.subr.bf16.mxu0 0
    %485 = vmatpush1.bf16.msra.mxu0 %v462
    %486 = vmatprep.subr.bf16.mxu0 0
    %487 = vmatpush1.bf16.msra.mxu0 %v461
    %488 = vmatprep.subr.bf16.mxu0 0
    %489 = vmatpush1.bf16.msra.mxu0 %v460
    %490 = vmatprep.subr.bf16.mxu0 0
    %491 = vmatpush1.bf16.msra.mxu0 %v459
    %492 = vmatprep.subr.bf16.mxu0 0
    %493 = vmatpush1.bf16.msra.mxu0 %v458
    %494 = vmatprep.subr.bf16.mxu0 0
    %495 = vmatpush1.bf16.msra.mxu0 %v457
    %496 = vmatprep.subr.bf16.mxu0 0
    %497 = vmatpush2.bf16.msra.mxu0 0
    %498 = vmatprep.subr.bf16.mxu0 0
    %499 = vmatpush2.bf16.msra.mxu0 0
    %500 = vmatprep.subr.bf16.mxu0 0
    %501 = vmatpush2.bf16.msra.mxu0 0
    %502 = vmatprep.subr.bf16.mxu0 0
    %503 = vmatpush2.bf16.msra.mxu0 0
    %504 = vmatprep.subr.bf16.mxu0 0
    %505 = vmatpush2.bf16.msra.mxu0 0
    %506 = vmatprep.subr.bf16.mxu0 0
    %507 = vmatpush2.bf16.msra.mxu0 0
    %508 = vmatprep.subr.bf16.mxu0 0
    %509 = vmatpush2.bf16.msra.mxu0 %v466
    %510 = vmatprep.subr.bf16.mxu0 0
    %511 = vmatpush2.bf16.msra.mxu0 %v465
    %512 = vmatprep.mubr.bf16.mxu0 %v478
    %513 = vmatmul.mubr.bf16.gmra.mxu0 %v260
    %v514 = vpop.f32.mrf.mxu0
    %v515 = vadd.f32 %v411, %v514
    %v516 = vpop.f32.mrf.mxu0
    %v517 = vpop.f32.mrf.mxu0
    %v518 = vadd.f32 %v414, %v517
    %v519 = vpop.f32.mrf.mxu0
    %520 = vdwg.mxu0
    %v521 = vld [vmem:[%s3] sm:$0xff]
    %v522 = vld [vmem:[%s3 + $0x8] sm:$0xff]
    %v523 = vld [vmem:[%s4] sm:$0xff]
    %v524 = vld [vmem:[%s4 + $0x8] sm:$0xff]
    %v525 = vadd.f32 %v515, %v518
    %v526 = vrot.slane %v525, 4
    %v527 = vadd.f32 %v525, %v526
    %v528 = vrot.slane %v527, 2
    %v529 = vadd.f32 %v527, %v528
    %v530 = vrot.slane %v529, 1
    %v531 = vadd.f32 %v529, %v530
    %v532 = vmul.f32 %v531, %v70
    %v533 = vsub.f32 %v515, %v532
    %v534 = vsub.f32 %v518, %v532
    %v535 = vmul.f32 %v533, %v533
    %v536 = vmul.f32 %v534, %v534
    %v537 = vadd.f32 %v535, %v536
    %v538 = vrot.slane %v537, 4
    %v539 = vadd.f32 %v537, %v538
    %v540 = vrot.slane %v539, 2
    %v541 = vadd.f32 %v539, %v540
    %v542 = vrot.slane %v541, 1
    %v543 = vadd.f32 %v541, %v542
    %v544 = vmul.f32 %v543, %v70
    %v545 = vadd.f32 %v544, 1e-05
    %v546 = vrsqrt.pop %v545
    %v547 = vmul.f32 %v533, %v546
    %v548 = vmul.f32 %v534, %v546
    %550 = vset.pattern.permute.xlu0 0
    %551 = vperm.xlu0 %550, %v521
    %v552 = vpop.permute.xlu0 %551
    %555 = vset.pattern.permute.xlu0 0
    %556 = vperm.xlu0 %555, %v522
    %v557 = vpop.permute.xlu0 %556
    %v559 = vmul.f32 %v547, %v552
    %v560 = vmul.f32 %v548, %v557
    %562 = vset.pattern.permute.xlu0 0
    %563 = vperm.xlu0 %562, %v523
    %v564 = vpop.permute.xlu0 %563
    %567 = vset.pattern.permute.xlu0 0
    %568 = vperm.xlu0 %567, %v524
    %v569 = vpop.permute.xlu0 %568
    %v571 = vadd.f32 %v559, %v564
    %v572 = vadd.f32 %v560, %v569
    %v573 = vxor.u32 %v571, 2147483648
    %v574 = vxor.u32 %v572, 2147483648
    %v575 = vmul.f32 %v573, 1.442695
    %v576 = vpow.pop %v575
    %v577 = vmul.f32 %v574, 1.442695
    %v578 = vpow.pop %v577
    %v579 = vadd.f32 %v576, 1.0
    %v580 = vadd.f32 %v578, 1.0
    %v581 = vrcp.pop %v579
    %v582 = vmul.f32 1.0, %v581
    %v583 = vrcp.pop %v580
    %v584 = vmul.f32 1.0, %v583
    %v585 = vmul.f32 %v571, %v582
    %v586 = vmul.f32 %v572, %v584
    %v587 = vpack.c.bf16 %v586, %v585
    %v589 = vunpack.c.l.b16 %v587
    %v590 = vunpack.c.h.b16 %v587
    %v591 = vpack.c.b16 %v589, %v589
    %v592 = vpack.c.b16 %v590, %v590
    %595 = vst [vmem:[#allocation2] sm:$0xf] %v591
    %596 = vst [vmem:[#allocation2 + $0x4] sm:$0xf] %v592
    %v597 = vsub.f32 %v571, -2.2
    %v598 = vsub.f32 %v572, -2.2
    %v599 = vmul.f32 %v597, 2.5
    %v600 = vmul.f32 %v598, 2.5
    %v601 = vmax.f32 %v599, 0.0
    %v602 = vmax.f32 %v600, 0.0
    %v603 = vmin.f32 %v601, 11.0
    %v604 = vmin.f32 %v602, 11.0
    %v605 = vmax.f32 %v603, 0.0
    %v606 = vmax.f32 %v604, 0.0
    %v607 = vmul.f32 %v605, %v605
    %v608 = vmul.f32 %v606, %v606
    %v609 = vmul.f32 %v605, %v607
    %v610 = vmul.f32 %v606, %v608
    %v611 = vsub.f32 %v603, 1.0
    %v612 = vsub.f32 %v604, 1.0
    %v613 = vmax.f32 %v611, 0.0
    %v614 = vmax.f32 %v612, 0.0
    %v615 = vmul.f32 %v613, %v613
    %v616 = vmul.f32 %v614, %v614
    %v617 = vmul.f32 %v613, %v615
    %v618 = vmul.f32 %v614, %v616
    %v619 = vsub.f32 %v603, 2.0
    %v620 = vsub.f32 %v604, 2.0
    %v621 = vmax.f32 %v619, 0.0
    %v622 = vmax.f32 %v620, 0.0
    %v623 = vmul.f32 %v621, %v621
    %v624 = vmul.f32 %v622, %v622
    %v625 = vmul.f32 %v621, %v623
    %v626 = vmul.f32 %v622, %v624
    %v627 = vsub.f32 %v603, 3.0
    %v628 = vsub.f32 %v604, 3.0
    %v629 = vmax.f32 %v627, 0.0
    %v630 = vmax.f32 %v628, 0.0
    %v631 = vmul.f32 %v629, %v629
    %v632 = vmul.f32 %v630, %v630
    %v633 = vmul.f32 %v629, %v631
    %v634 = vmul.f32 %v630, %v632
    %v635 = vsub.f32 %v603, 4.0
    %v636 = vsub.f32 %v604, 4.0
    %v637 = vmax.f32 %v635, 0.0
    %v638 = vmax.f32 %v636, 0.0
    %v639 = vmul.f32 %v637, %v637
    %v640 = vmul.f32 %v638, %v638
    %v641 = vmul.f32 %v637, %v639
    %v642 = vmul.f32 %v638, %v640
    %v643 = vmul.f32 %v617, 4.0
    %v644 = vmul.f32 %v618, 4.0
    %v645 = vsub.f32 %v609, %v643
    %v646 = vsub.f32 %v610, %v644
    %v647 = vmul.f32 %v625, 6.0
    %v648 = vmul.f32 %v626, 6.0
    %v649 = vadd.f32 %v645, %v647
    %v650 = vadd.f32 %v646, %v648
    %v651 = vmul.f32 %v633, 4.0
    %v652 = vmul.f32 %v634, 4.0
    %v653 = vsub.f32 %v649, %v651
    %v654 = vsub.f32 %v650, %v652
    %v655 = vadd.f32 %v653, %v641
    %v656 = vadd.f32 %v654, %v642
    %v657 = vmul.f32 %v655, 0.16666667
    %v658 = vmul.f32 %v656, 0.16666667
    %v659 = vpack.c.bf16 %v658, %v657
    %v661 = vunpack.c.l.b16 %v659
    %v662 = vunpack.c.h.b16 %v659
    %v663 = vpack.c.b16 %v661, %v661
    %v664 = vpack.c.b16 %v662, %v662
    %667 = vst [vmem:[#allocation2 + $0x8] sm:$0xf] %v663
    %668 = vst [vmem:[#allocation2 + $0xc] sm:$0xf] %v664
    %v669 = vsub.f32 %v603, 5.0
    %v670 = vsub.f32 %v604, 5.0
    %v671 = vmax.f32 %v669, 0.0
    %v672 = vmax.f32 %v670, 0.0
    %v673 = vmul.f32 %v671, %v671
    %v674 = vmul.f32 %v672, %v672
    %v675 = vmul.f32 %v671, %v673
    %v676 = vmul.f32 %v672, %v674
    %v677 = vmul.f32 %v625, 4.0
    %v678 = vmul.f32 %v626, 4.0
    %v679 = vsub.f32 %v617, %v677
    %v680 = vsub.f32 %v618, %v678
    %v681 = vmul.f32 %v633, 6.0
    %v682 = vmul.f32 %v634, 6.0
    %v683 = vadd.f32 %v679, %v681
    %v684 = vadd.f32 %v680, %v682
    %v685 = vmul.f32 %v641, 4.0
    %v686 = vmul.f32 %v642, 4.0
    %v687 = vsub.f32 %v683, %v685
    %v688 = vsub.f32 %v684, %v686
    %v689 = vadd.f32 %v687, %v675
    %v690 = vadd.f32 %v688, %v676
    %v691 = vmul.f32 %v689, 0.16666667
    %v692 = vmul.f32 %v690, 0.16666667
    %v693 = vpack.c.bf16 %v692, %v691
    %v695 = vunpack.c.l.b16 %v693
    %v696 = vunpack.c.h.b16 %v693
    %v697 = vpack.c.b16 %v695, %v695
    %v698 = vpack.c.b16 %v696, %v696
    %701 = vst [vmem:[#allocation2 + $0x10] sm:$0xf] %v697
    %702 = vst [vmem:[#allocation2 + $0x14] sm:$0xf] %v698
    %v703 = vsub.f32 %v603, 6.0
    %v704 = vsub.f32 %v604, 6.0
    %v705 = vmax.f32 %v703, 0.0
    %v706 = vmax.f32 %v704, 0.0
    %v707 = vmul.f32 %v705, %v705
    %v708 = vmul.f32 %v706, %v706
    %v709 = vmul.f32 %v705, %v707
    %v710 = vmul.f32 %v706, %v708
    %v711 = vsub.f32 %v625, %v651
    %v712 = vsub.f32 %v626, %v652
    %v713 = vmul.f32 %v641, 6.0
    %v714 = vmul.f32 %v642, 6.0
    %v715 = vadd.f32 %v711, %v713
    %v716 = vadd.f32 %v712, %v714
    %v717 = vmul.f32 %v675, 4.0
    %v718 = vmul.f32 %v676, 4.0
    %v719 = vsub.f32 %v715, %v717
    %v720 = vsub.f32 %v716, %v718
    %v721 = vadd.f32 %v719, %v709
    %v722 = vadd.f32 %v720, %v710
    %v723 = vmul.f32 %v721, 0.16666667
    %v724 = vmul.f32 %v722, 0.16666667
    %v725 = vpack.c.bf16 %v724, %v723
    %v727 = vunpack.c.l.b16 %v725
    %v728 = vunpack.c.h.b16 %v725
    %v729 = vpack.c.b16 %v727, %v727
    %v730 = vpack.c.b16 %v728, %v728
    %733 = vst [vmem:[#allocation2 + $0x18] sm:$0xf] %v729
    %734 = vst [vmem:[#allocation2 + $0x1c] sm:$0xf] %v730
    %v735 = vsub.f32 %v603, 7.0
    %v736 = vsub.f32 %v604, 7.0
    %v737 = vmax.f32 %v735, 0.0
    %v738 = vmax.f32 %v736, 0.0
    %v739 = vmul.f32 %v737, %v737
    %v740 = vmul.f32 %v738, %v738
    %v741 = vmul.f32 %v737, %v739
    %v742 = vmul.f32 %v738, %v740
    %v743 = vsub.f32 %v633, %v685
    %v744 = vsub.f32 %v634, %v686
    %v745 = vmul.f32 %v675, 6.0
    %v746 = vmul.f32 %v676, 6.0
    %v747 = vadd.f32 %v743, %v745
    %v748 = vadd.f32 %v744, %v746
    %v749 = vmul.f32 %v709, 4.0
    %v750 = vmul.f32 %v710, 4.0
    %v751 = vsub.f32 %v747, %v749
    %v752 = vsub.f32 %v748, %v750
    %v753 = vadd.f32 %v751, %v741
    %v754 = vadd.f32 %v752, %v742
    %v755 = vmul.f32 %v753, 0.16666667
    %v756 = vmul.f32 %v754, 0.16666667
    %v757 = vpack.c.bf16 %v756, %v755
    %v759 = vunpack.c.l.b16 %v757
    %v760 = vunpack.c.h.b16 %v757
    %v761 = vpack.c.b16 %v759, %v759
    %v762 = vpack.c.b16 %v760, %v760
    %765 = vst [vmem:[#allocation2 + $0x20] sm:$0xf] %v761
    %766 = vst [vmem:[#allocation2 + $0x24] sm:$0xf] %v762
    %v767 = vsub.f32 %v603, 8.0
    %v768 = vsub.f32 %v604, 8.0
    %v769 = vmax.f32 %v767, 0.0
    %v770 = vmax.f32 %v768, 0.0
    %v771 = vmul.f32 %v769, %v769
    %v772 = vmul.f32 %v770, %v770
    %v773 = vmul.f32 %v769, %v771
    %v774 = vmul.f32 %v770, %v772
    %v775 = vsub.f32 %v641, %v717
    %v776 = vsub.f32 %v642, %v718
    %v777 = vmul.f32 %v709, 6.0
    %v778 = vmul.f32 %v710, 6.0
    %v779 = vadd.f32 %v775, %v777
    %v780 = vadd.f32 %v776, %v778
    %v781 = vmul.f32 %v741, 4.0
    %v782 = vmul.f32 %v742, 4.0
    %v783 = vsub.f32 %v779, %v781
    %v784 = vsub.f32 %v780, %v782
    %v785 = vadd.f32 %v783, %v773
    %v786 = vadd.f32 %v784, %v774
    %v787 = vmul.f32 %v785, 0.16666667
    %v788 = vmul.f32 %v786, 0.16666667
    %v789 = vpack.c.bf16 %v788, %v787
    %v791 = vunpack.c.l.b16 %v789
    %v792 = vunpack.c.h.b16 %v789
    %v793 = vpack.c.b16 %v791, %v791
    %v794 = vpack.c.b16 %v792, %v792
    %797 = vst [vmem:[#allocation2 + $0x28] sm:$0xf] %v793
    %798 = vst [vmem:[#allocation2 + $0x2c] sm:$0xf] %v794
    %v799 = vsub.f32 %v603, 9.0
    %v800 = vsub.f32 %v604, 9.0
    %v801 = vmax.f32 %v799, 0.0
    %v802 = vmax.f32 %v800, 0.0
    %v803 = vmul.f32 %v801, %v801
    %v804 = vmul.f32 %v802, %v802
    %v805 = vmul.f32 %v801, %v803
    %v806 = vmul.f32 %v802, %v804
    %v807 = vsub.f32 %v675, %v749
    %v808 = vsub.f32 %v676, %v750
    %v809 = vmul.f32 %v741, 6.0
    %v810 = vmul.f32 %v742, 6.0
    %v811 = vadd.f32 %v807, %v809
    %v812 = vadd.f32 %v808, %v810
    %v813 = vmul.f32 %v773, 4.0
    %v814 = vmul.f32 %v774, 4.0
    %v815 = vsub.f32 %v811, %v813
    %v816 = vsub.f32 %v812, %v814
    %v817 = vadd.f32 %v815, %v805
    %v818 = vadd.f32 %v816, %v806
    %v819 = vmul.f32 %v817, 0.16666667
    %v820 = vmul.f32 %v818, 0.16666667
    %v821 = vpack.c.bf16 %v820, %v819
    %v823 = vunpack.c.l.b16 %v821
    %v824 = vunpack.c.h.b16 %v821
    %v825 = vpack.c.b16 %v823, %v823
    %v826 = vpack.c.b16 %v824, %v824
    %829 = vst [vmem:[#allocation2 + $0x30] sm:$0xf] %v825
    %830 = vst [vmem:[#allocation2 + $0x34] sm:$0xf] %v826
    %v831 = vsub.f32 %v603, 10.0
    %v832 = vsub.f32 %v604, 10.0
    %v833 = vmax.f32 %v831, 0.0
    %v834 = vmax.f32 %v832, 0.0
    %v835 = vmul.f32 %v833, %v833
    %v836 = vmul.f32 %v834, %v834
    %v837 = vmul.f32 %v833, %v835
    %v838 = vmul.f32 %v834, %v836
    %v839 = vsub.f32 %v709, %v781
    %v840 = vsub.f32 %v710, %v782
    %v841 = vmul.f32 %v773, 6.0
    %v842 = vmul.f32 %v774, 6.0
    %v843 = vadd.f32 %v839, %v841
    %v844 = vadd.f32 %v840, %v842
    %v845 = vmul.f32 %v805, 4.0
    %v846 = vmul.f32 %v806, 4.0
    %v847 = vsub.f32 %v843, %v845
    %v848 = vsub.f32 %v844, %v846
    %v849 = vadd.f32 %v847, %v837
    %v850 = vadd.f32 %v848, %v838
    %v851 = vmul.f32 %v849, 0.16666667
    %v852 = vmul.f32 %v850, 0.16666667
    %v853 = vpack.c.bf16 %v852, %v851
    %v855 = vunpack.c.l.b16 %v853
    %v856 = vunpack.c.h.b16 %v853
    %v857 = vpack.c.b16 %v855, %v855
    %v858 = vpack.c.b16 %v856, %v856
    %861 = vst [vmem:[#allocation2 + $0x38] sm:$0xf] %v857
    %862 = vst [vmem:[#allocation2 + $0x3c] sm:$0xf] %v858
    %v863 = vsub.f32 %v603, 11.0
    %v864 = vsub.f32 %v604, 11.0
    %v865 = vmax.f32 %v863, 0.0
    %v866 = vmax.f32 %v864, 0.0
    %v867 = vmul.f32 %v865, %v865
    %v868 = vmul.f32 %v866, %v866
    %v869 = vmul.f32 %v865, %v867
    %v870 = vmul.f32 %v866, %v868
    %v871 = vsub.f32 %v741, %v813
    %v872 = vsub.f32 %v742, %v814
    %v873 = vmul.f32 %v805, 6.0
    %v874 = vmul.f32 %v806, 6.0
    %v875 = vadd.f32 %v871, %v873
    %v876 = vadd.f32 %v872, %v874
    %v877 = vmul.f32 %v837, 4.0
    %v878 = vmul.f32 %v838, 4.0
    %v879 = vsub.f32 %v875, %v877
    %v880 = vsub.f32 %v876, %v878
    %v881 = vadd.f32 %v879, %v869
    %v882 = vadd.f32 %v880, %v870
    %v883 = vmul.f32 %v881, 0.16666667
    %v884 = vmul.f32 %v882, 0.16666667
    %v885 = vpack.c.bf16 %v884, %v883
    %v887 = vunpack.c.l.b16 %v885
    %v888 = vunpack.c.h.b16 %v885
    %v889 = vpack.c.b16 %v887, %v887
    %v890 = vpack.c.b16 %v888, %v888
    %893 = vst [vmem:[#allocation2 + $0x40] sm:$0xf] %v889
    %894 = vst [vmem:[#allocation2 + $0x44] sm:$0xf] %v890
    %v895 = vld [vmem:[%s10] sm:$0xff]
    %v896 = vld [vmem:[%s10 + $0x8] sm:$0xff]
    %v897 = vld [vmem:[%s10 + $0x10] sm:$0xff]
    %v898 = vld [vmem:[%s10 + $0x18] sm:$0xff]
    %v899 = vld [vmem:[#allocation2] sm:$0xf]
    %v900 = vld [vmem:[#allocation2 + $0x4] sm:$0xf]
    %v901 = vld [vmem:[#allocation2 + $0x8] sm:$0xf]
    %v902 = vld [vmem:[#allocation2 + $0xc] sm:$0xf]
    %v903 = vld [vmem:[#allocation2 + $0x10] sm:$0xf]
    %v904 = vld [vmem:[#allocation2 + $0x14] sm:$0xf]
    %v905 = vld [vmem:[#allocation2 + $0x18] sm:$0xf]
    %v906 = vld [vmem:[#allocation2 + $0x1c] sm:$0xf]
    %v907 = vld [vmem:[#allocation2 + $0x20] sm:$0xf]
    %v908 = vld [vmem:[#allocation2 + $0x24] sm:$0xf]
    %v909 = vld [vmem:[#allocation2 + $0x28] sm:$0xf]
    %v910 = vld [vmem:[#allocation2 + $0x2c] sm:$0xf]
    %v911 = vld [vmem:[#allocation2 + $0x30] sm:$0xf]
    %v912 = vld [vmem:[#allocation2 + $0x34] sm:$0xf]
    %v913 = vld [vmem:[#allocation2 + $0x38] sm:$0xf]
    %v914 = vld [vmem:[#allocation2 + $0x3c] sm:$0xf]
    %v915 = vld [vmem:[#allocation2 + $0x40] sm:$0xf]
    %v916 = vld [vmem:[#allocation2 + $0x44] sm:$0xf]
    %v921 = vunpack.c.l.b16 %v895
    %v922 = vunpack.c.h.b16 %v895
    %v923 = vunpack.c.l.b16 %v896
    %v924 = vunpack.c.h.b16 %v896
    %v925 = vunpack.c.l.b16 %v897
    %v926 = vunpack.c.h.b16 %v897
    %v927 = vunpack.c.l.b16 %v898
    %v928 = vunpack.c.h.b16 %v898
    %v929 = vpack.c.b16 %v923, %v921
    %v930 = vpack.c.b16 %v924, %v922
    %v931 = vpack.c.b16 %v927, %v925
    %v932 = vpack.c.b16 %v928, %v926
    %v953 = vunpack.c.l.b16 %v899
    %v954 = vunpack.c.l.b16 %v900
    %v955 = vunpack.c.l.b16 %v901
    %v956 = vunpack.c.l.b16 %v902
    %v957 = vunpack.c.l.b16 %v903
    %v958 = vunpack.c.l.b16 %v904
    %v959 = vunpack.c.l.b16 %v905
    %v960 = vunpack.c.l.b16 %v906
    %v961 = vunpack.c.l.b16 %v907
    %v962 = vunpack.c.l.b16 %v908
    %v963 = vunpack.c.l.b16 %v909
    %v964 = vunpack.c.l.b16 %v910
    %v965 = vunpack.c.l.b16 %v911
    %v966 = vunpack.c.l.b16 %v912
    %v967 = vunpack.c.l.b16 %v913
    %v968 = vunpack.c.l.b16 %v914
    %v969 = vunpack.c.l.b16 %v915
    %v970 = vunpack.c.l.b16 %v916
    %v971 = vpack.c.b16 %v954, %v953
    %v972 = vpack.c.b16 %v956, %v955
    %v973 = vpack.c.b16 %v958, %v957
    %v974 = vpack.c.b16 %v960, %v959
    %v975 = vpack.c.b16 %v962, %v961
    %v976 = vpack.c.b16 %v964, %v963
    %v977 = vpack.c.b16 %v966, %v965
    %v978 = vpack.c.b16 %v968, %v967
    %v979 = vpack.c.b16 %v970, %v969
    %vm989 = vcmask 130048
    %v991 = vsel %vm989, %v930, 0
    %v994 = vsel %vm989, %v932, 0
    %996 = vmatprep.subr.bf16.mxu0 0
    %997 = vmatpush1.bf16.msra.mxu0 %v978
    %998 = vmatprep.subr.bf16.mxu0 0
    %999 = vmatpush1.bf16.msra.mxu0 %v977
    %1000 = vmatprep.subr.bf16.mxu0 0
    %1001 = vmatpush1.bf16.msra.mxu0 %v976
    %1002 = vmatprep.subr.bf16.mxu0 0
    %1003 = vmatpush1.bf16.msra.mxu0 %v975
    %1004 = vmatprep.subr.bf16.mxu0 0
    %1005 = vmatpush1.bf16.msra.mxu0 %v974
    %1006 = vmatprep.subr.bf16.mxu0 0
    %1007 = vmatpush1.bf16.msra.mxu0 %v973
    %1008 = vmatprep.subr.bf16.mxu0 0
    %1009 = vmatpush1.bf16.msra.mxu0 %v972
    %1010 = vmatprep.subr.bf16.mxu0 0
    %1011 = vmatpush1.bf16.msra.mxu0 %v971
    %1012 = vmatprep.subr.bf16.mxu0 0
    %1013 = vmatpush2.bf16.msra.mxu0 0
    %1014 = vmatprep.subr.bf16.mxu0 0
    %1015 = vmatpush2.bf16.msra.mxu0 0
    %1016 = vmatprep.subr.bf16.mxu0 0
    %1017 = vmatpush2.bf16.msra.mxu0 0
    %1018 = vmatprep.subr.bf16.mxu0 0
    %1019 = vmatpush2.bf16.msra.mxu0 0
    %1020 = vmatprep.subr.bf16.mxu0 0
    %1021 = vmatpush2.bf16.msra.mxu0 0
    %1022 = vmatprep.subr.bf16.mxu0 0
    %1023 = vmatpush2.bf16.msra.mxu0 0
    %1024 = vmatprep.subr.bf16.mxu0 0
    %1025 = vmatpush2.bf16.msra.mxu0 0
    %1026 = vmatprep.subr.bf16.mxu0 0
    %1027 = vmatpush2.bf16.msra.mxu0 %v979
    %1028 = vmatprep.mubr.bf16.mxu0 %v991
    %1029 = vmatmul.mubr.bf16.gmra.mxu0 %v929
    %v1030 = vpop.f32.mrf.mxu0
    %v1031 = vadd.f32 0.0, %v1030
    %v1032 = vpop.f32.mrf.mxu0
    %v1033 = vpop.f32.mrf.mxu0
    %v1034 = vadd.f32 0.0, %v1033
    %v1035 = vpop.f32.mrf.mxu0
    %1036 = vmatprep.mubr.bf16.mxu0 %v994
    %1037 = vmatmul.mubr.bf16.gmra.mxu0 %v931
    %v1038 = vpop.f32.mrf.mxu0
    %v1039 = vadd.f32 0.0, %v1038
    %v1040 = vpop.f32.mrf.mxu0
    %v1041 = vpop.f32.mrf.mxu0
    %v1042 = vadd.f32 0.0, %v1041
    %v1043 = vpop.f32.mrf.mxu0
    %1044 = vdwg.mxu0
    %v1045 = vxor.u32 %v1031, 2147483648
    %v1046 = vxor.u32 %v1034, 2147483648
    %v1047 = vxor.u32 %v1039, 2147483648
    %v1048 = vxor.u32 %v1042, 2147483648
    %v1049 = vmul.f32 %v1045, 1.442695
    %v1050 = vpow.pop %v1049
    %v1051 = vmul.f32 %v1046, 1.442695
    %v1052 = vpow.pop %v1051
    %v1053 = vmul.f32 %v1047, 1.442695
    %v1054 = vpow.pop %v1053
    %v1055 = vmul.f32 %v1048, 1.442695
    %v1056 = vpow.pop %v1055
    %v1057 = vadd.f32 %v1050, 1.0
    %v1058 = vadd.f32 %v1052, 1.0
    %v1059 = vadd.f32 %v1054, 1.0
    %v1060 = vadd.f32 %v1056, 1.0
    %v1061 = vrcp.pop %v1057
    %v1062 = vmul.f32 1.0, %v1061
    %v1063 = vrcp.pop %v1058
    %v1064 = vmul.f32 1.0, %v1063
    %v1065 = vrcp.pop %v1059
    %v1066 = vmul.f32 1.0, %v1065
    %v1067 = vrcp.pop %v1060
    %v1068 = vmul.f32 1.0, %v1067
    %v1069 = vmul.f32 %v1031, %v1062
    %v1070 = vmul.f32 %v1034, %v1064
    %v1071 = vmul.f32 %v1039, %v1066
    %v1072 = vmul.f32 %v1042, %v1068
    %v1073 = vpack.c.bf16 %v1070, %v1069
    %v1074 = vpack.c.bf16 %v1072, %v1071
    %v1077 = vunpack.c.l.b16 %v1073
    %v1078 = vunpack.c.h.b16 %v1073
    %v1079 = vunpack.c.l.b16 %v1074
    %v1080 = vunpack.c.h.b16 %v1074
    %v1081 = vpack.c.b16 %v1077, %v1077
    %v1082 = vpack.c.b16 %v1078, %v1078
    %v1083 = vpack.c.b16 %v1079, %v1079
    %v1084 = vpack.c.b16 %v1080, %v1080
    %1089 = vst [vmem:[#allocation3] sm:$0xf] %v1081
    %1090 = vst [vmem:[#allocation3 + $0x4] sm:$0xf] %v1082
    %1091 = vst [vmem:[#allocation3 + $0x8] sm:$0xf] %v1083
    %1092 = vst [vmem:[#allocation3 + $0xc] sm:$0xf] %v1084
    %v1093 = vsub.f32 %v1031, -2.2
    %v1094 = vsub.f32 %v1034, -2.2
    %v1095 = vsub.f32 %v1039, -2.2
    %v1096 = vsub.f32 %v1042, -2.2
    %v1097 = vmul.f32 %v1093, 2.5
    %v1098 = vmul.f32 %v1094, 2.5
    %v1099 = vmul.f32 %v1095, 2.5
    %v1100 = vmul.f32 %v1096, 2.5
    %v1101 = vmax.f32 %v1097, 0.0
    %v1102 = vmax.f32 %v1098, 0.0
    %v1103 = vmax.f32 %v1099, 0.0
    %v1104 = vmax.f32 %v1100, 0.0
    %v1105 = vmin.f32 %v1101, 11.0
    %v1106 = vmin.f32 %v1102, 11.0
    %v1107 = vmin.f32 %v1103, 11.0
    %v1108 = vmin.f32 %v1104, 11.0
    %v1109 = vmax.f32 %v1105, 0.0
    %v1110 = vmax.f32 %v1106, 0.0
    %v1111 = vmax.f32 %v1107, 0.0
    %v1112 = vmax.f32 %v1108, 0.0
    %v1113 = vmul.f32 %v1109, %v1109
    %v1114 = vmul.f32 %v1110, %v1110
    %v1115 = vmul.f32 %v1111, %v1111
    %v1116 = vmul.f32 %v1112, %v1112
    %v1117 = vmul.f32 %v1109, %v1113
    %v1118 = vmul.f32 %v1110, %v1114
    %v1119 = vmul.f32 %v1111, %v1115
    %v1120 = vmul.f32 %v1112, %v1116
    %v1121 = vsub.f32 %v1105, 1.0
    %v1122 = vsub.f32 %v1106, 1.0
    %v1123 = vsub.f32 %v1107, 1.0
    %v1124 = vsub.f32 %v1108, 1.0
    %v1125 = vmax.f32 %v1121, 0.0
    %v1126 = vmax.f32 %v1122, 0.0
    %v1127 = vmax.f32 %v1123, 0.0
    %v1128 = vmax.f32 %v1124, 0.0
    %v1129 = vmul.f32 %v1125, %v1125
    %v1130 = vmul.f32 %v1126, %v1126
    %v1131 = vmul.f32 %v1127, %v1127
    %v1132 = vmul.f32 %v1128, %v1128
    %v1133 = vmul.f32 %v1125, %v1129
    %v1134 = vmul.f32 %v1126, %v1130
    %v1135 = vmul.f32 %v1127, %v1131
    %v1136 = vmul.f32 %v1128, %v1132
    %v1137 = vsub.f32 %v1105, 2.0
    %v1138 = vsub.f32 %v1106, 2.0
    %v1139 = vsub.f32 %v1107, 2.0
    %v1140 = vsub.f32 %v1108, 2.0
    %v1141 = vmax.f32 %v1137, 0.0
    %v1142 = vmax.f32 %v1138, 0.0
    %v1143 = vmax.f32 %v1139, 0.0
    %v1144 = vmax.f32 %v1140, 0.0
    %v1145 = vmul.f32 %v1141, %v1141
    %v1146 = vmul.f32 %v1142, %v1142
    %v1147 = vmul.f32 %v1143, %v1143
    %v1148 = vmul.f32 %v1144, %v1144
    %v1149 = vmul.f32 %v1141, %v1145
    %v1150 = vmul.f32 %v1142, %v1146
    %v1151 = vmul.f32 %v1143, %v1147
    %v1152 = vmul.f32 %v1144, %v1148
    %v1153 = vsub.f32 %v1105, 3.0
    %v1154 = vsub.f32 %v1106, 3.0
    %v1155 = vsub.f32 %v1107, 3.0
    %v1156 = vsub.f32 %v1108, 3.0
    %v1157 = vmax.f32 %v1153, 0.0
    %v1158 = vmax.f32 %v1154, 0.0
    %v1159 = vmax.f32 %v1155, 0.0
    %v1160 = vmax.f32 %v1156, 0.0
    %v1161 = vmul.f32 %v1157, %v1157
    %v1162 = vmul.f32 %v1158, %v1158
    %v1163 = vmul.f32 %v1159, %v1159
    %v1164 = vmul.f32 %v1160, %v1160
    %v1165 = vmul.f32 %v1157, %v1161
    %v1166 = vmul.f32 %v1158, %v1162
    %v1167 = vmul.f32 %v1159, %v1163
    %v1168 = vmul.f32 %v1160, %v1164
    %v1169 = vsub.f32 %v1105, 4.0
    %v1170 = vsub.f32 %v1106, 4.0
    %v1171 = vsub.f32 %v1107, 4.0
    %v1172 = vsub.f32 %v1108, 4.0
    %v1173 = vmax.f32 %v1169, 0.0
    %v1174 = vmax.f32 %v1170, 0.0
    %v1175 = vmax.f32 %v1171, 0.0
    %v1176 = vmax.f32 %v1172, 0.0
    %v1177 = vmul.f32 %v1173, %v1173
    %v1178 = vmul.f32 %v1174, %v1174
    %v1179 = vmul.f32 %v1175, %v1175
    %v1180 = vmul.f32 %v1176, %v1176
    %v1181 = vmul.f32 %v1173, %v1177
    %v1182 = vmul.f32 %v1174, %v1178
    %v1183 = vmul.f32 %v1175, %v1179
    %v1184 = vmul.f32 %v1176, %v1180
    %v1185 = vmul.f32 %v1133, 4.0
    %v1186 = vmul.f32 %v1134, 4.0
    %v1187 = vmul.f32 %v1135, 4.0
    %v1188 = vmul.f32 %v1136, 4.0
    %v1189 = vsub.f32 %v1117, %v1185
    %v1190 = vsub.f32 %v1118, %v1186
    %v1191 = vsub.f32 %v1119, %v1187
    %v1192 = vsub.f32 %v1120, %v1188
    %v1193 = vmul.f32 %v1149, 6.0
    %v1194 = vmul.f32 %v1150, 6.0
    %v1195 = vmul.f32 %v1151, 6.0
    %v1196 = vmul.f32 %v1152, 6.0
    %v1197 = vadd.f32 %v1189, %v1193
    %v1198 = vadd.f32 %v1190, %v1194
    %v1199 = vadd.f32 %v1191, %v1195
    %v1200 = vadd.f32 %v1192, %v1196
    %v1201 = vmul.f32 %v1165, 4.0
    %v1202 = vmul.f32 %v1166, 4.0
    %v1203 = vmul.f32 %v1167, 4.0
    %v1204 = vmul.f32 %v1168, 4.0
    %v1205 = vsub.f32 %v1197, %v1201
    %v1206 = vsub.f32 %v1198, %v1202
    %v1207 = vsub.f32 %v1199, %v1203
    %v1208 = vsub.f32 %v1200, %v1204
    %v1209 = vadd.f32 %v1205, %v1181
    %v1210 = vadd.f32 %v1206, %v1182
    %v1211 = vadd.f32 %v1207, %v1183
    %v1212 = vadd.f32 %v1208, %v1184
    %v1213 = vmul.f32 %v1209, 0.16666667
    %v1214 = vmul.f32 %v1210, 0.16666667
    %v1215 = vmul.f32 %v1211, 0.16666667
    %v1216 = vmul.f32 %v1212, 0.16666667
    %v1217 = vpack.c.bf16 %v1214, %v1213
    %v1218 = vpack.c.bf16 %v1216, %v1215
    %v1221 = vunpack.c.l.b16 %v1217
    %v1222 = vunpack.c.h.b16 %v1217
    %v1223 = vunpack.c.l.b16 %v1218
    %v1224 = vunpack.c.h.b16 %v1218
    %v1225 = vpack.c.b16 %v1221, %v1221
    %v1226 = vpack.c.b16 %v1222, %v1222
    %v1227 = vpack.c.b16 %v1223, %v1223
    %v1228 = vpack.c.b16 %v1224, %v1224
    %1233 = vst [vmem:[#allocation3 + $0x10] sm:$0xf] %v1225
    %1234 = vst [vmem:[#allocation3 + $0x14] sm:$0xf] %v1226
    %1235 = vst [vmem:[#allocation3 + $0x18] sm:$0xf] %v1227
    %1236 = vst [vmem:[#allocation3 + $0x1c] sm:$0xf] %v1228
    %v1237 = vsub.f32 %v1105, 5.0
    %v1238 = vsub.f32 %v1106, 5.0
    %v1239 = vsub.f32 %v1107, 5.0
    %v1240 = vsub.f32 %v1108, 5.0
    %v1241 = vmax.f32 %v1237, 0.0
    %v1242 = vmax.f32 %v1238, 0.0
    %v1243 = vmax.f32 %v1239, 0.0
    %v1244 = vmax.f32 %v1240, 0.0
    %v1245 = vmul.f32 %v1241, %v1241
    %v1246 = vmul.f32 %v1242, %v1242
    %v1247 = vmul.f32 %v1243, %v1243
    %v1248 = vmul.f32 %v1244, %v1244
    %v1249 = vmul.f32 %v1241, %v1245
    %v1250 = vmul.f32 %v1242, %v1246
    %v1251 = vmul.f32 %v1243, %v1247
    %v1252 = vmul.f32 %v1244, %v1248
    %v1253 = vmul.f32 %v1149, 4.0
    %v1254 = vmul.f32 %v1150, 4.0
    %v1255 = vmul.f32 %v1151, 4.0
    %v1256 = vmul.f32 %v1152, 4.0
    %v1257 = vsub.f32 %v1133, %v1253
    %v1258 = vsub.f32 %v1134, %v1254
    %v1259 = vsub.f32 %v1135, %v1255
    %v1260 = vsub.f32 %v1136, %v1256
    %v1261 = vmul.f32 %v1165, 6.0
    %v1262 = vmul.f32 %v1166, 6.0
    %v1263 = vmul.f32 %v1167, 6.0
    %v1264 = vmul.f32 %v1168, 6.0
    %v1265 = vadd.f32 %v1257, %v1261
    %v1266 = vadd.f32 %v1258, %v1262
    %v1267 = vadd.f32 %v1259, %v1263
    %v1268 = vadd.f32 %v1260, %v1264
    %v1269 = vmul.f32 %v1181, 4.0
    %v1270 = vmul.f32 %v1182, 4.0
    %v1271 = vmul.f32 %v1183, 4.0
    %v1272 = vmul.f32 %v1184, 4.0
    %v1273 = vsub.f32 %v1265, %v1269
    %v1274 = vsub.f32 %v1266, %v1270
    %v1275 = vsub.f32 %v1267, %v1271
    %v1276 = vsub.f32 %v1268, %v1272
    %v1277 = vadd.f32 %v1273, %v1249
    %v1278 = vadd.f32 %v1274, %v1250
    %v1279 = vadd.f32 %v1275, %v1251
    %v1280 = vadd.f32 %v1276, %v1252
    %v1281 = vmul.f32 %v1277, 0.16666667
    %v1282 = vmul.f32 %v1278, 0.16666667
    %v1283 = vmul.f32 %v1279, 0.16666667
    %v1284 = vmul.f32 %v1280, 0.16666667
    %v1285 = vpack.c.bf16 %v1282, %v1281
    %v1286 = vpack.c.bf16 %v1284, %v1283
    %v1289 = vunpack.c.l.b16 %v1285
    %v1290 = vunpack.c.h.b16 %v1285
    %v1291 = vunpack.c.l.b16 %v1286
    %v1292 = vunpack.c.h.b16 %v1286
    %v1293 = vpack.c.b16 %v1289, %v1289
    %v1294 = vpack.c.b16 %v1290, %v1290
    %v1295 = vpack.c.b16 %v1291, %v1291
    %v1296 = vpack.c.b16 %v1292, %v1292
    %1301 = vst [vmem:[#allocation3 + $0x20] sm:$0xf] %v1293
    %1302 = vst [vmem:[#allocation3 + $0x24] sm:$0xf] %v1294
    %1303 = vst [vmem:[#allocation3 + $0x28] sm:$0xf] %v1295
    %1304 = vst [vmem:[#allocation3 + $0x2c] sm:$0xf] %v1296
    %v1305 = vsub.f32 %v1105, 6.0
    %v1306 = vsub.f32 %v1106, 6.0
    %v1307 = vsub.f32 %v1107, 6.0
    %v1308 = vsub.f32 %v1108, 6.0
    %v1309 = vmax.f32 %v1305, 0.0
    %v1310 = vmax.f32 %v1306, 0.0
    %v1311 = vmax.f32 %v1307, 0.0
    %v1312 = vmax.f32 %v1308, 0.0
    %v1313 = vmul.f32 %v1309, %v1309
    %v1314 = vmul.f32 %v1310, %v1310
    %v1315 = vmul.f32 %v1311, %v1311
    %v1316 = vmul.f32 %v1312, %v1312
    %v1317 = vmul.f32 %v1309, %v1313
    %v1318 = vmul.f32 %v1310, %v1314
    %v1319 = vmul.f32 %v1311, %v1315
    %v1320 = vmul.f32 %v1312, %v1316
    %v1321 = vsub.f32 %v1149, %v1201
    %v1322 = vsub.f32 %v1150, %v1202
    %v1323 = vsub.f32 %v1151, %v1203
    %v1324 = vsub.f32 %v1152, %v1204
    %v1325 = vmul.f32 %v1181, 6.0
    %v1326 = vmul.f32 %v1182, 6.0
    %v1327 = vmul.f32 %v1183, 6.0
    %v1328 = vmul.f32 %v1184, 6.0
    %v1329 = vadd.f32 %v1321, %v1325
    %v1330 = vadd.f32 %v1322, %v1326
    %v1331 = vadd.f32 %v1323, %v1327
    %v1332 = vadd.f32 %v1324, %v1328
    %v1333 = vmul.f32 %v1249, 4.0
    %v1334 = vmul.f32 %v1250, 4.0
    %v1335 = vmul.f32 %v1251, 4.0
    %v1336 = vmul.f32 %v1252, 4.0
    %v1337 = vsub.f32 %v1329, %v1333
    %v1338 = vsub.f32 %v1330, %v1334
    %v1339 = vsub.f32 %v1331, %v1335
    %v1340 = vsub.f32 %v1332, %v1336
    %v1341 = vadd.f32 %v1337, %v1317
    %v1342 = vadd.f32 %v1338, %v1318
    %v1343 = vadd.f32 %v1339, %v1319
    %v1344 = vadd.f32 %v1340, %v1320
    %v1345 = vmul.f32 %v1341, 0.16666667
    %v1346 = vmul.f32 %v1342, 0.16666667
    %v1347 = vmul.f32 %v1343, 0.16666667
    %v1348 = vmul.f32 %v1344, 0.16666667
    %v1349 = vpack.c.bf16 %v1346, %v1345
    %v1350 = vpack.c.bf16 %v1348, %v1347
    %v1353 = vunpack.c.l.b16 %v1349
    %v1354 = vunpack.c.h.b16 %v1349
    %v1355 = vunpack.c.l.b16 %v1350
    %v1356 = vunpack.c.h.b16 %v1350
    %v1357 = vpack.c.b16 %v1353, %v1353
    %v1358 = vpack.c.b16 %v1354, %v1354
    %v1359 = vpack.c.b16 %v1355, %v1355
    %v1360 = vpack.c.b16 %v1356, %v1356
    %1365 = vst [vmem:[#allocation3 + $0x30] sm:$0xf] %v1357
    %1366 = vst [vmem:[#allocation3 + $0x34] sm:$0xf] %v1358
    %1367 = vst [vmem:[#allocation3 + $0x38] sm:$0xf] %v1359
    %1368 = vst [vmem:[#allocation3 + $0x3c] sm:$0xf] %v1360
    %v1369 = vsub.f32 %v1105, 7.0
    %v1370 = vsub.f32 %v1106, 7.0
    %v1371 = vsub.f32 %v1107, 7.0
    %v1372 = vsub.f32 %v1108, 7.0
    %v1373 = vmax.f32 %v1369, 0.0
    %v1374 = vmax.f32 %v1370, 0.0
    %v1375 = vmax.f32 %v1371, 0.0
    %v1376 = vmax.f32 %v1372, 0.0
    %v1377 = vmul.f32 %v1373, %v1373
    %v1378 = vmul.f32 %v1374, %v1374
    %v1379 = vmul.f32 %v1375, %v1375
    %v1380 = vmul.f32 %v1376, %v1376
    %v1381 = vmul.f32 %v1373, %v1377
    %v1382 = vmul.f32 %v1374, %v1378
    %v1383 = vmul.f32 %v1375, %v1379
    %v1384 = vmul.f32 %v1376, %v1380
    %v1385 = vsub.f32 %v1165, %v1269
    %v1386 = vsub.f32 %v1166, %v1270
    %v1387 = vsub.f32 %v1167, %v1271
    %v1388 = vsub.f32 %v1168, %v1272
    %v1389 = vmul.f32 %v1249, 6.0
    %v1390 = vmul.f32 %v1250, 6.0
    %v1391 = vmul.f32 %v1251, 6.0
    %v1392 = vmul.f32 %v1252, 6.0
    %v1393 = vadd.f32 %v1385, %v1389
    %v1394 = vadd.f32 %v1386, %v1390
    %v1395 = vadd.f32 %v1387, %v1391
    %v1396 = vadd.f32 %v1388, %v1392
    %v1397 = vmul.f32 %v1317, 4.0
    %v1398 = vmul.f32 %v1318, 4.0
    %v1399 = vmul.f32 %v1319, 4.0
    %v1400 = vmul.f32 %v1320, 4.0
    %v1401 = vsub.f32 %v1393, %v1397
    %v1402 = vsub.f32 %v1394, %v1398
    %v1403 = vsub.f32 %v1395, %v1399
    %v1404 = vsub.f32 %v1396, %v1400
    %v1405 = vadd.f32 %v1401, %v1381
    %v1406 = vadd.f32 %v1402, %v1382
    %v1407 = vadd.f32 %v1403, %v1383
    %v1408 = vadd.f32 %v1404, %v1384
    %v1409 = vmul.f32 %v1405, 0.16666667
    %v1410 = vmul.f32 %v1406, 0.16666667
    %v1411 = vmul.f32 %v1407, 0.16666667
    %v1412 = vmul.f32 %v1408, 0.16666667
    %v1413 = vpack.c.bf16 %v1410, %v1409
    %v1414 = vpack.c.bf16 %v1412, %v1411
    %v1417 = vunpack.c.l.b16 %v1413
    %v1418 = vunpack.c.h.b16 %v1413
    %v1419 = vunpack.c.l.b16 %v1414
    %v1420 = vunpack.c.h.b16 %v1414
    %v1421 = vpack.c.b16 %v1417, %v1417
    %v1422 = vpack.c.b16 %v1418, %v1418
    %v1423 = vpack.c.b16 %v1419, %v1419
    %v1424 = vpack.c.b16 %v1420, %v1420
    %1429 = vst [vmem:[#allocation3 + $0x40] sm:$0xf] %v1421
    %1430 = vst [vmem:[#allocation3 + $0x44] sm:$0xf] %v1422
    %1431 = vst [vmem:[#allocation3 + $0x48] sm:$0xf] %v1423
    %1432 = vst [vmem:[#allocation3 + $0x4c] sm:$0xf] %v1424
    %v1433 = vsub.f32 %v1105, 8.0
    %v1434 = vsub.f32 %v1106, 8.0
    %v1435 = vsub.f32 %v1107, 8.0
    %v1436 = vsub.f32 %v1108, 8.0
    %v1437 = vmax.f32 %v1433, 0.0
    %v1438 = vmax.f32 %v1434, 0.0
    %v1439 = vmax.f32 %v1435, 0.0
    %v1440 = vmax.f32 %v1436, 0.0
    %v1441 = vmul.f32 %v1437, %v1437
    %v1442 = vmul.f32 %v1438, %v1438
    %v1443 = vmul.f32 %v1439, %v1439
    %v1444 = vmul.f32 %v1440, %v1440
    %v1445 = vmul.f32 %v1437, %v1441
    %v1446 = vmul.f32 %v1438, %v1442
    %v1447 = vmul.f32 %v1439, %v1443
    %v1448 = vmul.f32 %v1440, %v1444
    %v1449 = vsub.f32 %v1181, %v1333
    %v1450 = vsub.f32 %v1182, %v1334
    %v1451 = vsub.f32 %v1183, %v1335
    %v1452 = vsub.f32 %v1184, %v1336
    %v1453 = vmul.f32 %v1317, 6.0
    %v1454 = vmul.f32 %v1318, 6.0
    %v1455 = vmul.f32 %v1319, 6.0
    %v1456 = vmul.f32 %v1320, 6.0
    %v1457 = vadd.f32 %v1449, %v1453
    %v1458 = vadd.f32 %v1450, %v1454
    %v1459 = vadd.f32 %v1451, %v1455
    %v1460 = vadd.f32 %v1452, %v1456
    %v1461 = vmul.f32 %v1381, 4.0
    %v1462 = vmul.f32 %v1382, 4.0
    %v1463 = vmul.f32 %v1383, 4.0
    %v1464 = vmul.f32 %v1384, 4.0
    %v1465 = vsub.f32 %v1457, %v1461
    %v1466 = vsub.f32 %v1458, %v1462
    %v1467 = vsub.f32 %v1459, %v1463
    %v1468 = vsub.f32 %v1460, %v1464
    %v1469 = vadd.f32 %v1465, %v1445
    %v1470 = vadd.f32 %v1466, %v1446
    %v1471 = vadd.f32 %v1467, %v1447
    %v1472 = vadd.f32 %v1468, %v1448
    %v1473 = vmul.f32 %v1469, 0.16666667
    %v1474 = vmul.f32 %v1470, 0.16666667
    %v1475 = vmul.f32 %v1471, 0.16666667
    %v1476 = vmul.f32 %v1472, 0.16666667
    %v1477 = vpack.c.bf16 %v1474, %v1473
    %v1478 = vpack.c.bf16 %v1476, %v1475
    %v1481 = vunpack.c.l.b16 %v1477
    %v1482 = vunpack.c.h.b16 %v1477
    %v1483 = vunpack.c.l.b16 %v1478
    %v1484 = vunpack.c.h.b16 %v1478
    %v1485 = vpack.c.b16 %v1481, %v1481
    %v1486 = vpack.c.b16 %v1482, %v1482
    %v1487 = vpack.c.b16 %v1483, %v1483
    %v1488 = vpack.c.b16 %v1484, %v1484
    %1493 = vst [vmem:[#allocation3 + $0x50] sm:$0xf] %v1485
    %1494 = vst [vmem:[#allocation3 + $0x54] sm:$0xf] %v1486
    %1495 = vst [vmem:[#allocation3 + $0x58] sm:$0xf] %v1487
    %1496 = vst [vmem:[#allocation3 + $0x5c] sm:$0xf] %v1488
    %v1497 = vsub.f32 %v1105, 9.0
    %v1498 = vsub.f32 %v1106, 9.0
    %v1499 = vsub.f32 %v1107, 9.0
    %v1500 = vsub.f32 %v1108, 9.0
    %v1501 = vmax.f32 %v1497, 0.0
    %v1502 = vmax.f32 %v1498, 0.0
    %v1503 = vmax.f32 %v1499, 0.0
    %v1504 = vmax.f32 %v1500, 0.0
    %v1505 = vmul.f32 %v1501, %v1501
    %v1506 = vmul.f32 %v1502, %v1502
    %v1507 = vmul.f32 %v1503, %v1503
    %v1508 = vmul.f32 %v1504, %v1504
    %v1509 = vmul.f32 %v1501, %v1505
    %v1510 = vmul.f32 %v1502, %v1506
    %v1511 = vmul.f32 %v1503, %v1507
    %v1512 = vmul.f32 %v1504, %v1508
    %v1513 = vsub.f32 %v1249, %v1397
    %v1514 = vsub.f32 %v1250, %v1398
    %v1515 = vsub.f32 %v1251, %v1399
    %v1516 = vsub.f32 %v1252, %v1400
    %v1517 = vmul.f32 %v1381, 6.0
    %v1518 = vmul.f32 %v1382, 6.0
    %v1519 = vmul.f32 %v1383, 6.0
    %v1520 = vmul.f32 %v1384, 6.0
    %v1521 = vadd.f32 %v1513, %v1517
    %v1522 = vadd.f32 %v1514, %v1518
    %v1523 = vadd.f32 %v1515, %v1519
    %v1524 = vadd.f32 %v1516, %v1520
    %v1525 = vmul.f32 %v1445, 4.0
    %v1526 = vmul.f32 %v1446, 4.0
    %v1527 = vmul.f32 %v1447, 4.0
    %v1528 = vmul.f32 %v1448, 4.0
    %v1529 = vsub.f32 %v1521, %v1525
    %v1530 = vsub.f32 %v1522, %v1526
    %v1531 = vsub.f32 %v1523, %v1527
    %v1532 = vsub.f32 %v1524, %v1528
    %v1533 = vadd.f32 %v1529, %v1509
    %v1534 = vadd.f32 %v1530, %v1510
    %v1535 = vadd.f32 %v1531, %v1511
    %v1536 = vadd.f32 %v1532, %v1512
    %v1537 = vmul.f32 %v1533, 0.16666667
    %v1538 = vmul.f32 %v1534, 0.16666667
    %v1539 = vmul.f32 %v1535, 0.16666667
    %v1540 = vmul.f32 %v1536, 0.16666667
    %v1541 = vpack.c.bf16 %v1538, %v1537
    %v1542 = vpack.c.bf16 %v1540, %v1539
    %v1545 = vunpack.c.l.b16 %v1541
    %v1546 = vunpack.c.h.b16 %v1541
    %v1547 = vunpack.c.l.b16 %v1542
    %v1548 = vunpack.c.h.b16 %v1542
    %v1549 = vpack.c.b16 %v1545, %v1545
    %v1550 = vpack.c.b16 %v1546, %v1546
    %v1551 = vpack.c.b16 %v1547, %v1547
    %v1552 = vpack.c.b16 %v1548, %v1548
    %1557 = vst [vmem:[#allocation3 + $0x60] sm:$0xf] %v1549
    %1558 = vst [vmem:[#allocation3 + $0x64] sm:$0xf] %v1550
    %1559 = vst [vmem:[#allocation3 + $0x68] sm:$0xf] %v1551
    %1560 = vst [vmem:[#allocation3 + $0x6c] sm:$0xf] %v1552
    %v1561 = vsub.f32 %v1105, 10.0
    %v1562 = vsub.f32 %v1106, 10.0
    %v1563 = vsub.f32 %v1107, 10.0
    %v1564 = vsub.f32 %v1108, 10.0
    %v1565 = vmax.f32 %v1561, 0.0
    %v1566 = vmax.f32 %v1562, 0.0
    %v1567 = vmax.f32 %v1563, 0.0
    %v1568 = vmax.f32 %v1564, 0.0
    %v1569 = vmul.f32 %v1565, %v1565
    %v1570 = vmul.f32 %v1566, %v1566
    %v1571 = vmul.f32 %v1567, %v1567
    %v1572 = vmul.f32 %v1568, %v1568
    %v1573 = vmul.f32 %v1565, %v1569
    %v1574 = vmul.f32 %v1566, %v1570
    %v1575 = vmul.f32 %v1567, %v1571
    %v1576 = vmul.f32 %v1568, %v1572
    %v1577 = vsub.f32 %v1317, %v1461
    %v1578 = vsub.f32 %v1318, %v1462
    %v1579 = vsub.f32 %v1319, %v1463
    %v1580 = vsub.f32 %v1320, %v1464
    %v1581 = vmul.f32 %v1445, 6.0
    %v1582 = vmul.f32 %v1446, 6.0
    %v1583 = vmul.f32 %v1447, 6.0
    %v1584 = vmul.f32 %v1448, 6.0
    %v1585 = vadd.f32 %v1577, %v1581
    %v1586 = vadd.f32 %v1578, %v1582
    %v1587 = vadd.f32 %v1579, %v1583
    %v1588 = vadd.f32 %v1580, %v1584
    %v1589 = vmul.f32 %v1509, 4.0
    %v1590 = vmul.f32 %v1510, 4.0
    %v1591 = vmul.f32 %v1511, 4.0
    %v1592 = vmul.f32 %v1512, 4.0
    %v1593 = vsub.f32 %v1585, %v1589
    %v1594 = vsub.f32 %v1586, %v1590
    %v1595 = vsub.f32 %v1587, %v1591
    %v1596 = vsub.f32 %v1588, %v1592
    %v1597 = vadd.f32 %v1593, %v1573
    %v1598 = vadd.f32 %v1594, %v1574
    %v1599 = vadd.f32 %v1595, %v1575
    %v1600 = vadd.f32 %v1596, %v1576
    %v1601 = vmul.f32 %v1597, 0.16666667
    %v1602 = vmul.f32 %v1598, 0.16666667
    %v1603 = vmul.f32 %v1599, 0.16666667
    %v1604 = vmul.f32 %v1600, 0.16666667
    %v1605 = vpack.c.bf16 %v1602, %v1601
    %v1606 = vpack.c.bf16 %v1604, %v1603
    %v1609 = vunpack.c.l.b16 %v1605
    %v1610 = vunpack.c.h.b16 %v1605
    %v1611 = vunpack.c.l.b16 %v1606
    %v1612 = vunpack.c.h.b16 %v1606
    %v1613 = vpack.c.b16 %v1609, %v1609
    %v1614 = vpack.c.b16 %v1610, %v1610
    %v1615 = vpack.c.b16 %v1611, %v1611
    %v1616 = vpack.c.b16 %v1612, %v1612
    %1621 = vst [vmem:[#allocation3 + $0x70] sm:$0xf] %v1613
    %1622 = vst [vmem:[#allocation3 + $0x74] sm:$0xf] %v1614
    %1623 = vst [vmem:[#allocation3 + $0x78] sm:$0xf] %v1615
    %1624 = vst [vmem:[#allocation3 + $0x7c] sm:$0xf] %v1616
    %v1625 = vsub.f32 %v1105, 11.0
    %v1626 = vsub.f32 %v1106, 11.0
    %v1627 = vsub.f32 %v1107, 11.0
    %v1628 = vsub.f32 %v1108, 11.0
    %v1629 = vmax.f32 %v1625, 0.0
    %v1630 = vmax.f32 %v1626, 0.0
    %v1631 = vmax.f32 %v1627, 0.0
    %v1632 = vmax.f32 %v1628, 0.0
    %v1633 = vmul.f32 %v1629, %v1629
    %v1634 = vmul.f32 %v1630, %v1630
    %v1635 = vmul.f32 %v1631, %v1631
    %v1636 = vmul.f32 %v1632, %v1632
    %v1637 = vmul.f32 %v1629, %v1633
    %v1638 = vmul.f32 %v1630, %v1634
    %v1639 = vmul.f32 %v1631, %v1635
    %v1640 = vmul.f32 %v1632, %v1636
    %v1641 = vsub.f32 %v1381, %v1525
    %v1642 = vsub.f32 %v1382, %v1526
    %v1643 = vsub.f32 %v1383, %v1527
    %v1644 = vsub.f32 %v1384, %v1528
    %v1645 = vmul.f32 %v1509, 6.0
    %v1646 = vmul.f32 %v1510, 6.0
    %v1647 = vmul.f32 %v1511, 6.0
    %v1648 = vmul.f32 %v1512, 6.0
    %v1649 = vadd.f32 %v1641, %v1645
    %v1650 = vadd.f32 %v1642, %v1646
    %v1651 = vadd.f32 %v1643, %v1647
    %v1652 = vadd.f32 %v1644, %v1648
    %v1653 = vmul.f32 %v1573, 4.0
    %v1654 = vmul.f32 %v1574, 4.0
    %v1655 = vmul.f32 %v1575, 4.0
    %v1656 = vmul.f32 %v1576, 4.0
    %v1657 = vsub.f32 %v1649, %v1653
    %v1658 = vsub.f32 %v1650, %v1654
    %v1659 = vsub.f32 %v1651, %v1655
    %v1660 = vsub.f32 %v1652, %v1656
    %v1661 = vadd.f32 %v1657, %v1637
    %v1662 = vadd.f32 %v1658, %v1638
    %v1663 = vadd.f32 %v1659, %v1639
    %v1664 = vadd.f32 %v1660, %v1640
    %v1665 = vmul.f32 %v1661, 0.16666667
    %v1666 = vmul.f32 %v1662, 0.16666667
    %v1667 = vmul.f32 %v1663, 0.16666667
    %v1668 = vmul.f32 %v1664, 0.16666667
    %v1669 = vpack.c.bf16 %v1666, %v1665
    %v1670 = vpack.c.bf16 %v1668, %v1667
    %v1673 = vunpack.c.l.b16 %v1669
    %v1674 = vunpack.c.h.b16 %v1669
    %v1675 = vunpack.c.l.b16 %v1670
    %v1676 = vunpack.c.h.b16 %v1670
    %v1677 = vpack.c.b16 %v1673, %v1673
    %v1678 = vpack.c.b16 %v1674, %v1674
    %v1679 = vpack.c.b16 %v1675, %v1675
    %v1680 = vpack.c.b16 %v1676, %v1676
    %1685 = vst [vmem:[#allocation3 + $0x80] sm:$0xf] %v1677
    %1686 = vst [vmem:[#allocation3 + $0x84] sm:$0xf] %v1678
    %1687 = vst [vmem:[#allocation3 + $0x88] sm:$0xf] %v1679
    %1688 = vst [vmem:[#allocation3 + $0x8c] sm:$0xf] %v1680
    %v1689 = vld [vmem:[%s11] sm:$0xff]
    %v1690 = vld [vmem:[%s11 + $0x8] sm:$0xf]
    %v1691 = vld [vmem:[%s11 + $0xc] sm:$0xff]
    %v1692 = vld [vmem:[%s11 + $0x14] sm:$0xf]
    %v1693 = vld [vmem:[#allocation3] sm:$0xf]
    %v1694 = vld [vmem:[#allocation3 + $0x4] sm:$0xf]
    %v1695 = vld [vmem:[#allocation3 + $0x8] sm:$0xf]
    %v1696 = vld [vmem:[#allocation3 + $0xc] sm:$0xf]
    %v1697 = vld [vmem:[#allocation3 + $0x10] sm:$0xf]
    %v1698 = vld [vmem:[#allocation3 + $0x14] sm:$0xf]
    %v1699 = vld [vmem:[#allocation3 + $0x18] sm:$0xf]
    %v1700 = vld [vmem:[#allocation3 + $0x1c] sm:$0xf]
    %v1701 = vld [vmem:[#allocation3 + $0x20] sm:$0xf]
    %v1702 = vld [vmem:[#allocation3 + $0x24] sm:$0xf]
    %v1703 = vld [vmem:[#allocation3 + $0x28] sm:$0xf]
    %v1704 = vld [vmem:[#allocation3 + $0x2c] sm:$0xf]
    %v1705 = vld [vmem:[#allocation3 + $0x30] sm:$0xf]
    %v1706 = vld [vmem:[#allocation3 + $0x34] sm:$0xf]
    %v1707 = vld [vmem:[#allocation3 + $0x38] sm:$0xf]
    %v1708 = vld [vmem:[#allocation3 + $0x3c] sm:$0xf]
    %v1709 = vld [vmem:[#allocation3 + $0x40] sm:$0xf]
    %v1710 = vld [vmem:[#allocation3 + $0x44] sm:$0xf]
    %v1711 = vld [vmem:[#allocation3 + $0x48] sm:$0xf]
    %v1712 = vld [vmem:[#allocation3 + $0x4c] sm:$0xf]
    %v1713 = vld [vmem:[#allocation3 + $0x50] sm:$0xf]
    %v1714 = vld [vmem:[#allocation3 + $0x54] sm:$0xf]
    %v1715 = vld [vmem:[#allocation3 + $0x58] sm:$0xf]
    %v1716 = vld [vmem:[#allocation3 + $0x5c] sm:$0xf]
    %v1717 = vld [vmem:[#allocation3 + $0x60] sm:$0xf]
    %v1718 = vld [vmem:[#allocation3 + $0x64] sm:$0xf]
    %v1719 = vld [vmem:[#allocation3 + $0x68] sm:$0xf]
    %v1720 = vld [vmem:[#allocation3 + $0x6c] sm:$0xf]
    %v1721 = vld [vmem:[#allocation3 + $0x70] sm:$0xf]
    %v1722 = vld [vmem:[#allocation3 + $0x74] sm:$0xf]
    %v1723 = vld [vmem:[#allocation3 + $0x78] sm:$0xf]
    %v1724 = vld [vmem:[#allocation3 + $0x7c] sm:$0xf]
    %v1725 = vld [vmem:[#allocation3 + $0x80] sm:$0xf]
    %v1726 = vld [vmem:[#allocation3 + $0x84] sm:$0xf]
    %v1727 = vld [vmem:[#allocation3 + $0x88] sm:$0xf]
    %v1728 = vld [vmem:[#allocation3 + $0x8c] sm:$0xf]
    %v1733 = vunpack.c.l.b16 %v1689
    %v1734 = vunpack.c.h.b16 %v1689
    %v1735 = vunpack.c.l.b16 %v1690
    %v1736 = vunpack.c.l.b16 %v1691
    %v1737 = vunpack.c.h.b16 %v1691
    %v1738 = vunpack.c.l.b16 %v1692
    %v1739 = vpack.c.b16 %v1736, %v1733
    %v1740 = vpack.c.b16 %v1737, %v1734
    %v1741 = vpack.c.b16 %v1738, %v1735
    %v1780 = vunpack.c.l.b16 %v1693
    %v1781 = vunpack.c.l.b16 %v1694
    %v1782 = vunpack.c.l.b16 %v1695
    %v1783 = vunpack.c.l.b16 %v1696
    %v1784 = vunpack.c.l.b16 %v1697
    %v1785 = vunpack.c.l.b16 %v1698
    %v1786 = vunpack.c.l.b16 %v1699
    %v1787 = vunpack.c.l.b16 %v1700
    %v1788 = vunpack.c.l.b16 %v1701
    %v1789 = vunpack.c.l.b16 %v1702
    %v1790 = vunpack.c.l.b16 %v1703
    %v1791 = vunpack.c.l.b16 %v1704
    %v1792 = vunpack.c.l.b16 %v1705
    %v1793 = vunpack.c.l.b16 %v1706
    %v1794 = vunpack.c.l.b16 %v1707
    %v1795 = vunpack.c.l.b16 %v1708
    %v1796 = vunpack.c.l.b16 %v1709
    %v1797 = vunpack.c.l.b16 %v1710
    %v1798 = vunpack.c.l.b16 %v1711
    %v1799 = vunpack.c.l.b16 %v1712
    %v1800 = vunpack.c.l.b16 %v1713
    %v1801 = vunpack.c.l.b16 %v1714
    %v1802 = vunpack.c.l.b16 %v1715
    %v1803 = vunpack.c.l.b16 %v1716
    %v1804 = vunpack.c.l.b16 %v1717
    %v1805 = vunpack.c.l.b16 %v1718
    %v1806 = vunpack.c.l.b16 %v1719
    %v1807 = vunpack.c.l.b16 %v1720
    %v1808 = vunpack.c.l.b16 %v1721
    %v1809 = vunpack.c.l.b16 %v1722
    %v1810 = vunpack.c.l.b16 %v1723
    %v1811 = vunpack.c.l.b16 %v1724
    %v1812 = vunpack.c.l.b16 %v1725
    %v1813 = vunpack.c.l.b16 %v1726
    %v1814 = vunpack.c.l.b16 %v1727
    %v1815 = vunpack.c.l.b16 %v1728
    %v1816 = vpack.c.b16 %v1781, %v1780
    %v1817 = vpack.c.b16 %v1783, %v1782
    %v1818 = vpack.c.b16 %v1785, %v1784
    %v1819 = vpack.c.b16 %v1787, %v1786
    %v1820 = vpack.c.b16 %v1789, %v1788
    %v1821 = vpack.c.b16 %v1791, %v1790
    %v1822 = vpack.c.b16 %v1793, %v1792
    %v1823 = vpack.c.b16 %v1795, %v1794
    %v1824 = vpack.c.b16 %v1797, %v1796
    %v1825 = vpack.c.b16 %v1799, %v1798
    %v1826 = vpack.c.b16 %v1801, %v1800
    %v1827 = vpack.c.b16 %v1803, %v1802
    %v1828 = vpack.c.b16 %v1805, %v1804
    %v1829 = vpack.c.b16 %v1807, %v1806
    %v1830 = vpack.c.b16 %v1809, %v1808
    %v1831 = vpack.c.b16 %v1811, %v1810
    %v1832 = vpack.c.b16 %v1813, %v1812
    %v1833 = vpack.c.b16 %v1815, %v1814
    %v1853 = vsel %vm372, %v1741, 0
    %1855 = vmatprep.subr.bf16.mxu0 0
    %1856 = vmatpush1.bf16.msra.mxu0 %v1823
    %1857 = vmatprep.subr.bf16.mxu0 0
    %1858 = vmatpush1.bf16.msra.mxu0 %v1822
    %1859 = vmatprep.subr.bf16.mxu0 0
    %1860 = vmatpush1.bf16.msra.mxu0 %v1821
    %1861 = vmatprep.subr.bf16.mxu0 0
    %1862 = vmatpush1.bf16.msra.mxu0 %v1820
    %1863 = vmatprep.subr.bf16.mxu0 0
    %1864 = vmatpush1.bf16.msra.mxu0 %v1819
    %1865 = vmatprep.subr.bf16.mxu0 0
    %1866 = vmatpush1.bf16.msra.mxu0 %v1818
    %1867 = vmatprep.subr.bf16.mxu0 0
    %1868 = vmatpush1.bf16.msra.mxu0 %v1817
    %1869 = vmatprep.subr.bf16.mxu0 0
    %1870 = vmatpush1.bf16.msra.mxu0 %v1816
    %1871 = vmatprep.subr.bf16.mxu0 0
    %1872 = vmatpush2.bf16.msra.mxu0 %v1831
    %1873 = vmatprep.subr.bf16.mxu0 0
    %1874 = vmatpush2.bf16.msra.mxu0 %v1830
    %1875 = vmatprep.subr.bf16.mxu0 0
    %1876 = vmatpush2.bf16.msra.mxu0 %v1829
    %1877 = vmatprep.subr.bf16.mxu0 0
    %1878 = vmatpush2.bf16.msra.mxu0 %v1828
    %1879 = vmatprep.subr.bf16.mxu0 0
    %1880 = vmatpush2.bf16.msra.mxu0 %v1827
    %1881 = vmatprep.subr.bf16.mxu0 0
    %1882 = vmatpush2.bf16.msra.mxu0 %v1826
    %1883 = vmatprep.subr.bf16.mxu0 0
    %1884 = vmatpush2.bf16.msra.mxu0 %v1825
    %1885 = vmatprep.subr.bf16.mxu0 0
    %1886 = vmatpush2.bf16.msra.mxu0 %v1824
    %1887 = vmatprep.mubr.bf16.mxu0 %v1740
    %1888 = vmatmul.mubr.bf16.gmra.mxu0 %v1739
    %v1889 = vpop.f32.mrf.mxu0
    %v1890 = vadd.f32 0.0, %v1889
    %v1891 = vpop.f32.mrf.mxu0
    %v1892 = vpop.f32.mrf.mxu0
    %v1893 = vadd.f32 0.0, %v1892
    %v1894 = vpop.f32.mrf.mxu0
    %1895 = vdwg.mxu0
    %1896 = vmatprep.subr.bf16.mxu0 0
    %1897 = vmatpush1.bf16.msra.mxu0 0
    %1898 = vmatprep.subr.bf16.mxu0 0
    %1899 = vmatpush1.bf16.msra.mxu0 0
    %1900 = vmatprep.subr.bf16.mxu0 0
    %1901 = vmatpush1.bf16.msra.mxu0 0
    %1902 = vmatprep.subr.bf16.mxu0 0
    %1903 = vmatpush1.bf16.msra.mxu0 0
    %1904 = vmatprep.subr.bf16.mxu0 0
    %1905 = vmatpush1.bf16.msra.mxu0 0
    %1906 = vmatprep.subr.bf16.mxu0 0
    %1907 = vmatpush1.bf16.msra.mxu0 0
    %1908 = vmatprep.subr.bf16.mxu0 0
    %1909 = vmatpush1.bf16.msra.mxu0 %v1833
    %1910 = vmatprep.subr.bf16.mxu0 0
    %1911 = vmatpush1.bf16.msra.mxu0 %v1832
    %1912 = vmatprep.subr.bf16.mxu0 0
    %1913 = vmatpush2.bf16.msra.mxu0 0
    %1914 = vmatprep.subr.bf16.mxu0 0
    %1915 = vmatpush2.bf16.msra.mxu0 0
    %1916 = vmatprep.subr.bf16.mxu0 0
    %1917 = vmatpush2.bf16.msra.mxu0 0
    %1918 = vmatprep.subr.bf16.mxu0 0
    %1919 = vmatpush2.bf16.msra.mxu0 0
    %1920 = vmatprep.subr.bf16.mxu0 0
    %1921 = vmatpush2.bf16.msra.mxu0 0
    %1922 = vmatprep.subr.bf16.mxu0 0
    %1923 = vmatpush2.bf16.msra.mxu0 0
    %1924 = vmatprep.subr.bf16.mxu0 0
    %1925 = vmatpush2.bf16.msra.mxu0 0
    %1926 = vmatprep.subr.bf16.mxu0 0
    %1927 = vmatpush2.bf16.msra.mxu0 0
    %1928 = vmatprep.mubr.bf16.mxu0 0
    %1929 = vmatmul.mubr.bf16.gmra.mxu0 %v1853
    %v1930 = vpop.f32.mrf.mxu0
    %v1931 = vadd.f32 %v1890, %v1930
    %v1932 = vpop.f32.mrf.mxu0
    %v1933 = vpop.f32.mrf.mxu0
    %v1934 = vadd.f32 %v1893, %v1933
    %v1935 = vpop.f32.mrf.mxu0
    %1936 = vdwg.mxu0
    %v1937 = vadd.f32 %v57, %v1931
    %v1938 = vadd.f32 %v58, %v1934
    %1939 = vst [vmem:[#allocation7] sm:$0xff] %v1937
    %1940 = vst [vmem:[#allocation7 + $0x8] sm:$0xff] %v1938
    // Predicated region
    $region54: #{tpu_custom_call.1} parent=1 // pred_check
      _
    $region55: #{tpu_custom_call.1} parent=1 // pred_check_branch
      %1942 = sbr.rel (0) target = $region57
    $region56: #{tpu_custom_call.1} parent=1 // pred_region
      %s1944 = ssub.s32 256, 256
      %1945 = vsyncadd [#allocation6], %s1944
      %s1946 = sshll.u32 [#allocation7], 4
      %s1947 = int_to_ptr.vmem [resolvable:$true] %s1946
      %1952 = dma.vmem_to_hbm [thread:$0]  %s1947, 256, %s12, [#allocation6], 128, 128, 8
    $region57: #{tpu_custom_call.1} parent=1 // pred_fallthru
      _
    // Predicated region
    $region58: #{tpu_custom_call.1} parent=1 // pred_check
      _
    $region59: #{tpu_custom_call.1} parent=1 // pred_check_branch
      %1954 = sbr.rel (0) target = $region61
    $region60: #{tpu_custom_call.1} parent=1 // pred_region
      %1955 = dma.done [#allocation6], 256
    $region61: #{tpu_custom_call.1} parent=1 // pred_fallthru
      _
    %1956 = vsyncpa [#allocation5], 1
    %1957 = vsyncpa [#allocation6], 1

</llo_original>
